<compile_context>
chip_gen: v6e
topology: v6e:2x2x1
jax: 0.10.0
libtpu: 0.0.40
codegen_flags: <defaults>
</compile_context>

<pallas_src>
import numpy as np

import jax
import jax.numpy as jnp
from jax.experimental import pallas as pl
from jax.experimental.pallas import tpu as pltpu

BN_EPS = 1e-5


# ----------------------------- config ------------------------------------- #
class Config:
    in_channels = 4
    image_size = 16
    num_actions = 6
    num_blocks = 2
    block_configs = [
        {"out": 8, "kernel_size": 3, "stride": 2, "pad": 0},
        {"out": 1, "kernel_size": 3, "stride": 2, "pad": 0},
    ]
    num_layers = 2
    layer_configs = [32, 32]


def conv2d_output_dim(size, kernel_size, stride, pad=0):
    return (size + 2 * pad - kernel_size) // stride + 1


def _round_up(n, m):
    return ((n + m - 1) // m) * m


# ------------------ conv weight -> dense matrix (batch free) --------------- #
def _dense_conv_indices(cin, h, w, cout, k, s):
    """Static scatter indices that turn a Conv2d weight into a dense matrix.

    Row r = (ci*h + ih)*w + iw    indexes the flattened NCHW input image.
    Col c = (co*ho + oh)*wo + ow  indexes the flattened NCHW output image.
    """
    ho = conv2d_output_dim(h, k, s)
    wo = conv2d_output_dim(w, k, s)
    co, ci, kh, kw, oh, ow = np.meshgrid(
        np.arange(cout), np.arange(cin), np.arange(k), np.arange(k),
        np.arange(ho), np.arange(wo), indexing="ij")
    rows = (ci * h + s * oh + kh) * w + s * ow + kw
    cols = (co * ho + oh) * wo + ow
    return rows.reshape(-1).astype(np.int32), cols.reshape(-1).astype(np.int32), ho, wo


def _dense_conv_matrix(w_conv, h, w, stride):
    """[Cout, Cin, k, k] conv weight -> dense [Cin*h*w, Cout*ho*wo] matrix."""
    cout, cin, k, _ = w_conv.shape
    rows, cols, ho, wo = _dense_conv_indices(cin, h, w, cout, k, stride)
    vals = jnp.broadcast_to(w_conv[:, :, :, :, None, None],
                            (cout, cin, k, k, ho, wo)).reshape(-1)
    mat = jnp.zeros((cin * h * w, cout * ho * wo), jnp.float32)
    mat = mat.at[rows, cols].set(vals)          # indices are disjoint
    return mat, ho, wo


# ------------------------- fused Pallas kernel ----------------------------- #
def _make_dqn_kernel(B, Bpad, C1, HW1, HW2, d1, d2, na,
                     g_off, off_fc1, off_fc2, off_head):
    """Whole DQN forward; every intermediate stays in VMEM, one store at the end.

    xp_ref   : [Bpad, Cin*H*W]     flattened NCHW inputs, zero-padded batch rows
    w1_ref   : [Cin*H*W, C1*HW1]   conv-1 as a dense matrix (batch independent)
    wmid_ref : [C1*HW1, g_off+C1]  cols [0:HW2)       -> conv-2 dense matrix
                                   cols [g_off:+C1)   -> lane->channel one-hot G
    gt_ref   : [C1, C1*HW1]        channel->lane broadcast one-hot  (G^T)
    fcp_ref  : packed BN affines, FC weights and biases (layout set in wrapper)
    o_ref    : [Bpad, num_actions]
    """
    inv_n1 = 1.0 / float(B * HW1)
    inv_n2 = 1.0 / float(B * HW2)

    def kernel(xp_ref, w1_ref, wmid_ref, gt_ref, fcp_ref, o_ref):
        f32 = jnp.float32
        # Row-validity mask: BN statistics must only see the true B rows.
        rid = jax.lax.broadcasted_iota(jnp.int32, (1, Bpad), 1)
        mask = (rid < B).astype(f32)                                   # [1,Bpad]

        # ---- block 1: conv (one dense matmul) + BatchNorm(batch) + ReLU ----
        y1 = jnp.dot(xp_ref[...], w1_ref[...], preferred_element_type=f32)
        gchan = wmid_ref[:, g_off:g_off + C1]                          # [C1*HW1,C1]
        gt = gt_ref[...]                                               # [C1,C1*HW1]
        # per-channel mean over (batch, spatial) -- all on the MXU
        mean_c = jnp.dot(jnp.dot(mask, y1, preferred_element_type=f32),
                         gchan, preferred_element_type=f32) * inv_n1   # [1,C1]
        mean_l = jnp.dot(mean_c, gt, preferred_element_type=f32)       # [1,C1*HW1]
        y1c = y1 - mean_l                                              # centered
        var_c = jnp.dot(jnp.dot(mask, y1c * y1c, preferred_element_type=f32),
                        gchan, preferred_element_type=f32) * inv_n1    # [1,C1]
        gamma1 = fcp_ref[0:1, 0:C1]
        beta1 = fcp_ref[0:1, C1:2 * C1]
        scale_c = gamma1 * jax.lax.rsqrt(var_c + BN_EPS)               # [1,C1]
        scale_l = jnp.dot(scale_c, gt, preferred_element_type=f32)     # [1,C1*HW1]
        shift_l = jnp.dot(beta1, gt, preferred_element_type=f32)       # [1,C1*HW1]
        a1 = jnp.maximum(y1c * scale_l + shift_l, 0.0)                 # [Bpad,C1*HW1]

        # ---- block 2: conv (one dense matmul) + BatchNorm(batch) + ReLU ----
        y2 = jnp.dot(a1, wmid_ref[:, 0:HW2], preferred_element_type=f32)  # [Bpad,HW2]
        mu2 = jnp.sum(jnp.dot(mask, y2, preferred_element_type=f32),
                      axis=1, keepdims=True) * inv_n2                  # [1,1]
        y2c = y2 - mu2
        var2 = jnp.sum(jnp.dot(mask, y2c * y2c, preferred_element_type=f32),
                       axis=1, keepdims=True) * inv_n2                 # [1,1]
        g2 = fcp_ref[0:1, 2 * C1:2 * C1 + 1]
        b2 = fcp_ref[0:1, 2 * C1 + 1:2 * C1 + 2]
        a2 = jnp.maximum(y2c * (g2 * jax.lax.rsqrt(var2 + BN_EPS)) + b2, 0.0)

        # ---- flatten is a no-op (lanes already in NCHW order) + FC stack ----
        h = jnp.maximum(
            jnp.dot(a2, fcp_ref[off_fc1:off_fc1 + HW2, 0:d1],
                    preferred_element_type=f32) + fcp_ref[1:2, 0:d1], 0.0)
        h = jnp.maximum(
            jnp.dot(h, fcp_ref[off_fc2:off_fc2 + d1, 0:d2],
                    preferred_element_type=f32) + fcp_ref[2:3, 0:d2], 0.0)
        o_ref[...] = (jnp.dot(h, fcp_ref[off_head:off_head + d2, 0:na],
                              preferred_element_type=f32) + fcp_ref[3:4, 0:na])

    return kernel


# ------------------------------ wrapper ------------------------------------ #
def _full_spec(shape):
    nd = len(shape)
    return pl.BlockSpec(shape, lambda *_args, _nd=nd: (0,) * _nd)


@jax.jit
def deep_q_network_forward(params, x_nchw):
    """Batched DQN forward (NCHW input) via a single fused Pallas kernel."""
    cfg = Config
    B, Cin, H, W = x_nchw.shape
    bc1, bc2 = cfg.block_configs
    blk1, blk2 = params["blocks"]
    assert bc1["pad"] == 0 and bc2["pad"] == 0
    assert bc2["out"] == 1          # module: FC in_dim = H2*W2 needs Cout == 1
    assert len(params["fcs"]) == 3

    # ---- weight-side glue (batch independent, tiny).  For frozen-weight
    # ---- inference this block can be hoisted/cached outside the hot path.
    w1big, H1, W1 = _dense_conv_matrix(blk1["w"], H, W, bc1["stride"])
    w2big, H2, W2 = _dense_conv_matrix(blk2["w"], H1, W1, bc2["stride"])
    C1 = bc1["out"]
    HW1, HW2 = H1 * W1, H2 * W2

    # lane -> channel one-hot (grouping) and its transpose (broadcast back)
    gchan_np = (np.arange(C1 * HW1)[:, None] // HW1
                == np.arange(C1)[None, :]).astype(np.float32)
    gchanT = jnp.asarray(gchan_np.T)                                  # [C1, C1*HW1]

    g_off = _round_up(HW2, 8)
    wmid = jnp.zeros((C1 * HW1, g_off + C1), jnp.float32)
    wmid = wmid.at[:, 0:HW2].set(w2big)
    wmid = wmid.at[:, g_off:g_off + C1].set(jnp.asarray(gchan_np))

    # one packed buffer for BN affines, FC biases and FC weights
    fc1, fc2, head = params["fcs"]
    d1, d2, na = fc1["w"].shape[1], fc2["w"].shape[1], head["w"].shape[1]
    lanes = max(d1, d2, na, 2 * C1 + 2)
    off_fc1 = 8
    off_fc2 = off_fc1 + _round_up(HW2, 8)
    off_head = off_fc2 + _round_up(d1, 8)
    n_rows = off_head + _round_up(d2, 8)
    fcp = jnp.zeros((n_rows, lanes), jnp.float32)
    fcp = fcp.at[0, 0:C1].set(blk1["gamma"])
    fcp = fcp.at[0, C1:2 * C1].set(blk1["beta"])
    fcp = fcp.at[0, 2 * C1].set(blk2["gamma"][0])
    fcp = fcp.at[0, 2 * C1 + 1].set(blk2["beta"][0])
    fcp = fcp.at[1, 0:d1].set(fc1["b"])
    fcp = fcp.at[2, 0:d2].set(fc2["b"])
    fcp = fcp.at[3, 0:na].set(head["b"])
    fcp = fcp.at[off_fc1:off_fc1 + HW2, 0:d1].set(fc1["w"])
    fcp = fcp.at[off_fc2:off_fc2 + d1, 0:d2].set(fc2["w"])
    fcp = fcp.at[off_head:off_head + d2, 0:na].set(head["w"])

    # ---- data-side glue: reshape + zero-pad batch rows to a sublane multiple
    Bpad = max(8, _round_up(B, 8))
    xp = jnp.pad(x_nchw.reshape(B, Cin * H * W).astype(jnp.float32),
                 ((0, Bpad - B), (0, 0)))

    kernel = _make_dqn_kernel(B, Bpad, C1, HW1, HW2, d1, d2, na,
                              g_off, off_fc1, off_fc2, off_head)
    ins = (xp, w1big, wmid, gchanT, fcp)
    out = pl.pallas_call(
        kernel,
        grid=(1,),
        in_specs=[_full_spec(a.shape) for a in ins],
        out_specs=_full_spec((Bpad, na)),
        out_shape=jax.ShapeDtypeStruct((Bpad, na), jnp.float32),
        compiler_params=pltpu.CompilerParams(
            dimension_semantics=("arbitrary",)),
    )(*ins)
    return out[:B]


# ------------------------------ params ------------------------------------- #
def init_params(config, key):
    params = {"blocks": [], "fcs": []}
    cin = config.in_channels
    h = w = config.image_size
    for bc in config.block_configs:
        k = bc["kernel_size"]
        key, k1, k2, k3 = jax.random.split(key, 4)
        wshape = (bc["out"], cin, k, k)           # PyTorch Conv2d weight layout
        scale = 1.0 / (cin * k * k) ** 0.5
        params["blocks"].append({
            # No conv bias: a bias before BatchNorm cancels in the forward pass.
            "w": jax.random.normal(k1, wshape, jnp.float32) * scale,
            "gamma": 1.0 + 0.1 * jax.random.normal(k2, (bc["out"],), jnp.float32),
            "beta": 0.1 * jax.random.normal(k3, (bc["out"],), jnp.float32),
        })
        h = conv2d_output_dim(h, k, bc["stride"])
        w = conv2d_output_dim(w, k, bc["stride"])
        cin = bc["out"]
    in_dim = h * w  # module semantics: in_dim = width * height (final Cout == 1)
    for dout in list(config.layer_configs) + [config.num_actions]:
        key, k1, k2 = jax.random.split(key, 3)
        scale = 1.0 / in_dim ** 0.5
        params["fcs"].append({
            "w": jax.random.normal(k1, (in_dim, dout), jnp.float32) * scale,
            "b": jax.random.normal(k2, (dout,), jnp.float32) * scale,
        })
        in_dim = dout
    return params


# -------------------------- pure-JAX reference ------------------------------ #
def _reference_forward(params, x):
    cfg = Config
    h = x
    for blk, bc in zip(params["blocks"], cfg.block_configs):
        h = jax.lax.conv_general_dilated(
            h, blk["w"], window_strides=(bc["stride"], bc["stride"]),
            padding="VALID", dimension_numbers=("NCHW", "OIHW", "NCHW"))
        mean = h.mean(axis=(0, 2, 3), keepdims=True)
        var = h.var(axis=(0, 2, 3), keepdims=True)
        h = (h - mean) * jax.lax.rsqrt(var + BN_EPS)
        h = h * blk["gamma"].reshape(1, -1, 1, 1) + blk["beta"].reshape(1, -1, 1, 1)
        h = jnp.maximum(h, 0.0)
    h = h.reshape(h.shape[0], -1)
    for fc in params["fcs"][:-1]:
        h = jnp.maximum(h @ fc["w"] + fc["b"], 0.0)
    head = params["fcs"][-1]
    return h @ head["w"] + head["b"]


# ------------------------------ main --------------------------------------- #
if __name__ == "__main__":
    cfg = Config()
    key = jax.random.PRNGKey(0)
    key, pkey, xkey, x2key = jax.random.split(key, 4)
    params = init_params(cfg, pkey)

    # Small-shape check (B=2 exercises the batch-row padding + BN mask path).
    x = jax.random.normal(
        xkey, (2, cfg.in_channels, cfg.image_size, cfg.image_size), jnp.float32)
    q = jax.block_until_ready(deep_q_network_forward(params, x))
    assert q.shape == (2, cfg.num_actions), q.shape
    err = float(jnp.max(jnp.abs(q - _reference_forward(params, x))))
    assert err < 1e-3, f"B=2 mismatch vs reference: {err}"

    # Larger batch per call (the main throughput lever from the perf review);
    # the weight-side matrices are batch independent so nothing scales as B^2.
    x2 = jax.random.normal(
        x2key, (32, cfg.in_channels, cfg.image_size, cfg.image_size), jnp.float32)
    q2 = jax.block_until_ready(deep_q_network_forward(params, x2))
    assert q2.shape == (32, cfg.num_actions), q2.shape
    err2 = float(jnp.max(jnp.abs(q2 - _reference_forward(params, x2))))
    assert err2 < 1e-3, f"B=32 mismatch vs reference: {err2}"

    print("KERNEL_OK")
</pallas_src>

<mosaic_0001>
module attributes {stable_mosaic.version = 11 : i64} {
  func.func @kernel(%arg0: i32, %arg1: memref<8x1024xf32, #tpu.memory_space<vmem>>, %arg2: memref<1024x392xf32, #tpu.memory_space<vmem>>, %arg3: memref<392x24xf32, #tpu.memory_space<vmem>>, %arg4: memref<8x392xf32, #tpu.memory_space<vmem>>, %arg5: memref<88x32xf32, #tpu.memory_space<vmem>>, %arg6: memref<8x6xf32, #tpu.memory_space<vmem>>) attributes {dimension_semantics = [#tpu.dimension_semantics<arbitrary>], iteration_bounds = array<i64: 1>, scalar_prefetch = 0 : i64, scratch_operands = 0 : i64, tpu.core_type = #tpu.core_type<tc>, window_params = [{pipeline_mode = #tpu.pipeline_mode<synchronous>, transform_indices = @transform_0, window_bounds = array<i64: 8, 1024>}, {pipeline_mode = #tpu.pipeline_mode<synchronous>, transform_indices = @transform_1, window_bounds = array<i64: 1024, 392>}, {pipeline_mode = #tpu.pipeline_mode<synchronous>, transform_indices = @transform_2, window_bounds = array<i64: 392, 24>}, {pipeline_mode = #tpu.pipeline_mode<synchronous>, transform_indices = @transform_3, window_bounds = array<i64: 8, 392>}, {pipeline_mode = #tpu.pipeline_mode<synchronous>, transform_indices = @transform_4, window_bounds = array<i64: 88, 32>}, {pipeline_mode = #tpu.pipeline_mode<synchronous>, transform_indices = @transform_5, window_bounds = array<i64: 8, 6>}]} {
    %0 = tpu.iota {dimensions = array<i32: 1>} : vector<1x8xi32>
    %c2_i32 = arith.constant 2 : i32
    %1 = vector.broadcast %c2_i32 : i32 to vector<1x8xi32>
    %2 = arith.cmpi slt, %0, %1 : vector<1x8xi32>
    %3 = arith.extui %2 : vector<1x8xi1> to vector<1x8xi32>
    %4 = arith.sitofp %3 : vector<1x8xi32> to vector<1x8xf32>
    %c0 = arith.constant 0 : index
    %c0_0 = arith.constant 0 : index
    %5 = vector.load %arg1[%c0, %c0_0] : memref<8x1024xf32, #tpu.memory_space<vmem>>, vector<8x1024xf32>
    %c0_1 = arith.constant 0 : index
    %c0_2 = arith.constant 0 : index
    %6 = vector.load %arg2[%c0_1, %c0_2] : memref<1024x392xf32, #tpu.memory_space<vmem>>, vector<1024x392xf32>
    %cst = arith.constant dense<0.000000e+00> : vector<8x392xf32>
    %7 = tpu.matmul %5, %6, %cst {dimension_numbers = #tpu.dot_dimension_numbers<[1], [0], [0], [1], [0, 0, 1, 1], [], []>} : vector<8x1024xf32>, vector<1024x392xf32>, vector<8x392xf32> -> vector<8x392xf32>
    %c0_3 = arith.constant 0 : index
    %c16 = arith.constant 16 : index
    %8 = vector.load %arg3[%c0_3, %c16] : memref<392x24xf32, #tpu.memory_space<vmem>>, vector<392x8xf32>
    %c0_4 = arith.constant 0 : index
    %c0_5 = arith.constant 0 : index
    %9 = vector.load %arg4[%c0_4, %c0_5] : memref<8x392xf32, #tpu.memory_space<vmem>>, vector<8x392xf32>
    %cst_6 = arith.constant dense<0.000000e+00> : vector<1x392xf32>
    %10 = tpu.matmul %4, %7, %cst_6 {dimension_numbers = #tpu.dot_dimension_numbers<[1], [0], [0], [1], [0, 0, 1, 1], [], []>} : vector<1x8xf32>, vector<8x392xf32>, vector<1x392xf32> -> vector<1x392xf32>
    %cst_7 = arith.constant dense<0.000000e+00> : vector<1x8xf32>
    %11 = tpu.matmul %10, %8, %cst_7 {dimension_numbers = #tpu.dot_dimension_numbers<[1], [0], [0], [1], [0, 0, 1, 1], [], []>} : vector<1x392xf32>, vector<392x8xf32>, vector<1x8xf32> -> vector<1x8xf32>
    %cst_8 = arith.constant 0.0102040814 : f32
    %12 = vector.broadcast %cst_8 : f32 to vector<1x8xf32>
    %13 = arith.mulf %11, %12 : vector<1x8xf32>
    %cst_9 = arith.constant dense<0.000000e+00> : vector<1x392xf32>
    %14 = tpu.matmul %13, %9, %cst_9 {dimension_numbers = #tpu.dot_dimension_numbers<[1], [0], [0], [1], [0, 0, 1, 1], [], []>} : vector<1x8xf32>, vector<8x392xf32>, vector<1x392xf32> -> vector<1x392xf32>
    %15 = vector.broadcast %14 : vector<1x392xf32> to vector<8x392xf32>
    %16 = arith.subf %7, %15 : vector<8x392xf32>
    %17 = arith.mulf %16, %16 : vector<8x392xf32>
    %cst_10 = arith.constant dense<0.000000e+00> : vector<1x392xf32>
    %18 = tpu.matmul %4, %17, %cst_10 {dimension_numbers = #tpu.dot_dimension_numbers<[1], [0], [0], [1], [0, 0, 1, 1], [], []>} : vector<1x8xf32>, vector<8x392xf32>, vector<1x392xf32> -> vector<1x392xf32>
    %cst_11 = arith.constant dense<0.000000e+00> : vector<1x8xf32>
    %19 = tpu.matmul %18, %8, %cst_11 {dimension_numbers = #tpu.dot_dimension_numbers<[1], [0], [0], [1], [0, 0, 1, 1], [], []>} : vector<1x392xf32>, vector<392x8xf32>, vector<1x8xf32> -> vector<1x8xf32>
    %cst_12 = arith.constant 0.0102040814 : f32
    %20 = vector.broadcast %cst_12 : f32 to vector<1x8xf32>
    %21 = arith.mulf %19, %20 : vector<1x8xf32>
    %c0_13 = arith.constant 0 : index
    %c0_14 = arith.constant 0 : index
    %22 = vector.load %arg5[%c0_13, %c0_14] : memref<88x32xf32, #tpu.memory_space<vmem>>, vector<1x8xf32>
    %c0_15 = arith.constant 0 : index
    %c8 = arith.constant 8 : index
    %23 = vector.load %arg5[%c0_15, %c8] : memref<88x32xf32, #tpu.memory_space<vmem>>, vector<1x8xf32>
    %cst_16 = arith.constant 9.99999974E-6 : f32
    %24 = vector.broadcast %cst_16 : f32 to vector<1x8xf32>
    %25 = arith.addf %21, %24 : vector<1x8xf32>
    %26 = math.rsqrt %25 : vector<1x8xf32>
    %27 = arith.mulf %22, %26 : vector<1x8xf32>
    %cst_17 = arith.constant dense<0.000000e+00> : vector<1x392xf32>
    %28 = tpu.matmul %27, %9, %cst_17 {dimension_numbers = #tpu.dot_dimension_numbers<[1], [0], [0], [1], [0, 0, 1, 1], [], []>} : vector<1x8xf32>, vector<8x392xf32>, vector<1x392xf32> -> vector<1x392xf32>
    %cst_18 = arith.constant dense<0.000000e+00> : vector<1x392xf32>
    %29 = tpu.matmul %23, %9, %cst_18 {dimension_numbers = #tpu.dot_dimension_numbers<[1], [0], [0], [1], [0, 0, 1, 1], [], []>} : vector<1x8xf32>, vector<8x392xf32>, vector<1x392xf32> -> vector<1x392xf32>
    %30 = vector.broadcast %28 : vector<1x392xf32> to vector<8x392xf32>
    %31 = arith.mulf %16, %30 : vector<8x392xf32>
    %32 = vector.broadcast %29 : vector<1x392xf32> to vector<8x392xf32>
    %33 = arith.addf %31, %32 : vector<8x392xf32>
    %cst_19 = arith.constant 0.000000e+00 : f32
    %34 = vector.broadcast %cst_19 : f32 to vector<8x392xf32>
    %35 = arith.maximumf %33, %34 : vector<8x392xf32>
    %c0_20 = arith.constant 0 : index
    %c0_21 = arith.constant 0 : index
    %36 = vector.load %arg3[%c0_20, %c0_21] : memref<392x24xf32, #tpu.memory_space<vmem>>, vector<392x9xf32>
    %cst_22 = arith.constant dense<0.000000e+00> : vector<8x9xf32>
    %37 = tpu.matmul %35, %36, %cst_22 {dimension_numbers = #tpu.dot_dimension_numbers<[1], [0], [0], [1], [0, 0, 1, 1], [], []>} : vector<8x392xf32>, vector<392x9xf32>, vector<8x9xf32> -> vector<8x9xf32>
    %cst_23 = arith.constant dense<0.000000e+00> : vector<1x9xf32>
    %38 = tpu.matmul %4, %37, %cst_23 {dimension_numbers = #tpu.dot_dimension_numbers<[1], [0], [0], [1], [0, 0, 1, 1], [], []>} : vector<1x8xf32>, vector<8x9xf32>, vector<1x9xf32> -> vector<1x9xf32>
    %cst_24 = arith.constant dense<0.000000e+00> : vector<1xf32>
    %39 = vector.multi_reduction <add>, %38, %cst_24 [1] : vector<1x9xf32> to vector<1xf32>
    %40 = vector.shape_cast %39 : vector<1xf32> to vector<1x1xf32>
    %cst_25 = arith.constant 0.055555556 : f32
    %41 = vector.broadcast %cst_25 : f32 to vector<1x1xf32>
    %42 = arith.mulf %40, %41 : vector<1x1xf32>
    %43 = vector.broadcast %42 : vector<1x1xf32> to vector<8x9xf32>
    %44 = arith.subf %37, %43 : vector<8x9xf32>
    %45 = arith.mulf %44, %44 : vector<8x9xf32>
    %cst_26 = arith.constant dense<0.000000e+00> : vector<1x9xf32>
    %46 = tpu.matmul %4, %45, %cst_26 {dimension_numbers = #tpu.dot_dimension_numbers<[1], [0], [0], [1], [0, 0, 1, 1], [], []>} : vector<1x8xf32>, vector<8x9xf32>, vector<1x9xf32> -> vector<1x9xf32>
    %cst_27 = arith.constant dense<0.000000e+00> : vector<1xf32>
    %47 = vector.multi_reduction <add>, %46, %cst_27 [1] : vector<1x9xf32> to vector<1xf32>
    %48 = vector.shape_cast %47 : vector<1xf32> to vector<1x1xf32>
    %cst_28 = arith.constant 0.055555556 : f32
    %49 = vector.broadcast %cst_28 : f32 to vector<1x1xf32>
    %50 = arith.mulf %48, %49 : vector<1x1xf32>
    %c0_29 = arith.constant 0 : index
    %c16_30 = arith.constant 16 : index
    %51 = vector.load %arg5[%c0_29, %c16_30] : memref<88x32xf32, #tpu.memory_space<vmem>>, vector<1x1xf32>
    %c0_31 = arith.constant 0 : index
    %c17 = arith.constant 17 : index
    %52 = vector.load %arg5[%c0_31, %c17] : memref<88x32xf32, #tpu.memory_space<vmem>>, vector<1x1xf32>
    %cst_32 = arith.constant 9.99999974E-6 : f32
    %53 = vector.broadcast %cst_32 : f32 to vector<1x1xf32>
    %54 = arith.addf %50, %53 : vector<1x1xf32>
    %55 = math.rsqrt %54 : vector<1x1xf32>
    %56 = arith.mulf %51, %55 : vector<1x1xf32>
    %57 = vector.broadcast %56 : vector<1x1xf32> to vector<8x9xf32>
    %58 = arith.mulf %44, %57 : vector<8x9xf32>
    %59 = vector.broadcast %52 : vector<1x1xf32> to vector<8x9xf32>
    %60 = arith.addf %58, %59 : vector<8x9xf32>
    %cst_33 = arith.constant 0.000000e+00 : f32
    %61 = vector.broadcast %cst_33 : f32 to vector<8x9xf32>
    %62 = arith.maximumf %60, %61 : vector<8x9xf32>
    %c8_34 = arith.constant 8 : index
    %c0_35 = arith.constant 0 : index
    %63 = vector.load %arg5[%c8_34, %c0_35] : memref<88x32xf32, #tpu.memory_space<vmem>>, vector<9x32xf32>
    %cst_36 = arith.constant dense<0.000000e+00> : vector<8x32xf32>
    %64 = tpu.matmul %62, %63, %cst_36 {dimension_numbers = #tpu.dot_dimension_numbers<[1], [0], [0], [1], [0, 0, 1, 1], [], []>} : vector<8x9xf32>, vector<9x32xf32>, vector<8x32xf32> -> vector<8x32xf32>
    %c1 = arith.constant 1 : index
    %c0_37 = arith.constant 0 : index
    %65 = vector.load %arg5[%c1, %c0_37] : memref<88x32xf32, #tpu.memory_space<vmem>>, vector<1x32xf32>
    %66 = vector.broadcast %65 : vector<1x32xf32> to vector<8x32xf32>
    %67 = arith.addf %64, %66 : vector<8x32xf32>
    %cst_38 = arith.constant 0.000000e+00 : f32
    %68 = vector.broadcast %cst_38 : f32 to vector<8x32xf32>
    %69 = arith.maximumf %67, %68 : vector<8x32xf32>
    %c24 = arith.constant 24 : index
    %c0_39 = arith.constant 0 : index
    %70 = vector.load %arg5[%c24, %c0_39] : memref<88x32xf32, #tpu.memory_space<vmem>>, vector<32x32xf32>
    %cst_40 = arith.constant dense<0.000000e+00> : vector<8x32xf32>
    %71 = tpu.matmul %69, %70, %cst_40 {dimension_numbers = #tpu.dot_dimension_numbers<[1], [0], [0], [1], [0, 0, 1, 1], [], []>} : vector<8x32xf32>, vector<32x32xf32>, vector<8x32xf32> -> vector<8x32xf32>
    %c2 = arith.constant 2 : index
    %c0_41 = arith.constant 0 : index
    %72 = vector.load %arg5[%c2, %c0_41] : memref<88x32xf32, #tpu.memory_space<vmem>>, vector<1x32xf32>
    %73 = vector.broadcast %72 : vector<1x32xf32> to vector<8x32xf32>
    %74 = arith.addf %71, %73 : vector<8x32xf32>
    %cst_42 = arith.constant 0.000000e+00 : f32
    %75 = vector.broadcast %cst_42 : f32 to vector<8x32xf32>
    %76 = arith.maximumf %74, %75 : vector<8x32xf32>
    %c56 = arith.constant 56 : index
    %c0_43 = arith.constant 0 : index
    %77 = vector.load %arg5[%c56, %c0_43] : memref<88x32xf32, #tpu.memory_space<vmem>>, vector<32x6xf32>
    %cst_44 = arith.constant dense<0.000000e+00> : vector<8x6xf32>
    %78 = tpu.matmul %76, %77, %cst_44 {dimension_numbers = #tpu.dot_dimension_numbers<[1], [0], [0], [1], [0, 0, 1, 1], [], []>} : vector<8x32xf32>, vector<32x6xf32>, vector<8x6xf32> -> vector<8x6xf32>
    %c3 = arith.constant 3 : index
    %c0_45 = arith.constant 0 : index
    %79 = vector.load %arg5[%c3, %c0_45] : memref<88x32xf32, #tpu.memory_space<vmem>>, vector<1x6xf32>
    %80 = vector.broadcast %79 : vector<1x6xf32> to vector<8x6xf32>
    %81 = arith.addf %78, %80 : vector<8x6xf32>
    %c0_46 = arith.constant 0 : index
    %c0_47 = arith.constant 0 : index
    %82 = vector.load %arg6[%c0_46, %c0_47] : memref<8x6xf32, #tpu.memory_space<vmem>>, vector<8x6xf32>
    tpu.vector_store %arg6[%c0_46, %c0_47], %81 {strides = array<i32>} : memref<8x6xf32, #tpu.memory_space<vmem>>, vector<8x6xf32>,
    return
  }
  func.func @transform_0(%arg0: i32) -> (i32, i32) {
    %c0_i32 = arith.constant 0 : i32
    %c0_i32_0 = arith.constant 0 : i32
    %c0_i32_1 = arith.constant 0 : i32
    return %c0_i32, %c0_i32_0 : i32, i32
  }
  func.func @transform_1(%arg0: i32) -> (i32, i32) {
    %c0_i32 = arith.constant 0 : i32
    %c0_i32_0 = arith.constant 0 : i32
    %c0_i32_1 = arith.constant 0 : i32
    return %c0_i32, %c0_i32_0 : i32, i32
  }
  func.func @transform_2(%arg0: i32) -> (i32, i32) {
    %c0_i32 = arith.constant 0 : i32
    %c0_i32_0 = arith.constant 0 : i32
    %c0_i32_1 = arith.constant 0 : i32
    return %c0_i32, %c0_i32_0 : i32, i32
  }
  func.func @transform_3(%arg0: i32) -> (i32, i32) {
    %c0_i32 = arith.constant 0 : i32
    %c0_i32_0 = arith.constant 0 : i32
    %c0_i32_1 = arith.constant 0 : i32
    return %c0_i32, %c0_i32_0 : i32, i32
  }
  func.func @transform_4(%arg0: i32) -> (i32, i32) {
    %c0_i32 = arith.constant 0 : i32
    %c0_i32_0 = arith.constant 0 : i32
    %c0_i32_1 = arith.constant 0 : i32
    return %c0_i32, %c0_i32_0 : i32, i32
  }
  func.func @transform_5(%arg0: i32) -> (i32, i32) {
    %c0_i32 = arith.constant 0 : i32
    %c0_i32_0 = arith.constant 0 : i32
    %c0_i32_1 = arith.constant 0 : i32
    return %c0_i32, %c0_i32_0 : i32, i32
  }
}

</mosaic_0001>

<llo_original>
// kernel: deep_q_network_forward.1
$region0: #{deep_q_network_forward.1}
  #allocation0 [shape = 'u32[]', space=smem, size = 0x4, offset = 0x4, fixed_abs, tag = 'smem constant byte address 0x4 - core index']
  #allocation1 [shape = 'u32[144,128]{1,0:T(1,128)}', space=vmem, size = 0x12000, scoped, tag = 'internal scratch']
  %s0 = inlined_call_operand.vmem [shape: f32[8,1024], index: 0, kind: input, shape index: {}]
  %s1 = inlined_call_operand.vmem [shape: f32[1024,392], index: 1, kind: input, shape index: {}]
  %s2 = inlined_call_operand.vmem [shape: f32[392,24], index: 2, kind: input, shape index: {}]
  %s3 = inlined_call_operand.vmem [shape: f32[8,392], index: 3, kind: input, shape index: {}]
  %s4 = inlined_call_operand.vmem [shape: f32[88,32], index: 4, kind: input, shape index: {}]
  %s5 = inlined_call_operand.vmem [shape: f32[8,6], index: 5, kind: output, shape index: {}]
  %s6 = sld [smem:[#allocation0]]
  $region30: #{deep_q_network_forward.1} parent=0
    _
  %s8 = ssub.s32 1, %s6
  %s9 = scalar_select 0, %s8, %s6
  // Predicated region
  $region2: #{deep_q_network_forward.1} parent=0 // pred_check
    _
  $region3: #{deep_q_network_forward.1} parent=0 // pred_check_branch
    %11 = sbr.rel (0) target = $region5
  $region4: #{deep_q_network_forward.1} parent=0 // pred_region
    _
  $region5: #{deep_q_network_forward.1} parent=0 // pred_fallthru
    _
  // Predicated region
  $region6: #{deep_q_network_forward.1} parent=0 // pred_check
    _
  $region7: #{deep_q_network_forward.1} parent=0 // pred_check_branch
    %13 = sbr.rel (0) target = $region9
  $region8: #{deep_q_network_forward.1} parent=0 // pred_region
    _
  $region9: #{deep_q_network_forward.1} parent=0 // pred_fallthru
    _
  // Predicated region
  $region10: #{deep_q_network_forward.1} parent=0 // pred_check
    _
  $region11: #{deep_q_network_forward.1} parent=0 // pred_check_branch
    %15 = sbr.rel (0) target = $region13
  $region12: #{deep_q_network_forward.1} parent=0 // pred_region
    _
  $region13: #{deep_q_network_forward.1} parent=0 // pred_fallthru
    _
  // Predicated region
  $region14: #{deep_q_network_forward.1} parent=0 // pred_check
    _
  $region15: #{deep_q_network_forward.1} parent=0 // pred_check_branch
    %17 = sbr.rel (0) target = $region17
  $region16: #{deep_q_network_forward.1} parent=0 // pred_region
    _
  $region17: #{deep_q_network_forward.1} parent=0 // pred_fallthru
    _
  // Predicated region
  $region18: #{deep_q_network_forward.1} parent=0 // pred_check
    _
  $region19: #{deep_q_network_forward.1} parent=0 // pred_check_branch
    %19 = sbr.rel (0) target = $region21
  $region20: #{deep_q_network_forward.1} parent=0 // pred_region
    _
  $region21: #{deep_q_network_forward.1} parent=0 // pred_fallthru
    _
  %v20 = vlaneseq
  %v21 = vand.u32 %v20, 127
  %vm22 = vcmp.lt.s32.totalorder %v21, 2
  %v23 = vsel %vm22, 1, 0
  %v24 = vcvt.s32.f32 %v23
  %v25 = vld [vmem:[%s0] sm:$0xff]
  %v26 = vld [vmem:[%s0 + $0x8] sm:$0xff]
  %v27 = vld [vmem:[%s0 + $0x10] sm:$0xff]
  %v28 = vld [vmem:[%s0 + $0x18] sm:$0xff]
  %v29 = vld [vmem:[%s0 + $0x20] sm:$0xff]
  %v30 = vld [vmem:[%s0 + $0x28] sm:$0xff]
  %v31 = vld [vmem:[%s0 + $0x30] sm:$0xff]
  %v32 = vld [vmem:[%s0 + $0x38] sm:$0xff]
  %v33 = vld [vmem:[%s1] sm:$0xff]
  %v34 = vld [vmem:[%s1 + $0x8] sm:$0xff]
  %v35 = vld [vmem:[%s1 + $0x10] sm:$0xff]
  %v36 = vld [vmem:[%s1 + $0x18] sm:$0xff]
  %v37 = vld [vmem:[%s1 + $0x20] sm:$0xff]
  %v38 = vld [vmem:[%s1 + $0x28] sm:$0xff]
  %v39 = vld [vmem:[%s1 + $0x30] sm:$0xff]
  %v40 = vld [vmem:[%s1 + $0x38] sm:$0xff]
  %v41 = vld [vmem:[%s1 + $0x40] sm:$0xff]
  %v42 = vld [vmem:[%s1 + $0x48] sm:$0xff]
  %v43 = vld [vmem:[%s1 + $0x50] sm:$0xff]
  %v44 = vld [vmem:[%s1 + $0x58] sm:$0xff]
  %v45 = vld [vmem:[%s1 + $0x60] sm:$0xff]
  %v46 = vld [vmem:[%s1 + $0x68] sm:$0xff]
  %v47 = vld [vmem:[%s1 + $0x70] sm:$0xff]
  %v48 = vld [vmem:[%s1 + $0x78] sm:$0xff]
  %v49 = vld [vmem:[%s1 + $0x80] sm:$0xff]
  %v50 = vld [vmem:[%s1 + $0x88] sm:$0xff]
  %v51 = vld [vmem:[%s1 + $0x90] sm:$0xff]
  %v52 = vld [vmem:[%s1 + $0x98] sm:$0xff]
  %v53 = vld [vmem:[%s1 + $0xa0] sm:$0xff]
  %v54 = vld [vmem:[%s1 + $0xa8] sm:$0xff]
  %v55 = vld [vmem:[%s1 + $0xb0] sm:$0xff]
  %v56 = vld [vmem:[%s1 + $0xb8] sm:$0xff]
  %v57 = vld [vmem:[%s1 + $0xc0] sm:$0xff]
  %v58 = vld [vmem:[%s1 + $0xc8] sm:$0xff]
  %v59 = vld [vmem:[%s1 + $0xd0] sm:$0xff]
  %v60 = vld [vmem:[%s1 + $0xd8] sm:$0xff]
  %v61 = vld [vmem:[%s1 + $0xe0] sm:$0xff]
  %v62 = vld [vmem:[%s1 + $0xe8] sm:$0xff]
  %v63 = vld [vmem:[%s1 + $0xf0] sm:$0xff]
  %v64 = vld [vmem:[%s1 + $0xf8] sm:$0xff]
  %v65 = vld [vmem:[%s1 + $0x100] sm:$0xff]
  %v66 = vld [vmem:[%s1 + $0x108] sm:$0xff]
  %v67 = vld [vmem:[%s1 + $0x110] sm:$0xff]
  %v68 = vld [vmem:[%s1 + $0x118] sm:$0xff]
  %v69 = vld [vmem:[%s1 + $0x120] sm:$0xff]
  %v70 = vld [vmem:[%s1 + $0x128] sm:$0xff]
  %v71 = vld [vmem:[%s1 + $0x130] sm:$0xff]
  %v72 = vld [vmem:[%s1 + $0x138] sm:$0xff]
  %v73 = vld [vmem:[%s1 + $0x140] sm:$0xff]
  %v74 = vld [vmem:[%s1 + $0x148] sm:$0xff]
  %v75 = vld [vmem:[%s1 + $0x150] sm:$0xff]
  %v76 = vld [vmem:[%s1 + $0x158] sm:$0xff]
  %v77 = vld [vmem:[%s1 + $0x160] sm:$0xff]
  %v78 = vld [vmem:[%s1 + $0x168] sm:$0xff]
  %v79 = vld [vmem:[%s1 + $0x170] sm:$0xff]
  %v80 = vld [vmem:[%s1 + $0x178] sm:$0xff]
  %v81 = vld [vmem:[%s1 + $0x180] sm:$0xff]
  %v82 = vld [vmem:[%s1 + $0x188] sm:$0xff]
  %v83 = vld [vmem:[%s1 + $0x190] sm:$0xff]
  %v84 = vld [vmem:[%s1 + $0x198] sm:$0xff]
  %v85 = vld [vmem:[%s1 + $0x1a0] sm:$0xff]
  %v86 = vld [vmem:[%s1 + $0x1a8] sm:$0xff]
  %v87 = vld [vmem:[%s1 + $0x1b0] sm:$0xff]
  %v88 = vld [vmem:[%s1 + $0x1b8] sm:$0xff]
  %v89 = vld [vmem:[%s1 + $0x1c0] sm:$0xff]
  %v90 = vld [vmem:[%s1 + $0x1c8] sm:$0xff]
  %v91 = vld [vmem:[%s1 + $0x1d0] sm:$0xff]
  %v92 = vld [vmem:[%s1 + $0x1d8] sm:$0xff]
  %v93 = vld [vmem:[%s1 + $0x1e0] sm:$0xff]
  %v94 = vld [vmem:[%s1 + $0x1e8] sm:$0xff]
  %v95 = vld [vmem:[%s1 + $0x1f0] sm:$0xff]
  %v96 = vld [vmem:[%s1 + $0x1f8] sm:$0xff]
  %v97 = vld [vmem:[%s1 + $0x200] sm:$0xff]
  %v98 = vld [vmem:[%s1 + $0x208] sm:$0xff]
  %v99 = vld [vmem:[%s1 + $0x210] sm:$0xff]
  %v100 = vld [vmem:[%s1 + $0x218] sm:$0xff]
  %v101 = vld [vmem:[%s1 + $0x220] sm:$0xff]
  %v102 = vld [vmem:[%s1 + $0x228] sm:$0xff]
  %v103 = vld [vmem:[%s1 + $0x230] sm:$0xff]
  %v104 = vld [vmem:[%s1 + $0x238] sm:$0xff]
  %v105 = vld [vmem:[%s1 + $0x240] sm:$0xff]
  %v106 = vld [vmem:[%s1 + $0x248] sm:$0xff]
  %v107 = vld [vmem:[%s1 + $0x250] sm:$0xff]
  %v108 = vld [vmem:[%s1 + $0x258] sm:$0xff]
  %v109 = vld [vmem:[%s1 + $0x260] sm:$0xff]
  %v110 = vld [vmem:[%s1 + $0x268] sm:$0xff]
  %v111 = vld [vmem:[%s1 + $0x270] sm:$0xff]
  %v112 = vld [vmem:[%s1 + $0x278] sm:$0xff]
  %v113 = vld [vmem:[%s1 + $0x280] sm:$0xff]
  %v114 = vld [vmem:[%s1 + $0x288] sm:$0xff]
  %v115 = vld [vmem:[%s1 + $0x290] sm:$0xff]
  %v116 = vld [vmem:[%s1 + $0x298] sm:$0xff]
  %v117 = vld [vmem:[%s1 + $0x2a0] sm:$0xff]
  %v118 = vld [vmem:[%s1 + $0x2a8] sm:$0xff]
  %v119 = vld [vmem:[%s1 + $0x2b0] sm:$0xff]
  %v120 = vld [vmem:[%s1 + $0x2b8] sm:$0xff]
  %v121 = vld [vmem:[%s1 + $0x2c0] sm:$0xff]
  %v122 = vld [vmem:[%s1 + $0x2c8] sm:$0xff]
  %v123 = vld [vmem:[%s1 + $0x2d0] sm:$0xff]
  %v124 = vld [vmem:[%s1 + $0x2d8] sm:$0xff]
  %v125 = vld [vmem:[%s1 + $0x2e0] sm:$0xff]
  %v126 = vld [vmem:[%s1 + $0x2e8] sm:$0xff]
  %v127 = vld [vmem:[%s1 + $0x2f0] sm:$0xff]
  %v128 = vld [vmem:[%s1 + $0x2f8] sm:$0xff]
  %v129 = vld [vmem:[%s1 + $0x300] sm:$0xff]
  %v130 = vld [vmem:[%s1 + $0x308] sm:$0xff]
  %v131 = vld [vmem:[%s1 + $0x310] sm:$0xff]
  %v132 = vld [vmem:[%s1 + $0x318] sm:$0xff]
  %v133 = vld [vmem:[%s1 + $0x320] sm:$0xff]
  %v134 = vld [vmem:[%s1 + $0x328] sm:$0xff]
  %v135 = vld [vmem:[%s1 + $0x330] sm:$0xff]
  %v136 = vld [vmem:[%s1 + $0x338] sm:$0xff]
  %v137 = vld [vmem:[%s1 + $0x340] sm:$0xff]
  %v138 = vld [vmem:[%s1 + $0x348] sm:$0xff]
  %v139 = vld [vmem:[%s1 + $0x350] sm:$0xff]
  %v140 = vld [vmem:[%s1 + $0x358] sm:$0xff]
  %v141 = vld [vmem:[%s1 + $0x360] sm:$0xff]
  %v142 = vld [vmem:[%s1 + $0x368] sm:$0xff]
  %v143 = vld [vmem:[%s1 + $0x370] sm:$0xff]
  %v144 = vld [vmem:[%s1 + $0x378] sm:$0xff]
  %v145 = vld [vmem:[%s1 + $0x380] sm:$0xff]
  %v146 = vld [vmem:[%s1 + $0x388] sm:$0xff]
  %v147 = vld [vmem:[%s1 + $0x390] sm:$0xff]
  %v148 = vld [vmem:[%s1 + $0x398] sm:$0xff]
  %v149 = vld [vmem:[%s1 + $0x3a0] sm:$0xff]
  %v150 = vld [vmem:[%s1 + $0x3a8] sm:$0xff]
  %v151 = vld [vmem:[%s1 + $0x3b0] sm:$0xff]
  %v152 = vld [vmem:[%s1 + $0x3b8] sm:$0xff]
  %v153 = vld [vmem:[%s1 + $0x3c0] sm:$0xff]
  %v154 = vld [vmem:[%s1 + $0x3c8] sm:$0xff]
  %v155 = vld [vmem:[%s1 + $0x3d0] sm:$0xff]
  %v156 = vld [vmem:[%s1 + $0x3d8] sm:$0xff]
  %v157 = vld [vmem:[%s1 + $0x3e0] sm:$0xff]
  %v158 = vld [vmem:[%s1 + $0x3e8] sm:$0xff]
  %v159 = vld [vmem:[%s1 + $0x3f0] sm:$0xff]
  %v160 = vld [vmem:[%s1 + $0x3f8] sm:$0xff]
  %v161 = vld [vmem:[%s1 + $0x400] sm:$0xff]
  %v162 = vld [vmem:[%s1 + $0x408] sm:$0xff]
  %v163 = vld [vmem:[%s1 + $0x410] sm:$0xff]
  %v164 = vld [vmem:[%s1 + $0x418] sm:$0xff]
  %v165 = vld [vmem:[%s1 + $0x420] sm:$0xff]
  %v166 = vld [vmem:[%s1 + $0x428] sm:$0xff]
  %v167 = vld [vmem:[%s1 + $0x430] sm:$0xff]
  %v168 = vld [vmem:[%s1 + $0x438] sm:$0xff]
  %v169 = vld [vmem:[%s1 + $0x440] sm:$0xff]
  %v170 = vld [vmem:[%s1 + $0x448] sm:$0xff]
  %v171 = vld [vmem:[%s1 + $0x450] sm:$0xff]
  %v172 = vld [vmem:[%s1 + $0x458] sm:$0xff]
  %v173 = vld [vmem:[%s1 + $0x460] sm:$0xff]
  %v174 = vld [vmem:[%s1 + $0x468] sm:$0xff]
  %v175 = vld [vmem:[%s1 + $0x470] sm:$0xff]
  %v176 = vld [vmem:[%s1 + $0x478] sm:$0xff]
  %v177 = vld [vmem:[%s1 + $0x480] sm:$0xff]
  %v178 = vld [vmem:[%s1 + $0x488] sm:$0xff]
  %v179 = vld [vmem:[%s1 + $0x490] sm:$0xff]
  %v180 = vld [vmem:[%s1 + $0x498] sm:$0xff]
  %v181 = vld [vmem:[%s1 + $0x4a0] sm:$0xff]
  %v182 = vld [vmem:[%s1 + $0x4a8] sm:$0xff]
  %v183 = vld [vmem:[%s1 + $0x4b0] sm:$0xff]
  %v184 = vld [vmem:[%s1 + $0x4b8] sm:$0xff]
  %v185 = vld [vmem:[%s1 + $0x4c0] sm:$0xff]
  %v186 = vld [vmem:[%s1 + $0x4c8] sm:$0xff]
  %v187 = vld [vmem:[%s1 + $0x4d0] sm:$0xff]
  %v188 = vld [vmem:[%s1 + $0x4d8] sm:$0xff]
  %v189 = vld [vmem:[%s1 + $0x4e0] sm:$0xff]
  %v190 = vld [vmem:[%s1 + $0x4e8] sm:$0xff]
  %v191 = vld [vmem:[%s1 + $0x4f0] sm:$0xff]
  %v192 = vld [vmem:[%s1 + $0x4f8] sm:$0xff]
  %v193 = vld [vmem:[%s1 + $0x500] sm:$0xff]
  %v194 = vld [vmem:[%s1 + $0x508] sm:$0xff]
  %v195 = vld [vmem:[%s1 + $0x510] sm:$0xff]
  %v196 = vld [vmem:[%s1 + $0x518] sm:$0xff]
  %v197 = vld [vmem:[%s1 + $0x520] sm:$0xff]
  %v198 = vld [vmem:[%s1 + $0x528] sm:$0xff]
  %v199 = vld [vmem:[%s1 + $0x530] sm:$0xff]
  %v200 = vld [vmem:[%s1 + $0x538] sm:$0xff]
  %v201 = vld [vmem:[%s1 + $0x540] sm:$0xff]
  %v202 = vld [vmem:[%s1 + $0x548] sm:$0xff]
  %v203 = vld [vmem:[%s1 + $0x550] sm:$0xff]
  %v204 = vld [vmem:[%s1 + $0x558] sm:$0xff]
  %v205 = vld [vmem:[%s1 + $0x560] sm:$0xff]
  %v206 = vld [vmem:[%s1 + $0x568] sm:$0xff]
  %v207 = vld [vmem:[%s1 + $0x570] sm:$0xff]
  %v208 = vld [vmem:[%s1 + $0x578] sm:$0xff]
  %v209 = vld [vmem:[%s1 + $0x580] sm:$0xff]
  %v210 = vld [vmem:[%s1 + $0x588] sm:$0xff]
  %v211 = vld [vmem:[%s1 + $0x590] sm:$0xff]
  %v212 = vld [vmem:[%s1 + $0x598] sm:$0xff]
  %v213 = vld [vmem:[%s1 + $0x5a0] sm:$0xff]
  %v214 = vld [vmem:[%s1 + $0x5a8] sm:$0xff]
  %v215 = vld [vmem:[%s1 + $0x5b0] sm:$0xff]
  %v216 = vld [vmem:[%s1 + $0x5b8] sm:$0xff]
  %v217 = vld [vmem:[%s1 + $0x5c0] sm:$0xff]
  %v218 = vld [vmem:[%s1 + $0x5c8] sm:$0xff]
  %v219 = vld [vmem:[%s1 + $0x5d0] sm:$0xff]
  %v220 = vld [vmem:[%s1 + $0x5d8] sm:$0xff]
  %v221 = vld [vmem:[%s1 + $0x5e0] sm:$0xff]
  %v222 = vld [vmem:[%s1 + $0x5e8] sm:$0xff]
  %v223 = vld [vmem:[%s1 + $0x5f0] sm:$0xff]
  %v224 = vld [vmem:[%s1 + $0x5f8] sm:$0xff]
  %v225 = vld [vmem:[%s1 + $0x600] sm:$0xff]
  %v226 = vld [vmem:[%s1 + $0x608] sm:$0xff]
  %v227 = vld [vmem:[%s1 + $0x610] sm:$0xff]
  %v228 = vld [vmem:[%s1 + $0x618] sm:$0xff]
  %v229 = vld [vmem:[%s1 + $0x620] sm:$0xff]
  %v230 = vld [vmem:[%s1 + $0x628] sm:$0xff]
  %v231 = vld [vmem:[%s1 + $0x630] sm:$0xff]
  %v232 = vld [vmem:[%s1 + $0x638] sm:$0xff]
  %v233 = vld [vmem:[%s1 + $0x640] sm:$0xff]
  %v234 = vld [vmem:[%s1 + $0x648] sm:$0xff]
  %v235 = vld [vmem:[%s1 + $0x650] sm:$0xff]
  %v236 = vld [vmem:[%s1 + $0x658] sm:$0xff]
  %v237 = vld [vmem:[%s1 + $0x660] sm:$0xff]
  %v238 = vld [vmem:[%s1 + $0x668] sm:$0xff]
  %v239 = vld [vmem:[%s1 + $0x670] sm:$0xff]
  %v240 = vld [vmem:[%s1 + $0x678] sm:$0xff]
  %v241 = vld [vmem:[%s1 + $0x680] sm:$0xff]
  %v242 = vld [vmem:[%s1 + $0x688] sm:$0xff]
  %v243 = vld [vmem:[%s1 + $0x690] sm:$0xff]
  %v244 = vld [vmem:[%s1 + $0x698] sm:$0xff]
  %v245 = vld [vmem:[%s1 + $0x6a0] sm:$0xff]
  %v246 = vld [vmem:[%s1 + $0x6a8] sm:$0xff]
  %v247 = vld [vmem:[%s1 + $0x6b0] sm:$0xff]
  %v248 = vld [vmem:[%s1 + $0x6b8] sm:$0xff]
  %v249 = vld [vmem:[%s1 + $0x6c0] sm:$0xff]
  %v250 = vld [vmem:[%s1 + $0x6c8] sm:$0xff]
  %v251 = vld [vmem:[%s1 + $0x6d0] sm:$0xff]
  %v252 = vld [vmem:[%s1 + $0x6d8] sm:$0xff]
  %v253 = vld [vmem:[%s1 + $0x6e0] sm:$0xff]
  %v254 = vld [vmem:[%s1 + $0x6e8] sm:$0xff]
  %v255 = vld [vmem:[%s1 + $0x6f0] sm:$0xff]
  %v256 = vld [vmem:[%s1 + $0x6f8] sm:$0xff]
  %v257 = vld [vmem:[%s1 + $0x700] sm:$0xff]
  %v258 = vld [vmem:[%s1 + $0x708] sm:$0xff]
  %v259 = vld [vmem:[%s1 + $0x710] sm:$0xff]
  %v260 = vld [vmem:[%s1 + $0x718] sm:$0xff]
  %v261 = vld [vmem:[%s1 + $0x720] sm:$0xff]
  %v262 = vld [vmem:[%s1 + $0x728] sm:$0xff]
  %v263 = vld [vmem:[%s1 + $0x730] sm:$0xff]
  %v264 = vld [vmem:[%s1 + $0x738] sm:$0xff]
  %v265 = vld [vmem:[%s1 + $0x740] sm:$0xff]
  %v266 = vld [vmem:[%s1 + $0x748] sm:$0xff]
  %v267 = vld [vmem:[%s1 + $0x750] sm:$0xff]
  %v268 = vld [vmem:[%s1 + $0x758] sm:$0xff]
  %v269 = vld [vmem:[%s1 + $0x760] sm:$0xff]
  %v270 = vld [vmem:[%s1 + $0x768] sm:$0xff]
  %v271 = vld [vmem:[%s1 + $0x770] sm:$0xff]
  %v272 = vld [vmem:[%s1 + $0x778] sm:$0xff]
  %v273 = vld [vmem:[%s1 + $0x780] sm:$0xff]
  %v274 = vld [vmem:[%s1 + $0x788] sm:$0xff]
  %v275 = vld [vmem:[%s1 + $0x790] sm:$0xff]
  %v276 = vld [vmem:[%s1 + $0x798] sm:$0xff]
  %v277 = vld [vmem:[%s1 + $0x7a0] sm:$0xff]
  %v278 = vld [vmem:[%s1 + $0x7a8] sm:$0xff]
  %v279 = vld [vmem:[%s1 + $0x7b0] sm:$0xff]
  %v280 = vld [vmem:[%s1 + $0x7b8] sm:$0xff]
  %v281 = vld [vmem:[%s1 + $0x7c0] sm:$0xff]
  %v282 = vld [vmem:[%s1 + $0x7c8] sm:$0xff]
  %v283 = vld [vmem:[%s1 + $0x7d0] sm:$0xff]
  %v284 = vld [vmem:[%s1 + $0x7d8] sm:$0xff]
  %v285 = vld [vmem:[%s1 + $0x7e0] sm:$0xff]
  %v286 = vld [vmem:[%s1 + $0x7e8] sm:$0xff]
  %v287 = vld [vmem:[%s1 + $0x7f0] sm:$0xff]
  %v288 = vld [vmem:[%s1 + $0x7f8] sm:$0xff]
  %v289 = vld [vmem:[%s1 + $0x800] sm:$0xff]
  %v290 = vld [vmem:[%s1 + $0x808] sm:$0xff]
  %v291 = vld [vmem:[%s1 + $0x810] sm:$0xff]
  %v292 = vld [vmem:[%s1 + $0x818] sm:$0xff]
  %v293 = vld [vmem:[%s1 + $0x820] sm:$0xff]
  %v294 = vld [vmem:[%s1 + $0x828] sm:$0xff]
  %v295 = vld [vmem:[%s1 + $0x830] sm:$0xff]
  %v296 = vld [vmem:[%s1 + $0x838] sm:$0xff]
  %v297 = vld [vmem:[%s1 + $0x840] sm:$0xff]
  %v298 = vld [vmem:[%s1 + $0x848] sm:$0xff]
  %v299 = vld [vmem:[%s1 + $0x850] sm:$0xff]
  %v300 = vld [vmem:[%s1 + $0x858] sm:$0xff]
  %v301 = vld [vmem:[%s1 + $0x860] sm:$0xff]
  %v302 = vld [vmem:[%s1 + $0x868] sm:$0xff]
  %v303 = vld [vmem:[%s1 + $0x870] sm:$0xff]
  %v304 = vld [vmem:[%s1 + $0x878] sm:$0xff]
  %v305 = vld [vmem:[%s1 + $0x880] sm:$0xff]
  %v306 = vld [vmem:[%s1 + $0x888] sm:$0xff]
  %v307 = vld [vmem:[%s1 + $0x890] sm:$0xff]
  %v308 = vld [vmem:[%s1 + $0x898] sm:$0xff]
  %v309 = vld [vmem:[%s1 + $0x8a0] sm:$0xff]
  %v310 = vld [vmem:[%s1 + $0x8a8] sm:$0xff]
  %v311 = vld [vmem:[%s1 + $0x8b0] sm:$0xff]
  %v312 = vld [vmem:[%s1 + $0x8b8] sm:$0xff]
  %v313 = vld [vmem:[%s1 + $0x8c0] sm:$0xff]
  %v314 = vld [vmem:[%s1 + $0x8c8] sm:$0xff]
  %v315 = vld [vmem:[%s1 + $0x8d0] sm:$0xff]
  %v316 = vld [vmem:[%s1 + $0x8d8] sm:$0xff]
  %v317 = vld [vmem:[%s1 + $0x8e0] sm:$0xff]
  %v318 = vld [vmem:[%s1 + $0x8e8] sm:$0xff]
  %v319 = vld [vmem:[%s1 + $0x8f0] sm:$0xff]
  %v320 = vld [vmem:[%s1 + $0x8f8] sm:$0xff]
  %v321 = vld [vmem:[%s1 + $0x900] sm:$0xff]
  %v322 = vld [vmem:[%s1 + $0x908] sm:$0xff]
  %v323 = vld [vmem:[%s1 + $0x910] sm:$0xff]
  %v324 = vld [vmem:[%s1 + $0x918] sm:$0xff]
  %v325 = vld [vmem:[%s1 + $0x920] sm:$0xff]
  %v326 = vld [vmem:[%s1 + $0x928] sm:$0xff]
  %v327 = vld [vmem:[%s1 + $0x930] sm:$0xff]
  %v328 = vld [vmem:[%s1 + $0x938] sm:$0xff]
  %v329 = vld [vmem:[%s1 + $0x940] sm:$0xff]
  %v330 = vld [vmem:[%s1 + $0x948] sm:$0xff]
  %v331 = vld [vmem:[%s1 + $0x950] sm:$0xff]
  %v332 = vld [vmem:[%s1 + $0x958] sm:$0xff]
  %v333 = vld [vmem:[%s1 + $0x960] sm:$0xff]
  %v334 = vld [vmem:[%s1 + $0x968] sm:$0xff]
  %v335 = vld [vmem:[%s1 + $0x970] sm:$0xff]
  %v336 = vld [vmem:[%s1 + $0x978] sm:$0xff]
  %v337 = vld [vmem:[%s1 + $0x980] sm:$0xff]
  %v338 = vld [vmem:[%s1 + $0x988] sm:$0xff]
  %v339 = vld [vmem:[%s1 + $0x990] sm:$0xff]
  %v340 = vld [vmem:[%s1 + $0x998] sm:$0xff]
  %v341 = vld [vmem:[%s1 + $0x9a0] sm:$0xff]
  %v342 = vld [vmem:[%s1 + $0x9a8] sm:$0xff]
  %v343 = vld [vmem:[%s1 + $0x9b0] sm:$0xff]
  %v344 = vld [vmem:[%s1 + $0x9b8] sm:$0xff]
  %v345 = vld [vmem:[%s1 + $0x9c0] sm:$0xff]
  %v346 = vld [vmem:[%s1 + $0x9c8] sm:$0xff]
  %v347 = vld [vmem:[%s1 + $0x9d0] sm:$0xff]
  %v348 = vld [vmem:[%s1 + $0x9d8] sm:$0xff]
  %v349 = vld [vmem:[%s1 + $0x9e0] sm:$0xff]
  %v350 = vld [vmem:[%s1 + $0x9e8] sm:$0xff]
  %v351 = vld [vmem:[%s1 + $0x9f0] sm:$0xff]
  %v352 = vld [vmem:[%s1 + $0x9f8] sm:$0xff]
  %v353 = vld [vmem:[%s1 + $0xa00] sm:$0xff]
  %v354 = vld [vmem:[%s1 + $0xa08] sm:$0xff]
  %v355 = vld [vmem:[%s1 + $0xa10] sm:$0xff]
  %v356 = vld [vmem:[%s1 + $0xa18] sm:$0xff]
  %v357 = vld [vmem:[%s1 + $0xa20] sm:$0xff]
  %v358 = vld [vmem:[%s1 + $0xa28] sm:$0xff]
  %v359 = vld [vmem:[%s1 + $0xa30] sm:$0xff]
  %v360 = vld [vmem:[%s1 + $0xa38] sm:$0xff]
  %v361 = vld [vmem:[%s1 + $0xa40] sm:$0xff]
  %v362 = vld [vmem:[%s1 + $0xa48] sm:$0xff]
  %v363 = vld [vmem:[%s1 + $0xa50] sm:$0xff]
  %v364 = vld [vmem:[%s1 + $0xa58] sm:$0xff]
  %v365 = vld [vmem:[%s1 + $0xa60] sm:$0xff]
  %v366 = vld [vmem:[%s1 + $0xa68] sm:$0xff]
  %v367 = vld [vmem:[%s1 + $0xa70] sm:$0xff]
  %v368 = vld [vmem:[%s1 + $0xa78] sm:$0xff]
  %v369 = vld [vmem:[%s1 + $0xa80] sm:$0xff]
  %v370 = vld [vmem:[%s1 + $0xa88] sm:$0xff]
  %v371 = vld [vmem:[%s1 + $0xa90] sm:$0xff]
  %v372 = vld [vmem:[%s1 + $0xa98] sm:$0xff]
  %v373 = vld [vmem:[%s1 + $0xaa0] sm:$0xff]
  %v374 = vld [vmem:[%s1 + $0xaa8] sm:$0xff]
  %v375 = vld [vmem:[%s1 + $0xab0] sm:$0xff]
  %v376 = vld [vmem:[%s1 + $0xab8] sm:$0xff]
  %v377 = vld [vmem:[%s1 + $0xac0] sm:$0xff]
  %v378 = vld [vmem:[%s1 + $0xac8] sm:$0xff]
  %v379 = vld [vmem:[%s1 + $0xad0] sm:$0xff]
  %v380 = vld [vmem:[%s1 + $0xad8] sm:$0xff]
  %v381 = vld [vmem:[%s1 + $0xae0] sm:$0xff]
  %v382 = vld [vmem:[%s1 + $0xae8] sm:$0xff]
  %v383 = vld [vmem:[%s1 + $0xaf0] sm:$0xff]
  %v384 = vld [vmem:[%s1 + $0xaf8] sm:$0xff]
  %v385 = vld [vmem:[%s1 + $0xb00] sm:$0xff]
  %v386 = vld [vmem:[%s1 + $0xb08] sm:$0xff]
  %v387 = vld [vmem:[%s1 + $0xb10] sm:$0xff]
  %v388 = vld [vmem:[%s1 + $0xb18] sm:$0xff]
  %v389 = vld [vmem:[%s1 + $0xb20] sm:$0xff]
  %v390 = vld [vmem:[%s1 + $0xb28] sm:$0xff]
  %v391 = vld [vmem:[%s1 + $0xb30] sm:$0xff]
  %v392 = vld [vmem:[%s1 + $0xb38] sm:$0xff]
  %v393 = vld [vmem:[%s1 + $0xb40] sm:$0xff]
  %v394 = vld [vmem:[%s1 + $0xb48] sm:$0xff]
  %v395 = vld [vmem:[%s1 + $0xb50] sm:$0xff]
  %v396 = vld [vmem:[%s1 + $0xb58] sm:$0xff]
  %v397 = vld [vmem:[%s1 + $0xb60] sm:$0xff]
  %v398 = vld [vmem:[%s1 + $0xb68] sm:$0xff]
  %v399 = vld [vmem:[%s1 + $0xb70] sm:$0xff]
  %v400 = vld [vmem:[%s1 + $0xb78] sm:$0xff]
  %v401 = vld [vmem:[%s1 + $0xb80] sm:$0xff]
  %v402 = vld [vmem:[%s1 + $0xb88] sm:$0xff]
  %v403 = vld [vmem:[%s1 + $0xb90] sm:$0xff]
  %v404 = vld [vmem:[%s1 + $0xb98] sm:$0xff]
  %v405 = vld [vmem:[%s1 + $0xba0] sm:$0xff]
  %v406 = vld [vmem:[%s1 + $0xba8] sm:$0xff]
  %v407 = vld [vmem:[%s1 + $0xbb0] sm:$0xff]
  %v408 = vld [vmem:[%s1 + $0xbb8] sm:$0xff]
  %v409 = vld [vmem:[%s1 + $0xbc0] sm:$0xff]
  %v410 = vld [vmem:[%s1 + $0xbc8] sm:$0xff]
  %v411 = vld [vmem:[%s1 + $0xbd0] sm:$0xff]
  %v412 = vld [vmem:[%s1 + $0xbd8] sm:$0xff]
  %v413 = vld [vmem:[%s1 + $0xbe0] sm:$0xff]
  %v414 = vld [vmem:[%s1 + $0xbe8] sm:$0xff]
  %v415 = vld [vmem:[%s1 + $0xbf0] sm:$0xff]
  %v416 = vld [vmem:[%s1 + $0xbf8] sm:$0xff]
  %v417 = vld [vmem:[%s1 + $0xc00] sm:$0xff]
  %v418 = vld [vmem:[%s1 + $0xc08] sm:$0xff]
  %v419 = vld [vmem:[%s1 + $0xc10] sm:$0xff]
  %v420 = vld [vmem:[%s1 + $0xc18] sm:$0xff]
  %v421 = vld [vmem:[%s1 + $0xc20] sm:$0xff]
  %v422 = vld [vmem:[%s1 + $0xc28] sm:$0xff]
  %v423 = vld [vmem:[%s1 + $0xc30] sm:$0xff]
  %v424 = vld [vmem:[%s1 + $0xc38] sm:$0xff]
  %v425 = vld [vmem:[%s1 + $0xc40] sm:$0xff]
  %v426 = vld [vmem:[%s1 + $0xc48] sm:$0xff]
  %v427 = vld [vmem:[%s1 + $0xc50] sm:$0xff]
  %v428 = vld [vmem:[%s1 + $0xc58] sm:$0xff]
  %v429 = vld [vmem:[%s1 + $0xc60] sm:$0xff]
  %v430 = vld [vmem:[%s1 + $0xc68] sm:$0xff]
  %v431 = vld [vmem:[%s1 + $0xc70] sm:$0xff]
  %v432 = vld [vmem:[%s1 + $0xc78] sm:$0xff]
  %v433 = vld [vmem:[%s1 + $0xc80] sm:$0xff]
  %v434 = vld [vmem:[%s1 + $0xc88] sm:$0xff]
  %v435 = vld [vmem:[%s1 + $0xc90] sm:$0xff]
  %v436 = vld [vmem:[%s1 + $0xc98] sm:$0xff]
  %v437 = vld [vmem:[%s1 + $0xca0] sm:$0xff]
  %v438 = vld [vmem:[%s1 + $0xca8] sm:$0xff]
  %v439 = vld [vmem:[%s1 + $0xcb0] sm:$0xff]
  %v440 = vld [vmem:[%s1 + $0xcb8] sm:$0xff]
  %v441 = vld [vmem:[%s1 + $0xcc0] sm:$0xff]
  %v442 = vld [vmem:[%s1 + $0xcc8] sm:$0xff]
  %v443 = vld [vmem:[%s1 + $0xcd0] sm:$0xff]
  %v444 = vld [vmem:[%s1 + $0xcd8] sm:$0xff]
  %v445 = vld [vmem:[%s1 + $0xce0] sm:$0xff]
  %v446 = vld [vmem:[%s1 + $0xce8] sm:$0xff]
  %v447 = vld [vmem:[%s1 + $0xcf0] sm:$0xff]
  %v448 = vld [vmem:[%s1 + $0xcf8] sm:$0xff]
  %v449 = vld [vmem:[%s1 + $0xd00] sm:$0xff]
  %v450 = vld [vmem:[%s1 + $0xd08] sm:$0xff]
  %v451 = vld [vmem:[%s1 + $0xd10] sm:$0xff]
  %v452 = vld [vmem:[%s1 + $0xd18] sm:$0xff]
  %v453 = vld [vmem:[%s1 + $0xd20] sm:$0xff]
  %v454 = vld [vmem:[%s1 + $0xd28] sm:$0xff]
  %v455 = vld [vmem:[%s1 + $0xd30] sm:$0xff]
  %v456 = vld [vmem:[%s1 + $0xd38] sm:$0xff]
  %v457 = vld [vmem:[%s1 + $0xd40] sm:$0xff]
  %v458 = vld [vmem:[%s1 + $0xd48] sm:$0xff]
  %v459 = vld [vmem:[%s1 + $0xd50] sm:$0xff]
  %v460 = vld [vmem:[%s1 + $0xd58] sm:$0xff]
  %v461 = vld [vmem:[%s1 + $0xd60] sm:$0xff]
  %v462 = vld [vmem:[%s1 + $0xd68] sm:$0xff]
  %v463 = vld [vmem:[%s1 + $0xd70] sm:$0xff]
  %v464 = vld [vmem:[%s1 + $0xd78] sm:$0xff]
  %v465 = vld [vmem:[%s1 + $0xd80] sm:$0xff]
  %v466 = vld [vmem:[%s1 + $0xd88] sm:$0xff]
  %v467 = vld [vmem:[%s1 + $0xd90] sm:$0xff]
  %v468 = vld [vmem:[%s1 + $0xd98] sm:$0xff]
  %v469 = vld [vmem:[%s1 + $0xda0] sm:$0xff]
  %v470 = vld [vmem:[%s1 + $0xda8] sm:$0xff]
  %v471 = vld [vmem:[%s1 + $0xdb0] sm:$0xff]
  %v472 = vld [vmem:[%s1 + $0xdb8] sm:$0xff]
  %v473 = vld [vmem:[%s1 + $0xdc0] sm:$0xff]
  %v474 = vld [vmem:[%s1 + $0xdc8] sm:$0xff]
  %v475 = vld [vmem:[%s1 + $0xdd0] sm:$0xff]
  %v476 = vld [vmem:[%s1 + $0xdd8] sm:$0xff]
  %v477 = vld [vmem:[%s1 + $0xde0] sm:$0xff]
  %v478 = vld [vmem:[%s1 + $0xde8] sm:$0xff]
  %v479 = vld [vmem:[%s1 + $0xdf0] sm:$0xff]
  %v480 = vld [vmem:[%s1 + $0xdf8] sm:$0xff]
  %v481 = vld [vmem:[%s1 + $0xe00] sm:$0xff]
  %v482 = vld [vmem:[%s1 + $0xe08] sm:$0xff]
  %v483 = vld [vmem:[%s1 + $0xe10] sm:$0xff]
  %v484 = vld [vmem:[%s1 + $0xe18] sm:$0xff]
  %v485 = vld [vmem:[%s1 + $0xe20] sm:$0xff]
  %v486 = vld [vmem:[%s1 + $0xe28] sm:$0xff]
  %v487 = vld [vmem:[%s1 + $0xe30] sm:$0xff]
  %v488 = vld [vmem:[%s1 + $0xe38] sm:$0xff]
  %v489 = vld [vmem:[%s1 + $0xe40] sm:$0xff]
  %v490 = vld [vmem:[%s1 + $0xe48] sm:$0xff]
  %v491 = vld [vmem:[%s1 + $0xe50] sm:$0xff]
  %v492 = vld [vmem:[%s1 + $0xe58] sm:$0xff]
  %v493 = vld [vmem:[%s1 + $0xe60] sm:$0xff]
  %v494 = vld [vmem:[%s1 + $0xe68] sm:$0xff]
  %v495 = vld [vmem:[%s1 + $0xe70] sm:$0xff]
  %v496 = vld [vmem:[%s1 + $0xe78] sm:$0xff]
  %v497 = vld [vmem:[%s1 + $0xe80] sm:$0xff]
  %v498 = vld [vmem:[%s1 + $0xe88] sm:$0xff]
  %v499 = vld [vmem:[%s1 + $0xe90] sm:$0xff]
  %v500 = vld [vmem:[%s1 + $0xe98] sm:$0xff]
  %v501 = vld [vmem:[%s1 + $0xea0] sm:$0xff]
  %v502 = vld [vmem:[%s1 + $0xea8] sm:$0xff]
  %v503 = vld [vmem:[%s1 + $0xeb0] sm:$0xff]
  %v504 = vld [vmem:[%s1 + $0xeb8] sm:$0xff]
  %v505 = vld [vmem:[%s1 + $0xec0] sm:$0xff]
  %v506 = vld [vmem:[%s1 + $0xec8] sm:$0xff]
  %v507 = vld [vmem:[%s1 + $0xed0] sm:$0xff]
  %v508 = vld [vmem:[%s1 + $0xed8] sm:$0xff]
  %v509 = vld [vmem:[%s1 + $0xee0] sm:$0xff]
  %v510 = vld [vmem:[%s1 + $0xee8] sm:$0xff]
  %v511 = vld [vmem:[%s1 + $0xef0] sm:$0xff]
  %v512 = vld [vmem:[%s1 + $0xef8] sm:$0xff]
  %v513 = vld [vmem:[%s1 + $0xf00] sm:$0xff]
  %v514 = vld [vmem:[%s1 + $0xf08] sm:$0xff]
  %v515 = vld [vmem:[%s1 + $0xf10] sm:$0xff]
  %v516 = vld [vmem:[%s1 + $0xf18] sm:$0xff]
  %v517 = vld [vmem:[%s1 + $0xf20] sm:$0xff]
  %v518 = vld [vmem:[%s1 + $0xf28] sm:$0xff]
  %v519 = vld [vmem:[%s1 + $0xf30] sm:$0xff]
  %v520 = vld [vmem:[%s1 + $0xf38] sm:$0xff]
  %v521 = vld [vmem:[%s1 + $0xf40] sm:$0xff]
  %v522 = vld [vmem:[%s1 + $0xf48] sm:$0xff]
  %v523 = vld [vmem:[%s1 + $0xf50] sm:$0xff]
  %v524 = vld [vmem:[%s1 + $0xf58] sm:$0xff]
  %v525 = vld [vmem:[%s1 + $0xf60] sm:$0xff]
  %v526 = vld [vmem:[%s1 + $0xf68] sm:$0xff]
  %v527 = vld [vmem:[%s1 + $0xf70] sm:$0xff]
  %v528 = vld [vmem:[%s1 + $0xf78] sm:$0xff]
  %v529 = vld [vmem:[%s1 + $0xf80] sm:$0xff]
  %v530 = vld [vmem:[%s1 + $0xf88] sm:$0xff]
  %v531 = vld [vmem:[%s1 + $0xf90] sm:$0xff]
  %v532 = vld [vmem:[%s1 + $0xf98] sm:$0xff]
  %v533 = vld [vmem:[%s1 + $0xfa0] sm:$0xff]
  %v534 = vld [vmem:[%s1 + $0xfa8] sm:$0xff]
  %v535 = vld [vmem:[%s1 + $0xfb0] sm:$0xff]
  %v536 = vld [vmem:[%s1 + $0xfb8] sm:$0xff]
  %v537 = vld [vmem:[%s1 + $0xfc0] sm:$0xff]
  %v538 = vld [vmem:[%s1 + $0xfc8] sm:$0xff]
  %v539 = vld [vmem:[%s1 + $0xfd0] sm:$0xff]
  %v540 = vld [vmem:[%s1 + $0xfd8] sm:$0xff]
  %v541 = vld [vmem:[%s1 + $0xfe0] sm:$0xff]
  %v542 = vld [vmem:[%s1 + $0xfe8] sm:$0xff]
  %v543 = vld [vmem:[%s1 + $0xff0] sm:$0xff]
  %v544 = vld [vmem:[%s1 + $0xff8] sm:$0xff]
  %545 = vmatprep.subr.mxu0 %v94
  %546 = vmatpush1.msra.mxu0 %v93
  %547 = vmatprep.subr.mxu0 %v90
  %548 = vmatpush1.msra.mxu0 %v89
  %549 = vmatprep.subr.mxu0 %v86
  %550 = vmatpush1.msra.mxu0 %v85
  %551 = vmatprep.subr.mxu0 %v82
  %552 = vmatpush1.msra.mxu0 %v81
  %553 = vmatprep.subr.mxu0 %v78
  %554 = vmatpush1.msra.mxu0 %v77
  %555 = vmatprep.subr.mxu0 %v74
  %556 = vmatpush1.msra.mxu0 %v73
  %557 = vmatprep.subr.mxu0 %v70
  %558 = vmatpush1.msra.mxu0 %v69
  %559 = vmatprep.subr.mxu0 %v66
  %560 = vmatpush1.msra.mxu0 %v65
  %561 = vmatprep.subr.mxu0 %v62
  %562 = vmatpush1.msra.mxu0 %v61
  %563 = vmatprep.subr.mxu0 %v58
  %564 = vmatpush1.msra.mxu0 %v57
  %565 = vmatprep.subr.mxu0 %v54
  %566 = vmatpush1.msra.mxu0 %v53
  %567 = vmatprep.subr.mxu0 %v50
  %568 = vmatpush1.msra.mxu0 %v49
  %569 = vmatprep.subr.mxu0 %v46
  %570 = vmatpush1.msra.mxu0 %v45
  %571 = vmatprep.subr.mxu0 %v42
  %572 = vmatpush1.msra.mxu0 %v41
  %573 = vmatprep.subr.mxu0 %v38
  %574 = vmatpush1.msra.mxu0 %v37
  %575 = vmatprep.subr.mxu0 %v34
  %576 = vmatpush1.msra.mxu0 %v33
  %577 = vmatprep.subr.mxu0 %v158
  %578 = vmatpush2.msra.mxu0 %v157
  %579 = vmatprep.subr.mxu0 %v154
  %580 = vmatpush2.msra.mxu0 %v153
  %581 = vmatprep.subr.mxu0 %v150
  %582 = vmatpush2.msra.mxu0 %v149
  %583 = vmatprep.subr.mxu0 %v146
  %584 = vmatpush2.msra.mxu0 %v145
  %585 = vmatprep.subr.mxu0 %v142
  %586 = vmatpush2.msra.mxu0 %v141
  %587 = vmatprep.subr.mxu0 %v138
  %588 = vmatpush2.msra.mxu0 %v137
  %589 = vmatprep.subr.mxu0 %v134
  %590 = vmatpush2.msra.mxu0 %v133
  %591 = vmatprep.subr.mxu0 %v130
  %592 = vmatpush2.msra.mxu0 %v129
  %593 = vmatprep.subr.mxu0 %v126
  %594 = vmatpush2.msra.mxu0 %v125
  %595 = vmatprep.subr.mxu0 %v122
  %596 = vmatpush2.msra.mxu0 %v121
  %597 = vmatprep.subr.mxu0 %v118
  %598 = vmatpush2.msra.mxu0 %v117
  %599 = vmatprep.subr.mxu0 %v114
  %600 = vmatpush2.msra.mxu0 %v113
  %601 = vmatprep.subr.mxu0 %v110
  %602 = vmatpush2.msra.mxu0 %v109
  %603 = vmatprep.subr.mxu0 %v106
  %604 = vmatpush2.msra.mxu0 %v105
  %605 = vmatprep.subr.mxu0 %v102
  %606 = vmatpush2.msra.mxu0 %v101
  %607 = vmatprep.subr.mxu0 %v98
  %608 = vmatpush2.msra.mxu0 %v97
  %609 = vmatprep.mubr.f32.mxu0 %v26
  %610 = vmatmul.mubr.f32.gmra.mxu0 %v25
  %v611 = vpop.f32.mrf.mxu0
  %v612 = vadd.f32 0.0, %v611
  %v613 = vpop.f32.mrf.mxu0
  %v614 = vadd.f32 0.0, %v613
  %615 = vdwg.mxu0
  %616 = vmatprep.subr.mxu0 %v222
  %617 = vmatpush1.msra.mxu0 %v221
  %618 = vmatprep.subr.mxu0 %v218
  %619 = vmatpush1.msra.mxu0 %v217
  %620 = vmatprep.subr.mxu0 %v214
  %621 = vmatpush1.msra.mxu0 %v213
  %622 = vmatprep.subr.mxu0 %v210
  %623 = vmatpush1.msra.mxu0 %v209
  %624 = vmatprep.subr.mxu0 %v206
  %625 = vmatpush1.msra.mxu0 %v205
  %626 = vmatprep.subr.mxu0 %v202
  %627 = vmatpush1.msra.mxu0 %v201
  %628 = vmatprep.subr.mxu0 %v198
  %629 = vmatpush1.msra.mxu0 %v197
  %630 = vmatprep.subr.mxu0 %v194
  %631 = vmatpush1.msra.mxu0 %v193
  %632 = vmatprep.subr.mxu0 %v190
  %633 = vmatpush1.msra.mxu0 %v189
  %634 = vmatprep.subr.mxu0 %v186
  %635 = vmatpush1.msra.mxu0 %v185
  %636 = vmatprep.subr.mxu0 %v182
  %637 = vmatpush1.msra.mxu0 %v181
  %638 = vmatprep.subr.mxu0 %v178
  %639 = vmatpush1.msra.mxu0 %v177
  %640 = vmatprep.subr.mxu0 %v174
  %641 = vmatpush1.msra.mxu0 %v173
  %642 = vmatprep.subr.mxu0 %v170
  %643 = vmatpush1.msra.mxu0 %v169
  %644 = vmatprep.subr.mxu0 %v166
  %645 = vmatpush1.msra.mxu0 %v165
  %646 = vmatprep.subr.mxu0 %v162
  %647 = vmatpush1.msra.mxu0 %v161
  %648 = vmatprep.subr.mxu0 %v286
  %649 = vmatpush2.msra.mxu0 %v285
  %650 = vmatprep.subr.mxu0 %v282
  %651 = vmatpush2.msra.mxu0 %v281
  %652 = vmatprep.subr.mxu0 %v278
  %653 = vmatpush2.msra.mxu0 %v277
  %654 = vmatprep.subr.mxu0 %v274
  %655 = vmatpush2.msra.mxu0 %v273
  %656 = vmatprep.subr.mxu0 %v270
  %657 = vmatpush2.msra.mxu0 %v269
  %658 = vmatprep.subr.mxu0 %v266
  %659 = vmatpush2.msra.mxu0 %v265
  %660 = vmatprep.subr.mxu0 %v262
  %661 = vmatpush2.msra.mxu0 %v261
  %662 = vmatprep.subr.mxu0 %v258
  %663 = vmatpush2.msra.mxu0 %v257
  %664 = vmatprep.subr.mxu0 %v254
  %665 = vmatpush2.msra.mxu0 %v253
  %666 = vmatprep.subr.mxu0 %v250
  %667 = vmatpush2.msra.mxu0 %v249
  %668 = vmatprep.subr.mxu0 %v246
  %669 = vmatpush2.msra.mxu0 %v245
  %670 = vmatprep.subr.mxu0 %v242
  %671 = vmatpush2.msra.mxu0 %v241
  %672 = vmatprep.subr.mxu0 %v238
  %673 = vmatpush2.msra.mxu0 %v237
  %674 = vmatprep.subr.mxu0 %v234
  %675 = vmatpush2.msra.mxu0 %v233
  %676 = vmatprep.subr.mxu0 %v230
  %677 = vmatpush2.msra.mxu0 %v229
  %678 = vmatprep.subr.mxu0 %v226
  %679 = vmatpush2.msra.mxu0 %v225
  %680 = vmatprep.mubr.f32.mxu0 %v28
  %681 = vmatmul.mubr.f32.gmra.mxu0 %v27
  %v682 = vpop.f32.mrf.mxu0
  %v683 = vadd.f32 %v612, %v682
  %v684 = vpop.f32.mrf.mxu0
  %v685 = vadd.f32 %v614, %v684
  %686 = vdwg.mxu0
  %687 = vmatprep.subr.mxu0 %v350
  %688 = vmatpush1.msra.mxu0 %v349
  %689 = vmatprep.subr.mxu0 %v346
  %690 = vmatpush1.msra.mxu0 %v345
  %691 = vmatprep.subr.mxu0 %v342
  %692 = vmatpush1.msra.mxu0 %v341
  %693 = vmatprep.subr.mxu0 %v338
  %694 = vmatpush1.msra.mxu0 %v337
  %695 = vmatprep.subr.mxu0 %v334
  %696 = vmatpush1.msra.mxu0 %v333
  %697 = vmatprep.subr.mxu0 %v330
  %698 = vmatpush1.msra.mxu0 %v329
  %699 = vmatprep.subr.mxu0 %v326
  %700 = vmatpush1.msra.mxu0 %v325
  %701 = vmatprep.subr.mxu0 %v322
  %702 = vmatpush1.msra.mxu0 %v321
  %703 = vmatprep.subr.mxu0 %v318
  %704 = vmatpush1.msra.mxu0 %v317
  %705 = vmatprep.subr.mxu0 %v314
  %706 = vmatpush1.msra.mxu0 %v313
  %707 = vmatprep.subr.mxu0 %v310
  %708 = vmatpush1.msra.mxu0 %v309
  %709 = vmatprep.subr.mxu0 %v306
  %710 = vmatpush1.msra.mxu0 %v305
  %711 = vmatprep.subr.mxu0 %v302
  %712 = vmatpush1.msra.mxu0 %v301
  %713 = vmatprep.subr.mxu0 %v298
  %714 = vmatpush1.msra.mxu0 %v297
  %715 = vmatprep.subr.mxu0 %v294
  %716 = vmatpush1.msra.mxu0 %v293
  %717 = vmatprep.subr.mxu0 %v290
  %718 = vmatpush1.msra.mxu0 %v289
  %719 = vmatprep.subr.mxu0 %v414
  %720 = vmatpush2.msra.mxu0 %v413
  %721 = vmatprep.subr.mxu0 %v410
  %722 = vmatpush2.msra.mxu0 %v409
  %723 = vmatprep.subr.mxu0 %v406
  %724 = vmatpush2.msra.mxu0 %v405
  %725 = vmatprep.subr.mxu0 %v402
  %726 = vmatpush2.msra.mxu0 %v401
  %727 = vmatprep.subr.mxu0 %v398
  %728 = vmatpush2.msra.mxu0 %v397
  %729 = vmatprep.subr.mxu0 %v394
  %730 = vmatpush2.msra.mxu0 %v393
  %731 = vmatprep.subr.mxu0 %v390
  %732 = vmatpush2.msra.mxu0 %v389
  %733 = vmatprep.subr.mxu0 %v386
  %734 = vmatpush2.msra.mxu0 %v385
  %735 = vmatprep.subr.mxu0 %v382
  %736 = vmatpush2.msra.mxu0 %v381
  %737 = vmatprep.subr.mxu0 %v378
  %738 = vmatpush2.msra.mxu0 %v377
  %739 = vmatprep.subr.mxu0 %v374
  %740 = vmatpush2.msra.mxu0 %v373
  %741 = vmatprep.subr.mxu0 %v370
  %742 = vmatpush2.msra.mxu0 %v369
  %743 = vmatprep.subr.mxu0 %v366
  %744 = vmatpush2.msra.mxu0 %v365
  %745 = vmatprep.subr.mxu0 %v362
  %746 = vmatpush2.msra.mxu0 %v361
  %747 = vmatprep.subr.mxu0 %v358
  %748 = vmatpush2.msra.mxu0 %v357
  %749 = vmatprep.subr.mxu0 %v354
  %750 = vmatpush2.msra.mxu0 %v353
  %751 = vmatprep.mubr.f32.mxu0 %v30
  %752 = vmatmul.mubr.f32.gmra.mxu0 %v29
  %v753 = vpop.f32.mrf.mxu0
  %v754 = vadd.f32 %v683, %v753
  %v755 = vpop.f32.mrf.mxu0
  %v756 = vadd.f32 %v685, %v755
  %757 = vdwg.mxu0
  %758 = vmatprep.subr.mxu0 %v478
  %759 = vmatpush1.msra.mxu0 %v477
  %760 = vmatprep.subr.mxu0 %v474
  %761 = vmatpush1.msra.mxu0 %v473
  %762 = vmatprep.subr.mxu0 %v470
  %763 = vmatpush1.msra.mxu0 %v469
  %764 = vmatprep.subr.mxu0 %v466
  %765 = vmatpush1.msra.mxu0 %v465
  %766 = vmatprep.subr.mxu0 %v462
  %767 = vmatpush1.msra.mxu0 %v461
  %768 = vmatprep.subr.mxu0 %v458
  %769 = vmatpush1.msra.mxu0 %v457
  %770 = vmatprep.subr.mxu0 %v454
  %771 = vmatpush1.msra.mxu0 %v453
  %772 = vmatprep.subr.mxu0 %v450
  %773 = vmatpush1.msra.mxu0 %v449
  %774 = vmatprep.subr.mxu0 %v446
  %775 = vmatpush1.msra.mxu0 %v445
  %776 = vmatprep.subr.mxu0 %v442
  %777 = vmatpush1.msra.mxu0 %v441
  %778 = vmatprep.subr.mxu0 %v438
  %779 = vmatpush1.msra.mxu0 %v437
  %780 = vmatprep.subr.mxu0 %v434
  %781 = vmatpush1.msra.mxu0 %v433
  %782 = vmatprep.subr.mxu0 %v430
  %783 = vmatpush1.msra.mxu0 %v429
  %784 = vmatprep.subr.mxu0 %v426
  %785 = vmatpush1.msra.mxu0 %v425
  %786 = vmatprep.subr.mxu0 %v422
  %787 = vmatpush1.msra.mxu0 %v421
  %788 = vmatprep.subr.mxu0 %v418
  %789 = vmatpush1.msra.mxu0 %v417
  %790 = vmatprep.subr.mxu0 %v542
  %791 = vmatpush2.msra.mxu0 %v541
  %792 = vmatprep.subr.mxu0 %v538
  %793 = vmatpush2.msra.mxu0 %v537
  %794 = vmatprep.subr.mxu0 %v534
  %795 = vmatpush2.msra.mxu0 %v533
  %796 = vmatprep.subr.mxu0 %v530
  %797 = vmatpush2.msra.mxu0 %v529
  %798 = vmatprep.subr.mxu0 %v526
  %799 = vmatpush2.msra.mxu0 %v525
  %800 = vmatprep.subr.mxu0 %v522
  %801 = vmatpush2.msra.mxu0 %v521
  %802 = vmatprep.subr.mxu0 %v518
  %803 = vmatpush2.msra.mxu0 %v517
  %804 = vmatprep.subr.mxu0 %v514
  %805 = vmatpush2.msra.mxu0 %v513
  %806 = vmatprep.subr.mxu0 %v510
  %807 = vmatpush2.msra.mxu0 %v509
  %808 = vmatprep.subr.mxu0 %v506
  %809 = vmatpush2.msra.mxu0 %v505
  %810 = vmatprep.subr.mxu0 %v502
  %811 = vmatpush2.msra.mxu0 %v501
  %812 = vmatprep.subr.mxu0 %v498
  %813 = vmatpush2.msra.mxu0 %v497
  %814 = vmatprep.subr.mxu0 %v494
  %815 = vmatpush2.msra.mxu0 %v493
  %816 = vmatprep.subr.mxu0 %v490
  %817 = vmatpush2.msra.mxu0 %v489
  %818 = vmatprep.subr.mxu0 %v486
  %819 = vmatpush2.msra.mxu0 %v485
  %820 = vmatprep.subr.mxu0 %v482
  %821 = vmatpush2.msra.mxu0 %v481
  %822 = vmatprep.mubr.f32.mxu0 %v32
  %823 = vmatmul.mubr.f32.gmra.mxu0 %v31
  %v824 = vpop.f32.mrf.mxu0
  %v825 = vadd.f32 %v754, %v824
  %v826 = vpop.f32.mrf.mxu0
  %v827 = vadd.f32 %v756, %v826
  %828 = vdwg.mxu0
  %829 = vmatprep.subr.mxu0 %v96
  %830 = vmatpush1.msra.mxu0 %v95
  %831 = vmatprep.subr.mxu0 %v92
  %832 = vmatpush1.msra.mxu0 %v91
  %833 = vmatprep.subr.mxu0 %v88
  %834 = vmatpush1.msra.mxu0 %v87
  %835 = vmatprep.subr.mxu0 %v84
  %836 = vmatpush1.msra.mxu0 %v83
  %837 = vmatprep.subr.mxu0 %v80
  %838 = vmatpush1.msra.mxu0 %v79
  %839 = vmatprep.subr.mxu0 %v76
  %840 = vmatpush1.msra.mxu0 %v75
  %841 = vmatprep.subr.mxu0 %v72
  %842 = vmatpush1.msra.mxu0 %v71
  %843 = vmatprep.subr.mxu0 %v68
  %844 = vmatpush1.msra.mxu0 %v67
  %845 = vmatprep.subr.mxu0 %v64
  %846 = vmatpush1.msra.mxu0 %v63
  %847 = vmatprep.subr.mxu0 %v60
  %848 = vmatpush1.msra.mxu0 %v59
  %849 = vmatprep.subr.mxu0 %v56
  %850 = vmatpush1.msra.mxu0 %v55
  %851 = vmatprep.subr.mxu0 %v52
  %852 = vmatpush1.msra.mxu0 %v51
  %853 = vmatprep.subr.mxu0 %v48
  %854 = vmatpush1.msra.mxu0 %v47
  %855 = vmatprep.subr.mxu0 %v44
  %856 = vmatpush1.msra.mxu0 %v43
  %857 = vmatprep.subr.mxu0 %v40
  %858 = vmatpush1.msra.mxu0 %v39
  %859 = vmatprep.subr.mxu0 %v36
  %860 = vmatpush1.msra.mxu0 %v35
  %861 = vmatprep.subr.mxu0 %v160
  %862 = vmatpush2.msra.mxu0 %v159
  %863 = vmatprep.subr.mxu0 %v156
  %864 = vmatpush2.msra.mxu0 %v155
  %865 = vmatprep.subr.mxu0 %v152
  %866 = vmatpush2.msra.mxu0 %v151
  %867 = vmatprep.subr.mxu0 %v148
  %868 = vmatpush2.msra.mxu0 %v147
  %869 = vmatprep.subr.mxu0 %v144
  %870 = vmatpush2.msra.mxu0 %v143
  %871 = vmatprep.subr.mxu0 %v140
  %872 = vmatpush2.msra.mxu0 %v139
  %873 = vmatprep.subr.mxu0 %v136
  %874 = vmatpush2.msra.mxu0 %v135
  %875 = vmatprep.subr.mxu0 %v132
  %876 = vmatpush2.msra.mxu0 %v131
  %877 = vmatprep.subr.mxu0 %v128
  %878 = vmatpush2.msra.mxu0 %v127
  %879 = vmatprep.subr.mxu0 %v124
  %880 = vmatpush2.msra.mxu0 %v123
  %881 = vmatprep.subr.mxu0 %v120
  %882 = vmatpush2.msra.mxu0 %v119
  %883 = vmatprep.subr.mxu0 %v116
  %884 = vmatpush2.msra.mxu0 %v115
  %885 = vmatprep.subr.mxu0 %v112
  %886 = vmatpush2.msra.mxu0 %v111
  %887 = vmatprep.subr.mxu0 %v108
  %888 = vmatpush2.msra.mxu0 %v107
  %889 = vmatprep.subr.mxu0 %v104
  %890 = vmatpush2.msra.mxu0 %v103
  %891 = vmatprep.subr.mxu0 %v100
  %892 = vmatpush2.msra.mxu0 %v99
  %893 = vmatprep.mubr.f32.mxu0 %v26
  %894 = vmatmul.mubr.f32.gmra.mxu0 %v25
  %v895 = vpop.f32.mrf.mxu0
  %v896 = vadd.f32 0.0, %v895
  %v897 = vpop.f32.mrf.mxu0
  %v898 = vadd.f32 0.0, %v897
  %899 = vdwg.mxu0
  %900 = vmatprep.subr.mxu0 %v224
  %901 = vmatpush1.msra.mxu0 %v223
  %902 = vmatprep.subr.mxu0 %v220
  %903 = vmatpush1.msra.mxu0 %v219
  %904 = vmatprep.subr.mxu0 %v216
  %905 = vmatpush1.msra.mxu0 %v215
  %906 = vmatprep.subr.mxu0 %v212
  %907 = vmatpush1.msra.mxu0 %v211
  %908 = vmatprep.subr.mxu0 %v208
  %909 = vmatpush1.msra.mxu0 %v207
  %910 = vmatprep.subr.mxu0 %v204
  %911 = vmatpush1.msra.mxu0 %v203
  %912 = vmatprep.subr.mxu0 %v200
  %913 = vmatpush1.msra.mxu0 %v199
  %914 = vmatprep.subr.mxu0 %v196
  %915 = vmatpush1.msra.mxu0 %v195
  %916 = vmatprep.subr.mxu0 %v192
  %917 = vmatpush1.msra.mxu0 %v191
  %918 = vmatprep.subr.mxu0 %v188
  %919 = vmatpush1.msra.mxu0 %v187
  %920 = vmatprep.subr.mxu0 %v184
  %921 = vmatpush1.msra.mxu0 %v183
  %922 = vmatprep.subr.mxu0 %v180
  %923 = vmatpush1.msra.mxu0 %v179
  %924 = vmatprep.subr.mxu0 %v176
  %925 = vmatpush1.msra.mxu0 %v175
  %926 = vmatprep.subr.mxu0 %v172
  %927 = vmatpush1.msra.mxu0 %v171
  %928 = vmatprep.subr.mxu0 %v168
  %929 = vmatpush1.msra.mxu0 %v167
  %930 = vmatprep.subr.mxu0 %v164
  %931 = vmatpush1.msra.mxu0 %v163
  %932 = vmatprep.subr.mxu0 %v288
  %933 = vmatpush2.msra.mxu0 %v287
  %934 = vmatprep.subr.mxu0 %v284
  %935 = vmatpush2.msra.mxu0 %v283
  %936 = vmatprep.subr.mxu0 %v280
  %937 = vmatpush2.msra.mxu0 %v279
  %938 = vmatprep.subr.mxu0 %v276
  %939 = vmatpush2.msra.mxu0 %v275
  %940 = vmatprep.subr.mxu0 %v272
  %941 = vmatpush2.msra.mxu0 %v271
  %942 = vmatprep.subr.mxu0 %v268
  %943 = vmatpush2.msra.mxu0 %v267
  %944 = vmatprep.subr.mxu0 %v264
  %945 = vmatpush2.msra.mxu0 %v263
  %946 = vmatprep.subr.mxu0 %v260
  %947 = vmatpush2.msra.mxu0 %v259
  %948 = vmatprep.subr.mxu0 %v256
  %949 = vmatpush2.msra.mxu0 %v255
  %950 = vmatprep.subr.mxu0 %v252
  %951 = vmatpush2.msra.mxu0 %v251
  %952 = vmatprep.subr.mxu0 %v248
  %953 = vmatpush2.msra.mxu0 %v247
  %954 = vmatprep.subr.mxu0 %v244
  %955 = vmatpush2.msra.mxu0 %v243
  %956 = vmatprep.subr.mxu0 %v240
  %957 = vmatpush2.msra.mxu0 %v239
  %958 = vmatprep.subr.mxu0 %v236
  %959 = vmatpush2.msra.mxu0 %v235
  %960 = vmatprep.subr.mxu0 %v232
  %961 = vmatpush2.msra.mxu0 %v231
  %962 = vmatprep.subr.mxu0 %v228
  %963 = vmatpush2.msra.mxu0 %v227
  %964 = vmatprep.mubr.f32.mxu0 %v28
  %965 = vmatmul.mubr.f32.gmra.mxu0 %v27
  %v966 = vpop.f32.mrf.mxu0
  %v967 = vadd.f32 %v896, %v966
  %v968 = vpop.f32.mrf.mxu0
  %v969 = vadd.f32 %v898, %v968
  %970 = vdwg.mxu0
  %971 = vmatprep.subr.mxu0 %v352
  %972 = vmatpush1.msra.mxu0 %v351
  %973 = vmatprep.subr.mxu0 %v348
  %974 = vmatpush1.msra.mxu0 %v347
  %975 = vmatprep.subr.mxu0 %v344
  %976 = vmatpush1.msra.mxu0 %v343
  %977 = vmatprep.subr.mxu0 %v340
  %978 = vmatpush1.msra.mxu0 %v339
  %979 = vmatprep.subr.mxu0 %v336
  %980 = vmatpush1.msra.mxu0 %v335
  %981 = vmatprep.subr.mxu0 %v332
  %982 = vmatpush1.msra.mxu0 %v331
  %983 = vmatprep.subr.mxu0 %v328
  %984 = vmatpush1.msra.mxu0 %v327
  %985 = vmatprep.subr.mxu0 %v324
  %986 = vmatpush1.msra.mxu0 %v323
  %987 = vmatprep.subr.mxu0 %v320
  %988 = vmatpush1.msra.mxu0 %v319
  %989 = vmatprep.subr.mxu0 %v316
  %990 = vmatpush1.msra.mxu0 %v315
  %991 = vmatprep.subr.mxu0 %v312
  %992 = vmatpush1.msra.mxu0 %v311
  %993 = vmatprep.subr.mxu0 %v308
  %994 = vmatpush1.msra.mxu0 %v307
  %995 = vmatprep.subr.mxu0 %v304
  %996 = vmatpush1.msra.mxu0 %v303
  %997 = vmatprep.subr.mxu0 %v300
  %998 = vmatpush1.msra.mxu0 %v299
  %999 = vmatprep.subr.mxu0 %v296
  %1000 = vmatpush1.msra.mxu0 %v295
  %1001 = vmatprep.subr.mxu0 %v292
  %1002 = vmatpush1.msra.mxu0 %v291
  %1003 = vmatprep.subr.mxu0 %v416
  %1004 = vmatpush2.msra.mxu0 %v415
  %1005 = vmatprep.subr.mxu0 %v412
  %1006 = vmatpush2.msra.mxu0 %v411
  %1007 = vmatprep.subr.mxu0 %v408
  %1008 = vmatpush2.msra.mxu0 %v407
  %1009 = vmatprep.subr.mxu0 %v404
  %1010 = vmatpush2.msra.mxu0 %v403
  %1011 = vmatprep.subr.mxu0 %v400
  %1012 = vmatpush2.msra.mxu0 %v399
  %1013 = vmatprep.subr.mxu0 %v396
  %1014 = vmatpush2.msra.mxu0 %v395
  %1015 = vmatprep.subr.mxu0 %v392
  %1016 = vmatpush2.msra.mxu0 %v391
  %1017 = vmatprep.subr.mxu0 %v388
  %1018 = vmatpush2.msra.mxu0 %v387
  %1019 = vmatprep.subr.mxu0 %v384
  %1020 = vmatpush2.msra.mxu0 %v383
  %1021 = vmatprep.subr.mxu0 %v380
  %1022 = vmatpush2.msra.mxu0 %v379
  %1023 = vmatprep.subr.mxu0 %v376
  %1024 = vmatpush2.msra.mxu0 %v375
  %1025 = vmatprep.subr.mxu0 %v372
  %1026 = vmatpush2.msra.mxu0 %v371
  %1027 = vmatprep.subr.mxu0 %v368
  %1028 = vmatpush2.msra.mxu0 %v367
  %1029 = vmatprep.subr.mxu0 %v364
  %1030 = vmatpush2.msra.mxu0 %v363
  %1031 = vmatprep.subr.mxu0 %v360
  %1032 = vmatpush2.msra.mxu0 %v359
  %1033 = vmatprep.subr.mxu0 %v356
  %1034 = vmatpush2.msra.mxu0 %v355
  %1035 = vmatprep.mubr.f32.mxu0 %v30
  %1036 = vmatmul.mubr.f32.gmra.mxu0 %v29
  %v1037 = vpop.f32.mrf.mxu0
  %v1038 = vadd.f32 %v967, %v1037
  %v1039 = vpop.f32.mrf.mxu0
  %v1040 = vadd.f32 %v969, %v1039
  %1041 = vdwg.mxu0
  %1042 = vmatprep.subr.mxu0 %v480
  %1043 = vmatpush1.msra.mxu0 %v479
  %1044 = vmatprep.subr.mxu0 %v476
  %1045 = vmatpush1.msra.mxu0 %v475
  %1046 = vmatprep.subr.mxu0 %v472
  %1047 = vmatpush1.msra.mxu0 %v471
  %1048 = vmatprep.subr.mxu0 %v468
  %1049 = vmatpush1.msra.mxu0 %v467
  %1050 = vmatprep.subr.mxu0 %v464
  %1051 = vmatpush1.msra.mxu0 %v463
  %1052 = vmatprep.subr.mxu0 %v460
  %1053 = vmatpush1.msra.mxu0 %v459
  %1054 = vmatprep.subr.mxu0 %v456
  %1055 = vmatpush1.msra.mxu0 %v455
  %1056 = vmatprep.subr.mxu0 %v452
  %1057 = vmatpush1.msra.mxu0 %v451
  %1058 = vmatprep.subr.mxu0 %v448
  %1059 = vmatpush1.msra.mxu0 %v447
  %1060 = vmatprep.subr.mxu0 %v444
  %1061 = vmatpush1.msra.mxu0 %v443
  %1062 = vmatprep.subr.mxu0 %v440
  %1063 = vmatpush1.msra.mxu0 %v439
  %1064 = vmatprep.subr.mxu0 %v436
  %1065 = vmatpush1.msra.mxu0 %v435
  %1066 = vmatprep.subr.mxu0 %v432
  %1067 = vmatpush1.msra.mxu0 %v431
  %1068 = vmatprep.subr.mxu0 %v428
  %1069 = vmatpush1.msra.mxu0 %v427
  %1070 = vmatprep.subr.mxu0 %v424
  %1071 = vmatpush1.msra.mxu0 %v423
  %1072 = vmatprep.subr.mxu0 %v420
  %1073 = vmatpush1.msra.mxu0 %v419
  %1074 = vmatprep.subr.mxu0 %v544
  %1075 = vmatpush2.msra.mxu0 %v543
  %1076 = vmatprep.subr.mxu0 %v540
  %1077 = vmatpush2.msra.mxu0 %v539
  %1078 = vmatprep.subr.mxu0 %v536
  %1079 = vmatpush2.msra.mxu0 %v535
  %1080 = vmatprep.subr.mxu0 %v532
  %1081 = vmatpush2.msra.mxu0 %v531
  %1082 = vmatprep.subr.mxu0 %v528
  %1083 = vmatpush2.msra.mxu0 %v527
  %1084 = vmatprep.subr.mxu0 %v524
  %1085 = vmatpush2.msra.mxu0 %v523
  %1086 = vmatprep.subr.mxu0 %v520
  %1087 = vmatpush2.msra.mxu0 %v519
  %1088 = vmatprep.subr.mxu0 %v516
  %1089 = vmatpush2.msra.mxu0 %v515
  %1090 = vmatprep.subr.mxu0 %v512
  %1091 = vmatpush2.msra.mxu0 %v511
  %1092 = vmatprep.subr.mxu0 %v508
  %1093 = vmatpush2.msra.mxu0 %v507
  %1094 = vmatprep.subr.mxu0 %v504
  %1095 = vmatpush2.msra.mxu0 %v503
  %1096 = vmatprep.subr.mxu0 %v500
  %1097 = vmatpush2.msra.mxu0 %v499
  %1098 = vmatprep.subr.mxu0 %v496
  %1099 = vmatpush2.msra.mxu0 %v495
  %1100 = vmatprep.subr.mxu0 %v492
  %1101 = vmatpush2.msra.mxu0 %v491
  %1102 = vmatprep.subr.mxu0 %v488
  %1103 = vmatpush2.msra.mxu0 %v487
  %1104 = vmatprep.subr.mxu0 %v484
  %1105 = vmatpush2.msra.mxu0 %v483
  %1106 = vmatprep.mubr.f32.mxu0 %v32
  %1107 = vmatmul.mubr.f32.gmra.mxu0 %v31
  %v1108 = vpop.f32.mrf.mxu0
  %v1109 = vadd.f32 %v1038, %v1108
  %v1110 = vpop.f32.mrf.mxu0
  %v1111 = vadd.f32 %v1040, %v1110
  %1112 = vdwg.mxu0
  %v1113 = vld [vmem:[%s2] sm:$0xff]
  %v1114 = vld [vmem:[%s2 + $0x8] sm:$0xff]
  %v1115 = vld [vmem:[%s2 + $0x10] sm:$0xff]
  %v1116 = vld [vmem:[%s2 + $0x18] sm:$0xff]
  %v1117 = vld [vmem:[%s2 + $0x20] sm:$0xff]
  %v1118 = vld [vmem:[%s2 + $0x28] sm:$0xff]
  %v1119 = vld [vmem:[%s2 + $0x30] sm:$0xff]
  %v1120 = vld [vmem:[%s2 + $0x38] sm:$0xff]
  %v1121 = vld [vmem:[%s2 + $0x40] sm:$0xff]
  %v1122 = vld [vmem:[%s2 + $0x48] sm:$0xff]
  %v1123 = vld [vmem:[%s2 + $0x50] sm:$0xff]
  %v1124 = vld [vmem:[%s2 + $0x58] sm:$0xff]
  %v1125 = vld [vmem:[%s2 + $0x60] sm:$0xff]
  %v1126 = vld [vmem:[%s2 + $0x68] sm:$0xff]
  %v1127 = vld [vmem:[%s2 + $0x70] sm:$0xff]
  %v1128 = vld [vmem:[%s2 + $0x78] sm:$0xff]
  %v1129 = vld [vmem:[%s2 + $0x80] sm:$0xff]
  %v1130 = vld [vmem:[%s2 + $0x88] sm:$0xff]
  %v1131 = vld [vmem:[%s2 + $0x90] sm:$0xff]
  %v1132 = vld [vmem:[%s2 + $0x98] sm:$0xff]
  %v1133 = vld [vmem:[%s2 + $0xa0] sm:$0xff]
  %v1134 = vld [vmem:[%s2 + $0xa8] sm:$0xff]
  %v1135 = vld [vmem:[%s2 + $0xb0] sm:$0xff]
  %v1136 = vld [vmem:[%s2 + $0xb8] sm:$0xff]
  %v1137 = vld [vmem:[%s2 + $0xc0] sm:$0xff]
  %v1138 = vld [vmem:[%s2 + $0xc8] sm:$0xff]
  %v1139 = vld [vmem:[%s2 + $0xd0] sm:$0xff]
  %v1140 = vld [vmem:[%s2 + $0xd8] sm:$0xff]
  %v1141 = vld [vmem:[%s2 + $0xe0] sm:$0xff]
  %v1142 = vld [vmem:[%s2 + $0xe8] sm:$0xff]
  %v1143 = vld [vmem:[%s2 + $0xf0] sm:$0xff]
  %v1144 = vld [vmem:[%s2 + $0xf8] sm:$0xff]
  %v1145 = vld [vmem:[%s2 + $0x100] sm:$0xff]
  %v1146 = vld [vmem:[%s2 + $0x108] sm:$0xff]
  %v1147 = vld [vmem:[%s2 + $0x110] sm:$0xff]
  %v1148 = vld [vmem:[%s2 + $0x118] sm:$0xff]
  %v1149 = vld [vmem:[%s2 + $0x120] sm:$0xff]
  %v1150 = vld [vmem:[%s2 + $0x128] sm:$0xff]
  %v1151 = vld [vmem:[%s2 + $0x130] sm:$0xff]
  %v1152 = vld [vmem:[%s2 + $0x138] sm:$0xff]
  %v1153 = vld [vmem:[%s2 + $0x140] sm:$0xff]
  %v1154 = vld [vmem:[%s2 + $0x148] sm:$0xff]
  %v1155 = vld [vmem:[%s2 + $0x150] sm:$0xff]
  %v1156 = vld [vmem:[%s2 + $0x158] sm:$0xff]
  %v1157 = vld [vmem:[%s2 + $0x160] sm:$0xff]
  %v1158 = vld [vmem:[%s2 + $0x168] sm:$0xff]
  %v1159 = vld [vmem:[%s2 + $0x170] sm:$0xff]
  %v1160 = vld [vmem:[%s2 + $0x178] sm:$0xff]
  %v1161 = vld [vmem:[%s2 + $0x180] sm:$0xff]
  %v1162 = vld [vmem:[%s3] sm:$0xff]
  %v1163 = vld [vmem:[%s3 + $0x8] sm:$0xff]
  %v1164 = vld [vmem:[%s3 + $0x10] sm:$0xff]
  %v1165 = vld [vmem:[%s3 + $0x18] sm:$0xff]
  %vm1166 = vcmask 64512
  %v1168 = vsel %vm1166, %v24, 0
  %1170 = vmatprep.subr.mxu0 0.0
  %1171 = vmatpush1.msra.mxu0 0.0
  %1172 = vmatprep.subr.mxu0 0.0
  %1173 = vmatpush1.msra.mxu0 0.0
  %1174 = vmatprep.subr.mxu0 0.0
  %1175 = vmatpush1.msra.mxu0 0.0
  %1176 = vmatprep.subr.mxu0 0.0
  %1177 = vmatpush1.msra.mxu0 0.0
  %1178 = vmatprep.subr.mxu0 0.0
  %1179 = vmatpush1.msra.mxu0 0.0
  %1180 = vmatprep.subr.mxu0 0.0
  %1181 = vmatpush1.msra.mxu0 0.0
  %1182 = vmatprep.subr.mxu0 0.0
  %1183 = vmatpush1.msra.mxu0 0.0
  %1184 = vmatprep.subr.mxu0 0.0
  %1185 = vmatpush1.msra.mxu0 0.0
  %1186 = vmatprep.subr.mxu0 0.0
  %1187 = vmatpush1.msra.mxu0 0.0
  %1188 = vmatprep.subr.mxu0 0.0
  %1189 = vmatpush1.msra.mxu0 0.0
  %1190 = vmatprep.subr.mxu0 0.0
  %1191 = vmatpush1.msra.mxu0 0.0
  %1192 = vmatprep.subr.mxu0 0.0
  %1193 = vmatpush1.msra.mxu0 0.0
  %1194 = vmatprep.subr.mxu0 0.0
  %1195 = vmatpush1.msra.mxu0 0.0
  %1196 = vmatprep.subr.mxu0 0.0
  %1197 = vmatpush1.msra.mxu0 0.0
  %1198 = vmatprep.subr.mxu0 0.0
  %1199 = vmatpush1.msra.mxu0 0.0
  %1200 = vmatprep.subr.mxu0 %v827
  %1201 = vmatpush1.msra.mxu0 %v825
  %1202 = vmatprep.subr.mxu0 0.0
  %1203 = vmatpush2.msra.mxu0 0.0
  %1204 = vmatprep.subr.mxu0 0.0
  %1205 = vmatpush2.msra.mxu0 0.0
  %1206 = vmatprep.subr.mxu0 0.0
  %1207 = vmatpush2.msra.mxu0 0.0
  %1208 = vmatprep.subr.mxu0 0.0
  %1209 = vmatpush2.msra.mxu0 0.0
  %1210 = vmatprep.subr.mxu0 0.0
  %1211 = vmatpush2.msra.mxu0 0.0
  %1212 = vmatprep.subr.mxu0 0.0
  %1213 = vmatpush2.msra.mxu0 0.0
  %1214 = vmatprep.subr.mxu0 0.0
  %1215 = vmatpush2.msra.mxu0 0.0
  %1216 = vmatprep.subr.mxu0 0.0
  %1217 = vmatpush2.msra.mxu0 0.0
  %1218 = vmatprep.subr.mxu0 0.0
  %1219 = vmatpush2.msra.mxu0 0.0
  %1220 = vmatprep.subr.mxu0 0.0
  %1221 = vmatpush2.msra.mxu0 0.0
  %1222 = vmatprep.subr.mxu0 0.0
  %1223 = vmatpush2.msra.mxu0 0.0
  %1224 = vmatprep.subr.mxu0 0.0
  %1225 = vmatpush2.msra.mxu0 0.0
  %1226 = vmatprep.subr.mxu0 0.0
  %1227 = vmatpush2.msra.mxu0 0.0
  %1228 = vmatprep.subr.mxu0 0.0
  %1229 = vmatpush2.msra.mxu0 0.0
  %1230 = vmatprep.subr.mxu0 0.0
  %1231 = vmatpush2.msra.mxu0 0.0
  %1232 = vmatprep.subr.mxu0 0.0
  %1233 = vmatpush2.msra.mxu0 0.0
  %1234 = vmatprep.mubr.f32.mxu0 0.0
  %1235 = vmatmul.mubr.f32.gmra.mxu0 %v1168
  %v1236 = vpop.f32.mrf.mxu0
  %v1237 = vadd.f32 0.0, %v1236
  %v1238 = vpop.f32.mrf.mxu0
  %v1239 = vadd.f32 0.0, %v1238
  %1240 = vdwg.mxu0
  %1241 = vmatprep.subr.mxu0 0.0
  %1242 = vmatpush1.msra.mxu0 0.0
  %1243 = vmatprep.subr.mxu0 0.0
  %1244 = vmatpush1.msra.mxu0 0.0
  %1245 = vmatprep.subr.mxu0 0.0
  %1246 = vmatpush1.msra.mxu0 0.0
  %1247 = vmatprep.subr.mxu0 0.0
  %1248 = vmatpush1.msra.mxu0 0.0
  %1249 = vmatprep.subr.mxu0 0.0
  %1250 = vmatpush1.msra.mxu0 0.0
  %1251 = vmatprep.subr.mxu0 0.0
  %1252 = vmatpush1.msra.mxu0 0.0
  %1253 = vmatprep.subr.mxu0 0.0
  %1254 = vmatpush1.msra.mxu0 0.0
  %1255 = vmatprep.subr.mxu0 0.0
  %1256 = vmatpush1.msra.mxu0 0.0
  %1257 = vmatprep.subr.mxu0 0.0
  %1258 = vmatpush1.msra.mxu0 0.0
  %1259 = vmatprep.subr.mxu0 0.0
  %1260 = vmatpush1.msra.mxu0 0.0
  %1261 = vmatprep.subr.mxu0 0.0
  %1262 = vmatpush1.msra.mxu0 0.0
  %1263 = vmatprep.subr.mxu0 0.0
  %1264 = vmatpush1.msra.mxu0 0.0
  %1265 = vmatprep.subr.mxu0 0.0
  %1266 = vmatpush1.msra.mxu0 0.0
  %1267 = vmatprep.subr.mxu0 0.0
  %1268 = vmatpush1.msra.mxu0 0.0
  %1269 = vmatprep.subr.mxu0 0.0
  %1270 = vmatpush1.msra.mxu0 0.0
  %1271 = vmatprep.subr.mxu0 %v1111
  %1272 = vmatpush1.msra.mxu0 %v1109
  %1273 = vmatprep.subr.mxu0 0.0
  %1274 = vmatpush2.msra.mxu0 0.0
  %1275 = vmatprep.subr.mxu0 0.0
  %1276 = vmatpush2.msra.mxu0 0.0
  %1277 = vmatprep.subr.mxu0 0.0
  %1278 = vmatpush2.msra.mxu0 0.0
  %1279 = vmatprep.subr.mxu0 0.0
  %1280 = vmatpush2.msra.mxu0 0.0
  %1281 = vmatprep.subr.mxu0 0.0
  %1282 = vmatpush2.msra.mxu0 0.0
  %1283 = vmatprep.subr.mxu0 0.0
  %1284 = vmatpush2.msra.mxu0 0.0
  %1285 = vmatprep.subr.mxu0 0.0
  %1286 = vmatpush2.msra.mxu0 0.0
  %1287 = vmatprep.subr.mxu0 0.0
  %1288 = vmatpush2.msra.mxu0 0.0
  %1289 = vmatprep.subr.mxu0 0.0
  %1290 = vmatpush2.msra.mxu0 0.0
  %1291 = vmatprep.subr.mxu0 0.0
  %1292 = vmatpush2.msra.mxu0 0.0
  %1293 = vmatprep.subr.mxu0 0.0
  %1294 = vmatpush2.msra.mxu0 0.0
  %1295 = vmatprep.subr.mxu0 0.0
  %1296 = vmatpush2.msra.mxu0 0.0
  %1297 = vmatprep.subr.mxu0 0.0
  %1298 = vmatpush2.msra.mxu0 0.0
  %1299 = vmatprep.subr.mxu0 0.0
  %1300 = vmatpush2.msra.mxu0 0.0
  %1301 = vmatprep.subr.mxu0 0.0
  %1302 = vmatpush2.msra.mxu0 0.0
  %1303 = vmatprep.subr.mxu0 0.0
  %1304 = vmatpush2.msra.mxu0 0.0
  %1305 = vmatprep.mubr.f32.mxu0 0.0
  %1306 = vmatmul.mubr.f32.gmra.mxu0 %v1168
  %v1307 = vpop.f32.mrf.mxu0
  %v1308 = vadd.f32 0.0, %v1307
  %v1309 = vpop.f32.mrf.mxu0
  %v1310 = vadd.f32 0.0, %v1309
  %1311 = vdwg.mxu0
  %1361 = vrot.lane.b32.xlu0 %v1113, 112
  %v1362 = vpop.permute.xlu0 %1361
  %1363 = vrot.lane.b32.xlu0 %v1114, 112
  %v1364 = vpop.permute.xlu0 %1363
  %1365 = vrot.lane.b32.xlu0 %v1115, 112
  %v1366 = vpop.permute.xlu0 %1365
  %1367 = vrot.lane.b32.xlu0 %v1116, 112
  %v1368 = vpop.permute.xlu0 %1367
  %1369 = vrot.lane.b32.xlu0 %v1117, 112
  %v1370 = vpop.permute.xlu0 %1369
  %1371 = vrot.lane.b32.xlu0 %v1118, 112
  %v1372 = vpop.permute.xlu0 %1371
  %1373 = vrot.lane.b32.xlu0 %v1119, 112
  %v1374 = vpop.permute.xlu0 %1373
  %1375 = vrot.lane.b32.xlu0 %v1120, 112
  %v1376 = vpop.permute.xlu0 %1375
  %1377 = vrot.lane.b32.xlu0 %v1121, 112
  %v1378 = vpop.permute.xlu0 %1377
  %1379 = vrot.lane.b32.xlu0 %v1122, 112
  %v1380 = vpop.permute.xlu0 %1379
  %1381 = vrot.lane.b32.xlu0 %v1123, 112
  %v1382 = vpop.permute.xlu0 %1381
  %1383 = vrot.lane.b32.xlu0 %v1124, 112
  %v1384 = vpop.permute.xlu0 %1383
  %1385 = vrot.lane.b32.xlu0 %v1125, 112
  %v1386 = vpop.permute.xlu0 %1385
  %1387 = vrot.lane.b32.xlu0 %v1126, 112
  %v1388 = vpop.permute.xlu0 %1387
  %1389 = vrot.lane.b32.xlu0 %v1127, 112
  %v1390 = vpop.permute.xlu0 %1389
  %1391 = vrot.lane.b32.xlu0 %v1128, 112
  %v1392 = vpop.permute.xlu0 %1391
  %1393 = vrot.lane.b32.xlu0 %v1129, 112
  %v1394 = vpop.permute.xlu0 %1393
  %1395 = vrot.lane.b32.xlu0 %v1130, 112
  %v1396 = vpop.permute.xlu0 %1395
  %1397 = vrot.lane.b32.xlu0 %v1131, 112
  %v1398 = vpop.permute.xlu0 %1397
  %1399 = vrot.lane.b32.xlu0 %v1132, 112
  %v1400 = vpop.permute.xlu0 %1399
  %1401 = vrot.lane.b32.xlu0 %v1133, 112
  %v1402 = vpop.permute.xlu0 %1401
  %1403 = vrot.lane.b32.xlu0 %v1134, 112
  %v1404 = vpop.permute.xlu0 %1403
  %1405 = vrot.lane.b32.xlu0 %v1135, 112
  %v1406 = vpop.permute.xlu0 %1405
  %1407 = vrot.lane.b32.xlu0 %v1136, 112
  %v1408 = vpop.permute.xlu0 %1407
  %1409 = vrot.lane.b32.xlu0 %v1137, 112
  %v1410 = vpop.permute.xlu0 %1409
  %1411 = vrot.lane.b32.xlu0 %v1138, 112
  %v1412 = vpop.permute.xlu0 %1411
  %1413 = vrot.lane.b32.xlu0 %v1139, 112
  %v1414 = vpop.permute.xlu0 %1413
  %1415 = vrot.lane.b32.xlu0 %v1140, 112
  %v1416 = vpop.permute.xlu0 %1415
  %1417 = vrot.lane.b32.xlu0 %v1141, 112
  %v1418 = vpop.permute.xlu0 %1417
  %1419 = vrot.lane.b32.xlu0 %v1142, 112
  %v1420 = vpop.permute.xlu0 %1419
  %1421 = vrot.lane.b32.xlu0 %v1143, 112
  %v1422 = vpop.permute.xlu0 %1421
  %1423 = vrot.lane.b32.xlu0 %v1144, 112
  %v1424 = vpop.permute.xlu0 %1423
  %1425 = vrot.lane.b32.xlu0 %v1145, 112
  %v1426 = vpop.permute.xlu0 %1425
  %1427 = vrot.lane.b32.xlu0 %v1146, 112
  %v1428 = vpop.permute.xlu0 %1427
  %1429 = vrot.lane.b32.xlu0 %v1147, 112
  %v1430 = vpop.permute.xlu0 %1429
  %1431 = vrot.lane.b32.xlu0 %v1148, 112
  %v1432 = vpop.permute.xlu0 %1431
  %1433 = vrot.lane.b32.xlu0 %v1149, 112
  %v1434 = vpop.permute.xlu0 %1433
  %1435 = vrot.lane.b32.xlu0 %v1150, 112
  %v1436 = vpop.permute.xlu0 %1435
  %1437 = vrot.lane.b32.xlu0 %v1151, 112
  %v1438 = vpop.permute.xlu0 %1437
  %1439 = vrot.lane.b32.xlu0 %v1152, 112
  %v1440 = vpop.permute.xlu0 %1439
  %1441 = vrot.lane.b32.xlu0 %v1153, 112
  %v1442 = vpop.permute.xlu0 %1441
  %1443 = vrot.lane.b32.xlu0 %v1154, 112
  %v1444 = vpop.permute.xlu0 %1443
  %1445 = vrot.lane.b32.xlu0 %v1155, 112
  %v1446 = vpop.permute.xlu0 %1445
  %1447 = vrot.lane.b32.xlu0 %v1156, 112
  %v1448 = vpop.permute.xlu0 %1447
  %1449 = vrot.lane.b32.xlu0 %v1157, 112
  %v1450 = vpop.permute.xlu0 %1449
  %1451 = vrot.lane.b32.xlu0 %v1158, 112
  %v1452 = vpop.permute.xlu0 %1451
  %1453 = vrot.lane.b32.xlu0 %v1159, 112
  %v1454 = vpop.permute.xlu0 %1453
  %1455 = vrot.lane.b32.xlu0 %v1160, 112
  %v1456 = vpop.permute.xlu0 %1455
  %1457 = vrot.lane.b32.xlu0 %v1161, 112
  %v1458 = vpop.permute.xlu0 %1457
  %v1509 = vsel %vm1166, %v1310, 0
  %1511 = vmatprep.subr.mxu0 0.0
  %1512 = vmatpush1.msra.mxu0 %v1392
  %1513 = vmatprep.subr.mxu0 0.0
  %1514 = vmatpush1.msra.mxu0 %v1390
  %1515 = vmatprep.subr.mxu0 0.0
  %1516 = vmatpush1.msra.mxu0 %v1388
  %1517 = vmatprep.subr.mxu0 0.0
  %1518 = vmatpush1.msra.mxu0 %v1386
  %1519 = vmatprep.subr.mxu0 0.0
  %1520 = vmatpush1.msra.mxu0 %v1384
  %1521 = vmatprep.subr.mxu0 0.0
  %1522 = vmatpush1.msra.mxu0 %v1382
  %1523 = vmatprep.subr.mxu0 0.0
  %1524 = vmatpush1.msra.mxu0 %v1380
  %1525 = vmatprep.subr.mxu0 0.0
  %1526 = vmatpush1.msra.mxu0 %v1378
  %1527 = vmatprep.subr.mxu0 0.0
  %1528 = vmatpush1.msra.mxu0 %v1376
  %1529 = vmatprep.subr.mxu0 0.0
  %1530 = vmatpush1.msra.mxu0 %v1374
  %1531 = vmatprep.subr.mxu0 0.0
  %1532 = vmatpush1.msra.mxu0 %v1372
  %1533 = vmatprep.subr.mxu0 0.0
  %1534 = vmatpush1.msra.mxu0 %v1370
  %1535 = vmatprep.subr.mxu0 0.0
  %1536 = vmatpush1.msra.mxu0 %v1368
  %1537 = vmatprep.subr.mxu0 0.0
  %1538 = vmatpush1.msra.mxu0 %v1366
  %1539 = vmatprep.subr.mxu0 0.0
  %1540 = vmatpush1.msra.mxu0 %v1364
  %1541 = vmatprep.subr.mxu0 0.0
  %1542 = vmatpush1.msra.mxu0 %v1362
  %1543 = vmatprep.subr.mxu0 0.0
  %1544 = vmatpush2.msra.mxu0 %v1424
  %1545 = vmatprep.subr.mxu0 0.0
  %1546 = vmatpush2.msra.mxu0 %v1422
  %1547 = vmatprep.subr.mxu0 0.0
  %1548 = vmatpush2.msra.mxu0 %v1420
  %1549 = vmatprep.subr.mxu0 0.0
  %1550 = vmatpush2.msra.mxu0 %v1418
  %1551 = vmatprep.subr.mxu0 0.0
  %1552 = vmatpush2.msra.mxu0 %v1416
  %1553 = vmatprep.subr.mxu0 0.0
  %1554 = vmatpush2.msra.mxu0 %v1414
  %1555 = vmatprep.subr.mxu0 0.0
  %1556 = vmatpush2.msra.mxu0 %v1412
  %1557 = vmatprep.subr.mxu0 0.0
  %1558 = vmatpush2.msra.mxu0 %v1410
  %1559 = vmatprep.subr.mxu0 0.0
  %1560 = vmatpush2.msra.mxu0 %v1408
  %1561 = vmatprep.subr.mxu0 0.0
  %1562 = vmatpush2.msra.mxu0 %v1406
  %1563 = vmatprep.subr.mxu0 0.0
  %1564 = vmatpush2.msra.mxu0 %v1404
  %1565 = vmatprep.subr.mxu0 0.0
  %1566 = vmatpush2.msra.mxu0 %v1402
  %1567 = vmatprep.subr.mxu0 0.0
  %1568 = vmatpush2.msra.mxu0 %v1400
  %1569 = vmatprep.subr.mxu0 0.0
  %1570 = vmatpush2.msra.mxu0 %v1398
  %1571 = vmatprep.subr.mxu0 0.0
  %1572 = vmatpush2.msra.mxu0 %v1396
  %1573 = vmatprep.subr.mxu0 0.0
  %1574 = vmatpush2.msra.mxu0 %v1394
  %1575 = vmatprep.mubr.f32.mxu0 %v1239
  %1576 = vmatmul.mubr.f32.gmra.mxu0 %v1237
  %v1577 = vpop.f32.mrf.mxu0
  %v1578 = vadd.f32 0.0, %v1577
  %v1579 = vpop.f32.mrf.mxu0
  %1580 = vdwg.mxu0
  %1581 = vmatprep.subr.mxu0 0.0
  %1582 = vmatpush1.msra.mxu0 %v1456
  %1583 = vmatprep.subr.mxu0 0.0
  %1584 = vmatpush1.msra.mxu0 %v1454
  %1585 = vmatprep.subr.mxu0 0.0
  %1586 = vmatpush1.msra.mxu0 %v1452
  %1587 = vmatprep.subr.mxu0 0.0
  %1588 = vmatpush1.msra.mxu0 %v1450
  %1589 = vmatprep.subr.mxu0 0.0
  %1590 = vmatpush1.msra.mxu0 %v1448
  %1591 = vmatprep.subr.mxu0 0.0
  %1592 = vmatpush1.msra.mxu0 %v1446
  %1593 = vmatprep.subr.mxu0 0.0
  %1594 = vmatpush1.msra.mxu0 %v1444
  %1595 = vmatprep.subr.mxu0 0.0
  %1596 = vmatpush1.msra.mxu0 %v1442
  %1597 = vmatprep.subr.mxu0 0.0
  %1598 = vmatpush1.msra.mxu0 %v1440
  %1599 = vmatprep.subr.mxu0 0.0
  %1600 = vmatpush1.msra.mxu0 %v1438
  %1601 = vmatprep.subr.mxu0 0.0
  %1602 = vmatpush1.msra.mxu0 %v1436
  %1603 = vmatprep.subr.mxu0 0.0
  %1604 = vmatpush1.msra.mxu0 %v1434
  %1605 = vmatprep.subr.mxu0 0.0
  %1606 = vmatpush1.msra.mxu0 %v1432
  %1607 = vmatprep.subr.mxu0 0.0
  %1608 = vmatpush1.msra.mxu0 %v1430
  %1609 = vmatprep.subr.mxu0 0.0
  %1610 = vmatpush1.msra.mxu0 %v1428
  %1611 = vmatprep.subr.mxu0 0.0
  %1612 = vmatpush1.msra.mxu0 %v1426
  %1613 = vmatprep.subr.mxu0 0.0
  %1614 = vmatpush2.msra.mxu0 0.0
  %1615 = vmatprep.subr.mxu0 0.0
  %1616 = vmatpush2.msra.mxu0 0.0
  %1617 = vmatprep.subr.mxu0 0.0
  %1618 = vmatpush2.msra.mxu0 0.0
  %1619 = vmatprep.subr.mxu0 0.0
  %1620 = vmatpush2.msra.mxu0 0.0
  %1621 = vmatprep.subr.mxu0 0.0
  %1622 = vmatpush2.msra.mxu0 0.0
  %1623 = vmatprep.subr.mxu0 0.0
  %1624 = vmatpush2.msra.mxu0 0.0
  %1625 = vmatprep.subr.mxu0 0.0
  %1626 = vmatpush2.msra.mxu0 0.0
  %1627 = vmatprep.subr.mxu0 0.0
  %1628 = vmatpush2.msra.mxu0 0.0
  %1629 = vmatprep.subr.mxu0 0.0
  %1630 = vmatpush2.msra.mxu0 0.0
  %1631 = vmatprep.subr.mxu0 0.0
  %1632 = vmatpush2.msra.mxu0 0.0
  %1633 = vmatprep.subr.mxu0 0.0
  %1634 = vmatpush2.msra.mxu0 0.0
  %1635 = vmatprep.subr.mxu0 0.0
  %1636 = vmatpush2.msra.mxu0 0.0
  %1637 = vmatprep.subr.mxu0 0.0
  %1638 = vmatpush2.msra.mxu0 0.0
  %1639 = vmatprep.subr.mxu0 0.0
  %1640 = vmatpush2.msra.mxu0 0.0
  %1641 = vmatprep.subr.mxu0 0.0
  %1642 = vmatpush2.msra.mxu0 0.0
  %1643 = vmatprep.subr.mxu0 0.0
  %1644 = vmatpush2.msra.mxu0 %v1458
  %1645 = vmatprep.mubr.f32.mxu0 %v1509
  %1646 = vmatmul.mubr.f32.gmra.mxu0 %v1308
  %v1647 = vpop.f32.mrf.mxu0
  %v1648 = vadd.f32 %v1578, %v1647
  %v1649 = vpop.f32.mrf.mxu0
  %1650 = vdwg.mxu0
  %v1651 = vmul.f32 %v1648, 0.010204081
  %v1653 = vsel %vm1166, %v1651, 0
  %1655 = vmatprep.subr.mxu0 0.0
  %1656 = vmatpush1.msra.mxu0 0.0
  %1657 = vmatprep.subr.mxu0 0.0
  %1658 = vmatpush1.msra.mxu0 0.0
  %1659 = vmatprep.subr.mxu0 0.0
  %1660 = vmatpush1.msra.mxu0 0.0
  %1661 = vmatprep.subr.mxu0 0.0
  %1662 = vmatpush1.msra.mxu0 0.0
  %1663 = vmatprep.subr.mxu0 0.0
  %1664 = vmatpush1.msra.mxu0 0.0
  %1665 = vmatprep.subr.mxu0 0.0
  %1666 = vmatpush1.msra.mxu0 0.0
  %1667 = vmatprep.subr.mxu0 0.0
  %1668 = vmatpush1.msra.mxu0 0.0
  %1669 = vmatprep.subr.mxu0 0.0
  %1670 = vmatpush1.msra.mxu0 0.0
  %1671 = vmatprep.subr.mxu0 0.0
  %1672 = vmatpush1.msra.mxu0 0.0
  %1673 = vmatprep.subr.mxu0 0.0
  %1674 = vmatpush1.msra.mxu0 0.0
  %1675 = vmatprep.subr.mxu0 0.0
  %1676 = vmatpush1.msra.mxu0 0.0
  %1677 = vmatprep.subr.mxu0 0.0
  %1678 = vmatpush1.msra.mxu0 0.0
  %1679 = vmatprep.subr.mxu0 0.0
  %1680 = vmatpush1.msra.mxu0 0.0
  %1681 = vmatprep.subr.mxu0 0.0
  %1682 = vmatpush1.msra.mxu0 0.0
  %1683 = vmatprep.subr.mxu0 0.0
  %1684 = vmatpush1.msra.mxu0 0.0
  %1685 = vmatprep.subr.mxu0 %v1163
  %1686 = vmatpush1.msra.mxu0 %v1162
  %1687 = vmatprep.subr.mxu0 0.0
  %1688 = vmatpush2.msra.mxu0 0.0
  %1689 = vmatprep.subr.mxu0 0.0
  %1690 = vmatpush2.msra.mxu0 0.0
  %1691 = vmatprep.subr.mxu0 0.0
  %1692 = vmatpush2.msra.mxu0 0.0
  %1693 = vmatprep.subr.mxu0 0.0
  %1694 = vmatpush2.msra.mxu0 0.0
  %1695 = vmatprep.subr.mxu0 0.0
  %1696 = vmatpush2.msra.mxu0 0.0
  %1697 = vmatprep.subr.mxu0 0.0
  %1698 = vmatpush2.msra.mxu0 0.0
  %1699 = vmatprep.subr.mxu0 0.0
  %1700 = vmatpush2.msra.mxu0 0.0
  %1701 = vmatprep.subr.mxu0 0.0
  %1702 = vmatpush2.msra.mxu0 0.0
  %1703 = vmatprep.subr.mxu0 0.0
  %1704 = vmatpush2.msra.mxu0 0.0
  %1705 = vmatprep.subr.mxu0 0.0
  %1706 = vmatpush2.msra.mxu0 0.0
  %1707 = vmatprep.subr.mxu0 0.0
  %1708 = vmatpush2.msra.mxu0 0.0
  %1709 = vmatprep.subr.mxu0 0.0
  %1710 = vmatpush2.msra.mxu0 0.0
  %1711 = vmatprep.subr.mxu0 0.0
  %1712 = vmatpush2.msra.mxu0 0.0
  %1713 = vmatprep.subr.mxu0 0.0
  %1714 = vmatpush2.msra.mxu0 0.0
  %1715 = vmatprep.subr.mxu0 0.0
  %1716 = vmatpush2.msra.mxu0 0.0
  %1717 = vmatprep.subr.mxu0 0.0
  %1718 = vmatpush2.msra.mxu0 0.0
  %1719 = vmatprep.mubr.f32.mxu0 0.0
  %1720 = vmatmul.mubr.f32.gmra.mxu0 %v1653
  %v1721 = vpop.f32.mrf.mxu0
  %v1722 = vadd.f32 0.0, %v1721
  %v1723 = vpop.f32.mrf.mxu0
  %v1724 = vadd.f32 0.0, %v1723
  %1725 = vdwg.mxu0
  %1726 = vmatprep.subr.mxu0 0.0
  %1727 = vmatpush1.msra.mxu0 0.0
  %1728 = vmatprep.subr.mxu0 0.0
  %1729 = vmatpush1.msra.mxu0 0.0
  %1730 = vmatprep.subr.mxu0 0.0
  %1731 = vmatpush1.msra.mxu0 0.0
  %1732 = vmatprep.subr.mxu0 0.0
  %1733 = vmatpush1.msra.mxu0 0.0
  %1734 = vmatprep.subr.mxu0 0.0
  %1735 = vmatpush1.msra.mxu0 0.0
  %1736 = vmatprep.subr.mxu0 0.0
  %1737 = vmatpush1.msra.mxu0 0.0
  %1738 = vmatprep.subr.mxu0 0.0
  %1739 = vmatpush1.msra.mxu0 0.0
  %1740 = vmatprep.subr.mxu0 0.0
  %1741 = vmatpush1.msra.mxu0 0.0
  %1742 = vmatprep.subr.mxu0 0.0
  %1743 = vmatpush1.msra.mxu0 0.0
  %1744 = vmatprep.subr.mxu0 0.0
  %1745 = vmatpush1.msra.mxu0 0.0
  %1746 = vmatprep.subr.mxu0 0.0
  %1747 = vmatpush1.msra.mxu0 0.0
  %1748 = vmatprep.subr.mxu0 0.0
  %1749 = vmatpush1.msra.mxu0 0.0
  %1750 = vmatprep.subr.mxu0 0.0
  %1751 = vmatpush1.msra.mxu0 0.0
  %1752 = vmatprep.subr.mxu0 0.0
  %1753 = vmatpush1.msra.mxu0 0.0
  %1754 = vmatprep.subr.mxu0 0.0
  %1755 = vmatpush1.msra.mxu0 0.0
  %1756 = vmatprep.subr.mxu0 %v1165
  %1757 = vmatpush1.msra.mxu0 %v1164
  %1758 = vmatprep.subr.mxu0 0.0
  %1759 = vmatpush2.msra.mxu0 0.0
  %1760 = vmatprep.subr.mxu0 0.0
  %1761 = vmatpush2.msra.mxu0 0.0
  %1762 = vmatprep.subr.mxu0 0.0
  %1763 = vmatpush2.msra.mxu0 0.0
  %1764 = vmatprep.subr.mxu0 0.0
  %1765 = vmatpush2.msra.mxu0 0.0
  %1766 = vmatprep.subr.mxu0 0.0
  %1767 = vmatpush2.msra.mxu0 0.0
  %1768 = vmatprep.subr.mxu0 0.0
  %1769 = vmatpush2.msra.mxu0 0.0
  %1770 = vmatprep.subr.mxu0 0.0
  %1771 = vmatpush2.msra.mxu0 0.0
  %1772 = vmatprep.subr.mxu0 0.0
  %1773 = vmatpush2.msra.mxu0 0.0
  %1774 = vmatprep.subr.mxu0 0.0
  %1775 = vmatpush2.msra.mxu0 0.0
  %1776 = vmatprep.subr.mxu0 0.0
  %1777 = vmatpush2.msra.mxu0 0.0
  %1778 = vmatprep.subr.mxu0 0.0
  %1779 = vmatpush2.msra.mxu0 0.0
  %1780 = vmatprep.subr.mxu0 0.0
  %1781 = vmatpush2.msra.mxu0 0.0
  %1782 = vmatprep.subr.mxu0 0.0
  %1783 = vmatpush2.msra.mxu0 0.0
  %1784 = vmatprep.subr.mxu0 0.0
  %1785 = vmatpush2.msra.mxu0 0.0
  %1786 = vmatprep.subr.mxu0 0.0
  %1787 = vmatpush2.msra.mxu0 0.0
  %1788 = vmatprep.subr.mxu0 0.0
  %1789 = vmatpush2.msra.mxu0 0.0
  %1790 = vmatprep.mubr.f32.mxu0 0.0
  %1791 = vmatmul.mubr.f32.gmra.mxu0 %v1653
  %v1792 = vpop.f32.mrf.mxu0
  %v1793 = vadd.f32 0.0, %v1792
  %v1794 = vpop.f32.mrf.mxu0
  %v1795 = vadd.f32 0.0, %v1794
  %1796 = vdwg.mxu0
  %v1797 = vlaneseq
  %v1798 = vshrl.u32 %v1797, 7
  %v1799 = vsub.s32 0, %v1798
  %v1800 = vrot.slane %v1722, %v1799
  %v1801 = vlaneseq
  %v1802 = vshrl.u32 %v1801, 7
  %v1803 = vsub.s32 0, %v1802
  %v1804 = vrot.slane %v1724, %v1803
  %v1805 = vlaneseq
  %v1806 = vshrl.u32 %v1805, 7
  %v1807 = vsub.s32 0, %v1806
  %v1808 = vrot.slane %v1793, %v1807
  %v1809 = vlaneseq
  %v1810 = vshrl.u32 %v1809, 7
  %v1811 = vsub.s32 0, %v1810
  %v1812 = vrot.slane %v1795, %v1811
  %v1813 = vsub.f32 %v825, %v1800
  %v1814 = vsub.f32 %v827, %v1804
  %v1815 = vsub.f32 %v1109, %v1808
  %v1816 = vsub.f32 %v1111, %v1812
  %v1817 = vmul.f32 %v1813, %v1813
  %v1818 = vmul.f32 %v1814, %v1814
  %v1819 = vmul.f32 %v1815, %v1815
  %v1820 = vmul.f32 %v1816, %v1816
  %1821 = vmatprep.subr.mxu0 0.0
  %1822 = vmatpush1.msra.mxu0 0.0
  %1823 = vmatprep.subr.mxu0 0.0
  %1824 = vmatpush1.msra.mxu0 0.0
  %1825 = vmatprep.subr.mxu0 0.0
  %1826 = vmatpush1.msra.mxu0 0.0
  %1827 = vmatprep.subr.mxu0 0.0
  %1828 = vmatpush1.msra.mxu0 0.0
  %1829 = vmatprep.subr.mxu0 0.0
  %1830 = vmatpush1.msra.mxu0 0.0
  %1831 = vmatprep.subr.mxu0 0.0
  %1832 = vmatpush1.msra.mxu0 0.0
  %1833 = vmatprep.subr.mxu0 0.0
  %1834 = vmatpush1.msra.mxu0 0.0
  %1835 = vmatprep.subr.mxu0 0.0
  %1836 = vmatpush1.msra.mxu0 0.0
  %1837 = vmatprep.subr.mxu0 0.0
  %1838 = vmatpush1.msra.mxu0 0.0
  %1839 = vmatprep.subr.mxu0 0.0
  %1840 = vmatpush1.msra.mxu0 0.0
  %1841 = vmatprep.subr.mxu0 0.0
  %1842 = vmatpush1.msra.mxu0 0.0
  %1843 = vmatprep.subr.mxu0 0.0
  %1844 = vmatpush1.msra.mxu0 0.0
  %1845 = vmatprep.subr.mxu0 0.0
  %1846 = vmatpush1.msra.mxu0 0.0
  %1847 = vmatprep.subr.mxu0 0.0
  %1848 = vmatpush1.msra.mxu0 0.0
  %1849 = vmatprep.subr.mxu0 0.0
  %1850 = vmatpush1.msra.mxu0 0.0
  %1851 = vmatprep.subr.mxu0 %v1818
  %1852 = vmatpush1.msra.mxu0 %v1817
  %1853 = vmatprep.subr.mxu0 0.0
  %1854 = vmatpush2.msra.mxu0 0.0
  %1855 = vmatprep.subr.mxu0 0.0
  %1856 = vmatpush2.msra.mxu0 0.0
  %1857 = vmatprep.subr.mxu0 0.0
  %1858 = vmatpush2.msra.mxu0 0.0
  %1859 = vmatprep.subr.mxu0 0.0
  %1860 = vmatpush2.msra.mxu0 0.0
  %1861 = vmatprep.subr.mxu0 0.0
  %1862 = vmatpush2.msra.mxu0 0.0
  %1863 = vmatprep.subr.mxu0 0.0
  %1864 = vmatpush2.msra.mxu0 0.0
  %1865 = vmatprep.subr.mxu0 0.0
  %1866 = vmatpush2.msra.mxu0 0.0
  %1867 = vmatprep.subr.mxu0 0.0
  %1868 = vmatpush2.msra.mxu0 0.0
  %1869 = vmatprep.subr.mxu0 0.0
  %1870 = vmatpush2.msra.mxu0 0.0
  %1871 = vmatprep.subr.mxu0 0.0
  %1872 = vmatpush2.msra.mxu0 0.0
  %1873 = vmatprep.subr.mxu0 0.0
  %1874 = vmatpush2.msra.mxu0 0.0
  %1875 = vmatprep.subr.mxu0 0.0
  %1876 = vmatpush2.msra.mxu0 0.0
  %1877 = vmatprep.subr.mxu0 0.0
  %1878 = vmatpush2.msra.mxu0 0.0
  %1879 = vmatprep.subr.mxu0 0.0
  %1880 = vmatpush2.msra.mxu0 0.0
  %1881 = vmatprep.subr.mxu0 0.0
  %1882 = vmatpush2.msra.mxu0 0.0
  %1883 = vmatprep.subr.mxu0 0.0
  %1884 = vmatpush2.msra.mxu0 0.0
  %1885 = vmatprep.mubr.f32.mxu0 0.0
  %1886 = vmatmul.mubr.f32.gmra.mxu0 %v1168
  %v1887 = vpop.f32.mrf.mxu0
  %v1888 = vadd.f32 0.0, %v1887
  %v1889 = vpop.f32.mrf.mxu0
  %v1890 = vadd.f32 0.0, %v1889
  %1891 = vdwg.mxu0
  %1892 = vmatprep.subr.mxu0 0.0
  %1893 = vmatpush1.msra.mxu0 0.0
  %1894 = vmatprep.subr.mxu0 0.0
  %1895 = vmatpush1.msra.mxu0 0.0
  %1896 = vmatprep.subr.mxu0 0.0
  %1897 = vmatpush1.msra.mxu0 0.0
  %1898 = vmatprep.subr.mxu0 0.0
  %1899 = vmatpush1.msra.mxu0 0.0
  %1900 = vmatprep.subr.mxu0 0.0
  %1901 = vmatpush1.msra.mxu0 0.0
  %1902 = vmatprep.subr.mxu0 0.0
  %1903 = vmatpush1.msra.mxu0 0.0
  %1904 = vmatprep.subr.mxu0 0.0
  %1905 = vmatpush1.msra.mxu0 0.0
  %1906 = vmatprep.subr.mxu0 0.0
  %1907 = vmatpush1.msra.mxu0 0.0
  %1908 = vmatprep.subr.mxu0 0.0
  %1909 = vmatpush1.msra.mxu0 0.0
  %1910 = vmatprep.subr.mxu0 0.0
  %1911 = vmatpush1.msra.mxu0 0.0
  %1912 = vmatprep.subr.mxu0 0.0
  %1913 = vmatpush1.msra.mxu0 0.0
  %1914 = vmatprep.subr.mxu0 0.0
  %1915 = vmatpush1.msra.mxu0 0.0
  %1916 = vmatprep.subr.mxu0 0.0
  %1917 = vmatpush1.msra.mxu0 0.0
  %1918 = vmatprep.subr.mxu0 0.0
  %1919 = vmatpush1.msra.mxu0 0.0
  %1920 = vmatprep.subr.mxu0 0.0
  %1921 = vmatpush1.msra.mxu0 0.0
  %1922 = vmatprep.subr.mxu0 %v1820
  %1923 = vmatpush1.msra.mxu0 %v1819
  %1924 = vmatprep.subr.mxu0 0.0
  %1925 = vmatpush2.msra.mxu0 0.0
  %1926 = vmatprep.subr.mxu0 0.0
  %1927 = vmatpush2.msra.mxu0 0.0
  %1928 = vmatprep.subr.mxu0 0.0
  %1929 = vmatpush2.msra.mxu0 0.0
  %1930 = vmatprep.subr.mxu0 0.0
  %1931 = vmatpush2.msra.mxu0 0.0
  %1932 = vmatprep.subr.mxu0 0.0
  %1933 = vmatpush2.msra.mxu0 0.0
  %1934 = vmatprep.subr.mxu0 0.0
  %1935 = vmatpush2.msra.mxu0 0.0
  %1936 = vmatprep.subr.mxu0 0.0
  %1937 = vmatpush2.msra.mxu0 0.0
  %1938 = vmatprep.subr.mxu0 0.0
  %1939 = vmatpush2.msra.mxu0 0.0
  %1940 = vmatprep.subr.mxu0 0.0
  %1941 = vmatpush2.msra.mxu0 0.0
  %1942 = vmatprep.subr.mxu0 0.0
  %1943 = vmatpush2.msra.mxu0 0.0
  %1944 = vmatprep.subr.mxu0 0.0
  %1945 = vmatpush2.msra.mxu0 0.0
  %1946 = vmatprep.subr.mxu0 0.0
  %1947 = vmatpush2.msra.mxu0 0.0
  %1948 = vmatprep.subr.mxu0 0.0
  %1949 = vmatpush2.msra.mxu0 0.0
  %1950 = vmatprep.subr.mxu0 0.0
  %1951 = vmatpush2.msra.mxu0 0.0
  %1952 = vmatprep.subr.mxu0 0.0
  %1953 = vmatpush2.msra.mxu0 0.0
  %1954 = vmatprep.subr.mxu0 0.0
  %1955 = vmatpush2.msra.mxu0 0.0
  %1956 = vmatprep.mubr.f32.mxu0 0.0
  %1957 = vmatmul.mubr.f32.gmra.mxu0 %v1168
  %v1958 = vpop.f32.mrf.mxu0
  %v1959 = vadd.f32 0.0, %v1958
  %v1960 = vpop.f32.mrf.mxu0
  %v1961 = vadd.f32 0.0, %v1960
  %1962 = vdwg.mxu0
  %v1964 = vsel %vm1166, %v1961, 0
  %1966 = vmatprep.subr.mxu0 0.0
  %1967 = vmatpush1.msra.mxu0 %v1392
  %1968 = vmatprep.subr.mxu0 0.0
  %1969 = vmatpush1.msra.mxu0 %v1390
  %1970 = vmatprep.subr.mxu0 0.0
  %1971 = vmatpush1.msra.mxu0 %v1388
  %1972 = vmatprep.subr.mxu0 0.0
  %1973 = vmatpush1.msra.mxu0 %v1386
  %1974 = vmatprep.subr.mxu0 0.0
  %1975 = vmatpush1.msra.mxu0 %v1384
  %1976 = vmatprep.subr.mxu0 0.0
  %1977 = vmatpush1.msra.mxu0 %v1382
  %1978 = vmatprep.subr.mxu0 0.0
  %1979 = vmatpush1.msra.mxu0 %v1380
  %1980 = vmatprep.subr.mxu0 0.0
  %1981 = vmatpush1.msra.mxu0 %v1378
  %1982 = vmatprep.subr.mxu0 0.0
  %1983 = vmatpush1.msra.mxu0 %v1376
  %1984 = vmatprep.subr.mxu0 0.0
  %1985 = vmatpush1.msra.mxu0 %v1374
  %1986 = vmatprep.subr.mxu0 0.0
  %1987 = vmatpush1.msra.mxu0 %v1372
  %1988 = vmatprep.subr.mxu0 0.0
  %1989 = vmatpush1.msra.mxu0 %v1370
  %1990 = vmatprep.subr.mxu0 0.0
  %1991 = vmatpush1.msra.mxu0 %v1368
  %1992 = vmatprep.subr.mxu0 0.0
  %1993 = vmatpush1.msra.mxu0 %v1366
  %1994 = vmatprep.subr.mxu0 0.0
  %1995 = vmatpush1.msra.mxu0 %v1364
  %1996 = vmatprep.subr.mxu0 0.0
  %1997 = vmatpush1.msra.mxu0 %v1362
  %1998 = vmatprep.subr.mxu0 0.0
  %1999 = vmatpush2.msra.mxu0 %v1424
  %2000 = vmatprep.subr.mxu0 0.0
  %2001 = vmatpush2.msra.mxu0 %v1422
  %2002 = vmatprep.subr.mxu0 0.0
  %2003 = vmatpush2.msra.mxu0 %v1420
  %2004 = vmatprep.subr.mxu0 0.0
  %2005 = vmatpush2.msra.mxu0 %v1418
  %2006 = vmatprep.subr.mxu0 0.0
  %2007 = vmatpush2.msra.mxu0 %v1416
  %2008 = vmatprep.subr.mxu0 0.0
  %2009 = vmatpush2.msra.mxu0 %v1414
  %2010 = vmatprep.subr.mxu0 0.0
  %2011 = vmatpush2.msra.mxu0 %v1412
  %2012 = vmatprep.subr.mxu0 0.0
  %2013 = vmatpush2.msra.mxu0 %v1410
  %2014 = vmatprep.subr.mxu0 0.0
  %2015 = vmatpush2.msra.mxu0 %v1408
  %2016 = vmatprep.subr.mxu0 0.0
  %2017 = vmatpush2.msra.mxu0 %v1406
  %2018 = vmatprep.subr.mxu0 0.0
  %2019 = vmatpush2.msra.mxu0 %v1404
  %2020 = vmatprep.subr.mxu0 0.0
  %2021 = vmatpush2.msra.mxu0 %v1402
  %2022 = vmatprep.subr.mxu0 0.0
  %2023 = vmatpush2.msra.mxu0 %v1400
  %2024 = vmatprep.subr.mxu0 0.0
  %2025 = vmatpush2.msra.mxu0 %v1398
  %2026 = vmatprep.subr.mxu0 0.0
  %2027 = vmatpush2.msra.mxu0 %v1396
  %2028 = vmatprep.subr.mxu0 0.0
  %2029 = vmatpush2.msra.mxu0 %v1394
  %2030 = vmatprep.mubr.f32.mxu0 %v1890
  %2031 = vmatmul.mubr.f32.gmra.mxu0 %v1888
  %v2032 = vpop.f32.mrf.mxu0
  %v2033 = vadd.f32 0.0, %v2032
  %v2034 = vpop.f32.mrf.mxu0
  %2035 = vdwg.mxu0
  %2036 = vmatprep.subr.mxu0 0.0
  %2037 = vmatpush1.msra.mxu0 %v1456
  %2038 = vmatprep.subr.mxu0 0.0
  %2039 = vmatpush1.msra.mxu0 %v1454
  %2040 = vmatprep.subr.mxu0 0.0
  %2041 = vmatpush1.msra.mxu0 %v1452
  %2042 = vmatprep.subr.mxu0 0.0
  %2043 = vmatpush1.msra.mxu0 %v1450
  %2044 = vmatprep.subr.mxu0 0.0
  %2045 = vmatpush1.msra.mxu0 %v1448
  %2046 = vmatprep.subr.mxu0 0.0
  %2047 = vmatpush1.msra.mxu0 %v1446
  %2048 = vmatprep.subr.mxu0 0.0
  %2049 = vmatpush1.msra.mxu0 %v1444
  %2050 = vmatprep.subr.mxu0 0.0
  %2051 = vmatpush1.msra.mxu0 %v1442
  %2052 = vmatprep.subr.mxu0 0.0
  %2053 = vmatpush1.msra.mxu0 %v1440
  %2054 = vmatprep.subr.mxu0 0.0
  %2055 = vmatpush1.msra.mxu0 %v1438
  %2056 = vmatprep.subr.mxu0 0.0
  %2057 = vmatpush1.msra.mxu0 %v1436
  %2058 = vmatprep.subr.mxu0 0.0
  %2059 = vmatpush1.msra.mxu0 %v1434
  %2060 = vmatprep.subr.mxu0 0.0
  %2061 = vmatpush1.msra.mxu0 %v1432
  %2062 = vmatprep.subr.mxu0 0.0
  %2063 = vmatpush1.msra.mxu0 %v1430
  %2064 = vmatprep.subr.mxu0 0.0
  %2065 = vmatpush1.msra.mxu0 %v1428
  %2066 = vmatprep.subr.mxu0 0.0
  %2067 = vmatpush1.msra.mxu0 %v1426
  %2068 = vmatprep.subr.mxu0 0.0
  %2069 = vmatpush2.msra.mxu0 0.0
  %2070 = vmatprep.subr.mxu0 0.0
  %2071 = vmatpush2.msra.mxu0 0.0
  %2072 = vmatprep.subr.mxu0 0.0
  %2073 = vmatpush2.msra.mxu0 0.0
  %2074 = vmatprep.subr.mxu0 0.0
  %2075 = vmatpush2.msra.mxu0 0.0
  %2076 = vmatprep.subr.mxu0 0.0
  %2077 = vmatpush2.msra.mxu0 0.0
  %2078 = vmatprep.subr.mxu0 0.0
  %2079 = vmatpush2.msra.mxu0 0.0
  %2080 = vmatprep.subr.mxu0 0.0
  %2081 = vmatpush2.msra.mxu0 0.0
  %2082 = vmatprep.subr.mxu0 0.0
  %2083 = vmatpush2.msra.mxu0 0.0
  %2084 = vmatprep.subr.mxu0 0.0
  %2085 = vmatpush2.msra.mxu0 0.0
  %2086 = vmatprep.subr.mxu0 0.0
  %2087 = vmatpush2.msra.mxu0 0.0
  %2088 = vmatprep.subr.mxu0 0.0
  %2089 = vmatpush2.msra.mxu0 0.0
  %2090 = vmatprep.subr.mxu0 0.0
  %2091 = vmatpush2.msra.mxu0 0.0
  %2092 = vmatprep.subr.mxu0 0.0
  %2093 = vmatpush2.msra.mxu0 0.0
  %2094 = vmatprep.subr.mxu0 0.0
  %2095 = vmatpush2.msra.mxu0 0.0
  %2096 = vmatprep.subr.mxu0 0.0
  %2097 = vmatpush2.msra.mxu0 0.0
  %2098 = vmatprep.subr.mxu0 0.0
  %2099 = vmatpush2.msra.mxu0 %v1458
  %2100 = vmatprep.mubr.f32.mxu0 %v1964
  %2101 = vmatmul.mubr.f32.gmra.mxu0 %v1959
  %v2102 = vpop.f32.mrf.mxu0
  %v2103 = vadd.f32 %v2033, %v2102
  %v2104 = vpop.f32.mrf.mxu0
  %2105 = vdwg.mxu0
  %v2106 = vmul.f32 %v2103, 0.010204081
  %v2107 = vld [vmem:[%s4] sm:$0x1]
  %v2108 = vadd.f32 %v2106, 1e-05
  %v2109 = vrsqrt.pop %v2108
  %v2110 = vmul.f32 %v2107, %v2109
  %v2112 = vsel %vm1166, %v2110, 0
  %2114 = vmatprep.subr.mxu0 0.0
  %2115 = vmatpush1.msra.mxu0 0.0
  %2116 = vmatprep.subr.mxu0 0.0
  %2117 = vmatpush1.msra.mxu0 0.0
  %2118 = vmatprep.subr.mxu0 0.0
  %2119 = vmatpush1.msra.mxu0 0.0
  %2120 = vmatprep.subr.mxu0 0.0
  %2121 = vmatpush1.msra.mxu0 0.0
  %2122 = vmatprep.subr.mxu0 0.0
  %2123 = vmatpush1.msra.mxu0 0.0
  %2124 = vmatprep.subr.mxu0 0.0
  %2125 = vmatpush1.msra.mxu0 0.0
  %2126 = vmatprep.subr.mxu0 0.0
  %2127 = vmatpush1.msra.mxu0 0.0
  %2128 = vmatprep.subr.mxu0 0.0
  %2129 = vmatpush1.msra.mxu0 0.0
  %2130 = vmatprep.subr.mxu0 0.0
  %2131 = vmatpush1.msra.mxu0 0.0
  %2132 = vmatprep.subr.mxu0 0.0
  %2133 = vmatpush1.msra.mxu0 0.0
  %2134 = vmatprep.subr.mxu0 0.0
  %2135 = vmatpush1.msra.mxu0 0.0
  %2136 = vmatprep.subr.mxu0 0.0
  %2137 = vmatpush1.msra.mxu0 0.0
  %2138 = vmatprep.subr.mxu0 0.0
  %2139 = vmatpush1.msra.mxu0 0.0
  %2140 = vmatprep.subr.mxu0 0.0
  %2141 = vmatpush1.msra.mxu0 0.0
  %2142 = vmatprep.subr.mxu0 0.0
  %2143 = vmatpush1.msra.mxu0 0.0
  %2144 = vmatprep.subr.mxu0 %v1163
  %2145 = vmatpush1.msra.mxu0 %v1162
  %2146 = vmatprep.subr.mxu0 0.0
  %2147 = vmatpush2.msra.mxu0 0.0
  %2148 = vmatprep.subr.mxu0 0.0
  %2149 = vmatpush2.msra.mxu0 0.0
  %2150 = vmatprep.subr.mxu0 0.0
  %2151 = vmatpush2.msra.mxu0 0.0
  %2152 = vmatprep.subr.mxu0 0.0
  %2153 = vmatpush2.msra.mxu0 0.0
  %2154 = vmatprep.subr.mxu0 0.0
  %2155 = vmatpush2.msra.mxu0 0.0
  %2156 = vmatprep.subr.mxu0 0.0
  %2157 = vmatpush2.msra.mxu0 0.0
  %2158 = vmatprep.subr.mxu0 0.0
  %2159 = vmatpush2.msra.mxu0 0.0
  %2160 = vmatprep.subr.mxu0 0.0
  %2161 = vmatpush2.msra.mxu0 0.0
  %2162 = vmatprep.subr.mxu0 0.0
  %2163 = vmatpush2.msra.mxu0 0.0
  %2164 = vmatprep.subr.mxu0 0.0
  %2165 = vmatpush2.msra.mxu0 0.0
  %2166 = vmatprep.subr.mxu0 0.0
  %2167 = vmatpush2.msra.mxu0 0.0
  %2168 = vmatprep.subr.mxu0 0.0
  %2169 = vmatpush2.msra.mxu0 0.0
  %2170 = vmatprep.subr.mxu0 0.0
  %2171 = vmatpush2.msra.mxu0 0.0
  %2172 = vmatprep.subr.mxu0 0.0
  %2173 = vmatpush2.msra.mxu0 0.0
  %2174 = vmatprep.subr.mxu0 0.0
  %2175 = vmatpush2.msra.mxu0 0.0
  %2176 = vmatprep.subr.mxu0 0.0
  %2177 = vmatpush2.msra.mxu0 0.0
  %2178 = vmatprep.mubr.f32.mxu0 0.0
  %2179 = vmatmul.mubr.f32.gmra.mxu0 %v2112
  %v2180 = vpop.f32.mrf.mxu0
  %v2181 = vadd.f32 0.0, %v2180
  %v2182 = vpop.f32.mrf.mxu0
  %v2183 = vadd.f32 0.0, %v2182
  %2184 = vdwg.mxu0
  %2185 = vmatprep.subr.mxu0 0.0
  %2186 = vmatpush1.msra.mxu0 0.0
  %2187 = vmatprep.subr.mxu0 0.0
  %2188 = vmatpush1.msra.mxu0 0.0
  %2189 = vmatprep.subr.mxu0 0.0
  %2190 = vmatpush1.msra.mxu0 0.0
  %2191 = vmatprep.subr.mxu0 0.0
  %2192 = vmatpush1.msra.mxu0 0.0
  %2193 = vmatprep.subr.mxu0 0.0
  %2194 = vmatpush1.msra.mxu0 0.0
  %2195 = vmatprep.subr.mxu0 0.0
  %2196 = vmatpush1.msra.mxu0 0.0
  %2197 = vmatprep.subr.mxu0 0.0
  %2198 = vmatpush1.msra.mxu0 0.0
  %2199 = vmatprep.subr.mxu0 0.0
  %2200 = vmatpush1.msra.mxu0 0.0
  %2201 = vmatprep.subr.mxu0 0.0
  %2202 = vmatpush1.msra.mxu0 0.0
  %2203 = vmatprep.subr.mxu0 0.0
  %2204 = vmatpush1.msra.mxu0 0.0
  %2205 = vmatprep.subr.mxu0 0.0
  %2206 = vmatpush1.msra.mxu0 0.0
  %2207 = vmatprep.subr.mxu0 0.0
  %2208 = vmatpush1.msra.mxu0 0.0
  %2209 = vmatprep.subr.mxu0 0.0
  %2210 = vmatpush1.msra.mxu0 0.0
  %2211 = vmatprep.subr.mxu0 0.0
  %2212 = vmatpush1.msra.mxu0 0.0
  %2213 = vmatprep.subr.mxu0 0.0
  %2214 = vmatpush1.msra.mxu0 0.0
  %2215 = vmatprep.subr.mxu0 %v1165
  %2216 = vmatpush1.msra.mxu0 %v1164
  %2217 = vmatprep.subr.mxu0 0.0
  %2218 = vmatpush2.msra.mxu0 0.0
  %2219 = vmatprep.subr.mxu0 0.0
  %2220 = vmatpush2.msra.mxu0 0.0
  %2221 = vmatprep.subr.mxu0 0.0
  %2222 = vmatpush2.msra.mxu0 0.0
  %2223 = vmatprep.subr.mxu0 0.0
  %2224 = vmatpush2.msra.mxu0 0.0
  %2225 = vmatprep.subr.mxu0 0.0
  %2226 = vmatpush2.msra.mxu0 0.0
  %2227 = vmatprep.subr.mxu0 0.0
  %2228 = vmatpush2.msra.mxu0 0.0
  %2229 = vmatprep.subr.mxu0 0.0
  %2230 = vmatpush2.msra.mxu0 0.0
  %2231 = vmatprep.subr.mxu0 0.0
  %2232 = vmatpush2.msra.mxu0 0.0
  %2233 = vmatprep.subr.mxu0 0.0
  %2234 = vmatpush2.msra.mxu0 0.0
  %2235 = vmatprep.subr.mxu0 0.0
  %2236 = vmatpush2.msra.mxu0 0.0
  %2237 = vmatprep.subr.mxu0 0.0
  %2238 = vmatpush2.msra.mxu0 0.0
  %2239 = vmatprep.subr.mxu0 0.0
  %2240 = vmatpush2.msra.mxu0 0.0
  %2241 = vmatprep.subr.mxu0 0.0
  %2242 = vmatpush2.msra.mxu0 0.0
  %2243 = vmatprep.subr.mxu0 0.0
  %2244 = vmatpush2.msra.mxu0 0.0
  %2245 = vmatprep.subr.mxu0 0.0
  %2246 = vmatpush2.msra.mxu0 0.0
  %2247 = vmatprep.subr.mxu0 0.0
  %2248 = vmatpush2.msra.mxu0 0.0
  %2249 = vmatprep.mubr.f32.mxu0 0.0
  %2250 = vmatmul.mubr.f32.gmra.mxu0 %v2112
  %v2251 = vpop.f32.mrf.mxu0
  %v2252 = vadd.f32 0.0, %v2251
  %v2253 = vpop.f32.mrf.mxu0
  %v2254 = vadd.f32 0.0, %v2253
  %2255 = vdwg.mxu0
  %2257 = vrot.lane.b32.xlu0 %v2107, 120
  %v2258 = vpop.permute.xlu0 %2257
  %v2259 = vsel %vm1166, %v2258, 0
  %2261 = vmatprep.subr.mxu0 0.0
  %2262 = vmatpush1.msra.mxu0 0.0
  %2263 = vmatprep.subr.mxu0 0.0
  %2264 = vmatpush1.msra.mxu0 0.0
  %2265 = vmatprep.subr.mxu0 0.0
  %2266 = vmatpush1.msra.mxu0 0.0
  %2267 = vmatprep.subr.mxu0 0.0
  %2268 = vmatpush1.msra.mxu0 0.0
  %2269 = vmatprep.subr.mxu0 0.0
  %2270 = vmatpush1.msra.mxu0 0.0
  %2271 = vmatprep.subr.mxu0 0.0
  %2272 = vmatpush1.msra.mxu0 0.0
  %2273 = vmatprep.subr.mxu0 0.0
  %2274 = vmatpush1.msra.mxu0 0.0
  %2275 = vmatprep.subr.mxu0 0.0
  %2276 = vmatpush1.msra.mxu0 0.0
  %2277 = vmatprep.subr.mxu0 0.0
  %2278 = vmatpush1.msra.mxu0 0.0
  %2279 = vmatprep.subr.mxu0 0.0
  %2280 = vmatpush1.msra.mxu0 0.0
  %2281 = vmatprep.subr.mxu0 0.0
  %2282 = vmatpush1.msra.mxu0 0.0
  %2283 = vmatprep.subr.mxu0 0.0
  %2284 = vmatpush1.msra.mxu0 0.0
  %2285 = vmatprep.subr.mxu0 0.0
  %2286 = vmatpush1.msra.mxu0 0.0
  %2287 = vmatprep.subr.mxu0 0.0
  %2288 = vmatpush1.msra.mxu0 0.0
  %2289 = vmatprep.subr.mxu0 0.0
  %2290 = vmatpush1.msra.mxu0 0.0
  %2291 = vmatprep.subr.mxu0 %v1163
  %2292 = vmatpush1.msra.mxu0 %v1162
  %2293 = vmatprep.subr.mxu0 0.0
  %2294 = vmatpush2.msra.mxu0 0.0
  %2295 = vmatprep.subr.mxu0 0.0
  %2296 = vmatpush2.msra.mxu0 0.0
  %2297 = vmatprep.subr.mxu0 0.0
  %2298 = vmatpush2.msra.mxu0 0.0
  %2299 = vmatprep.subr.mxu0 0.0
  %2300 = vmatpush2.msra.mxu0 0.0
  %2301 = vmatprep.subr.mxu0 0.0
  %2302 = vmatpush2.msra.mxu0 0.0
  %2303 = vmatprep.subr.mxu0 0.0
  %2304 = vmatpush2.msra.mxu0 0.0
  %2305 = vmatprep.subr.mxu0 0.0
  %2306 = vmatpush2.msra.mxu0 0.0
  %2307 = vmatprep.subr.mxu0 0.0
  %2308 = vmatpush2.msra.mxu0 0.0
  %2309 = vmatprep.subr.mxu0 0.0
  %2310 = vmatpush2.msra.mxu0 0.0
  %2311 = vmatprep.subr.mxu0 0.0
  %2312 = vmatpush2.msra.mxu0 0.0
  %2313 = vmatprep.subr.mxu0 0.0
  %2314 = vmatpush2.msra.mxu0 0.0
  %2315 = vmatprep.subr.mxu0 0.0
  %2316 = vmatpush2.msra.mxu0 0.0
  %2317 = vmatprep.subr.mxu0 0.0
  %2318 = vmatpush2.msra.mxu0 0.0
  %2319 = vmatprep.subr.mxu0 0.0
  %2320 = vmatpush2.msra.mxu0 0.0
  %2321 = vmatprep.subr.mxu0 0.0
  %2322 = vmatpush2.msra.mxu0 0.0
  %2323 = vmatprep.subr.mxu0 0.0
  %2324 = vmatpush2.msra.mxu0 0.0
  %2325 = vmatprep.mubr.f32.mxu0 0.0
  %2326 = vmatmul.mubr.f32.gmra.mxu0 %v2259
  %v2327 = vpop.f32.mrf.mxu0
  %v2328 = vadd.f32 0.0, %v2327
  %v2329 = vpop.f32.mrf.mxu0
  %v2330 = vadd.f32 0.0, %v2329
  %2331 = vdwg.mxu0
  %2332 = vmatprep.subr.mxu0 0.0
  %2333 = vmatpush1.msra.mxu0 0.0
  %2334 = vmatprep.subr.mxu0 0.0
  %2335 = vmatpush1.msra.mxu0 0.0
  %2336 = vmatprep.subr.mxu0 0.0
  %2337 = vmatpush1.msra.mxu0 0.0
  %2338 = vmatprep.subr.mxu0 0.0
  %2339 = vmatpush1.msra.mxu0 0.0
  %2340 = vmatprep.subr.mxu0 0.0
  %2341 = vmatpush1.msra.mxu0 0.0
  %2342 = vmatprep.subr.mxu0 0.0
  %2343 = vmatpush1.msra.mxu0 0.0
  %2344 = vmatprep.subr.mxu0 0.0
  %2345 = vmatpush1.msra.mxu0 0.0
  %2346 = vmatprep.subr.mxu0 0.0
  %2347 = vmatpush1.msra.mxu0 0.0
  %2348 = vmatprep.subr.mxu0 0.0
  %2349 = vmatpush1.msra.mxu0 0.0
  %2350 = vmatprep.subr.mxu0 0.0
  %2351 = vmatpush1.msra.mxu0 0.0
  %2352 = vmatprep.subr.mxu0 0.0
  %2353 = vmatpush1.msra.mxu0 0.0
  %2354 = vmatprep.subr.mxu0 0.0
  %2355 = vmatpush1.msra.mxu0 0.0
  %2356 = vmatprep.subr.mxu0 0.0
  %2357 = vmatpush1.msra.mxu0 0.0
  %2358 = vmatprep.subr.mxu0 0.0
  %2359 = vmatpush1.msra.mxu0 0.0
  %2360 = vmatprep.subr.mxu0 0.0
  %2361 = vmatpush1.msra.mxu0 0.0
  %2362 = vmatprep.subr.mxu0 %v1165
  %2363 = vmatpush1.msra.mxu0 %v1164
  %2364 = vmatprep.subr.mxu0 0.0
  %2365 = vmatpush2.msra.mxu0 0.0
  %2366 = vmatprep.subr.mxu0 0.0
  %2367 = vmatpush2.msra.mxu0 0.0
  %2368 = vmatprep.subr.mxu0 0.0
  %2369 = vmatpush2.msra.mxu0 0.0
  %2370 = vmatprep.subr.mxu0 0.0
  %2371 = vmatpush2.msra.mxu0 0.0
  %2372 = vmatprep.subr.mxu0 0.0
  %2373 = vmatpush2.msra.mxu0 0.0
  %2374 = vmatprep.subr.mxu0 0.0
  %2375 = vmatpush2.msra.mxu0 0.0
  %2376 = vmatprep.subr.mxu0 0.0
  %2377 = vmatpush2.msra.mxu0 0.0
  %2378 = vmatprep.subr.mxu0 0.0
  %2379 = vmatpush2.msra.mxu0 0.0
  %2380 = vmatprep.subr.mxu0 0.0
  %2381 = vmatpush2.msra.mxu0 0.0
  %2382 = vmatprep.subr.mxu0 0.0
  %2383 = vmatpush2.msra.mxu0 0.0
  %2384 = vmatprep.subr.mxu0 0.0
  %2385 = vmatpush2.msra.mxu0 0.0
  %2386 = vmatprep.subr.mxu0 0.0
  %2387 = vmatpush2.msra.mxu0 0.0
  %2388 = vmatprep.subr.mxu0 0.0
  %2389 = vmatpush2.msra.mxu0 0.0
  %2390 = vmatprep.subr.mxu0 0.0
  %2391 = vmatpush2.msra.mxu0 0.0
  %2392 = vmatprep.subr.mxu0 0.0
  %2393 = vmatpush2.msra.mxu0 0.0
  %2394 = vmatprep.subr.mxu0 0.0
  %2395 = vmatpush2.msra.mxu0 0.0
  %2396 = vmatprep.mubr.f32.mxu0 0.0
  %2397 = vmatmul.mubr.f32.gmra.mxu0 %v2259
  %v2398 = vpop.f32.mrf.mxu0
  %v2399 = vadd.f32 0.0, %v2398
  %v2400 = vpop.f32.mrf.mxu0
  %v2401 = vadd.f32 0.0, %v2400
  %2402 = vdwg.mxu0
  %v2403 = vlaneseq
  %v2404 = vshrl.u32 %v2403, 7
  %v2405 = vsub.s32 0, %v2404
  %v2406 = vrot.slane %v2181, %v2405
  %v2407 = vlaneseq
  %v2408 = vshrl.u32 %v2407, 7
  %v2409 = vsub.s32 0, %v2408
  %v2410 = vrot.slane %v2183, %v2409
  %v2411 = vlaneseq
  %v2412 = vshrl.u32 %v2411, 7
  %v2413 = vsub.s32 0, %v2412
  %v2414 = vrot.slane %v2252, %v2413
  %v2415 = vlaneseq
  %v2416 = vshrl.u32 %v2415, 7
  %v2417 = vsub.s32 0, %v2416
  %v2418 = vrot.slane %v2254, %v2417
  %v2419 = vmul.f32 %v1813, %v2406
  %v2420 = vmul.f32 %v1814, %v2410
  %v2421 = vmul.f32 %v1815, %v2414
  %v2422 = vmul.f32 %v1816, %v2418
  %v2423 = vlaneseq
  %v2424 = vshrl.u32 %v2423, 7
  %v2425 = vsub.s32 0, %v2424
  %v2426 = vrot.slane %v2328, %v2425
  %v2427 = vlaneseq
  %v2428 = vshrl.u32 %v2427, 7
  %v2429 = vsub.s32 0, %v2428
  %v2430 = vrot.slane %v2330, %v2429
  %v2431 = vlaneseq
  %v2432 = vshrl.u32 %v2431, 7
  %v2433 = vsub.s32 0, %v2432
  %v2434 = vrot.slane %v2399, %v2433
  %v2435 = vlaneseq
  %v2436 = vshrl.u32 %v2435, 7
  %v2437 = vsub.s32 0, %v2436
  %v2438 = vrot.slane %v2401, %v2437
  %v2439 = vadd.f32 %v2419, %v2426
  %v2440 = vadd.f32 %v2420, %v2430
  %v2441 = vadd.f32 %v2421, %v2434
  %v2442 = vadd.f32 %v2422, %v2438
  %v2443 = vmax.f32 %v2439, 0.0
  %v2444 = vmax.f32 %v2440, 0.0
  %v2445 = vmax.f32 %v2441, 0.0
  %v2446 = vmax.f32 %v2442, 0.0
  %v2448 = vsel %vm1166, %v2446, 0
  %2450 = vmatprep.subr.mxu0 0.0
  %2451 = vmatpush1.msra.mxu0 %v1128
  %2452 = vmatprep.subr.mxu0 0.0
  %2453 = vmatpush1.msra.mxu0 %v1127
  %2454 = vmatprep.subr.mxu0 0.0
  %2455 = vmatpush1.msra.mxu0 %v1126
  %2456 = vmatprep.subr.mxu0 0.0
  %2457 = vmatpush1.msra.mxu0 %v1125
  %2458 = vmatprep.subr.mxu0 0.0
  %2459 = vmatpush1.msra.mxu0 %v1124
  %2460 = vmatprep.subr.mxu0 0.0
  %2461 = vmatpush1.msra.mxu0 %v1123
  %2462 = vmatprep.subr.mxu0 0.0
  %2463 = vmatpush1.msra.mxu0 %v1122
  %2464 = vmatprep.subr.mxu0 0.0
  %2465 = vmatpush1.msra.mxu0 %v1121
  %2466 = vmatprep.subr.mxu0 0.0
  %2467 = vmatpush1.msra.mxu0 %v1120
  %2468 = vmatprep.subr.mxu0 0.0
  %2469 = vmatpush1.msra.mxu0 %v1119
  %2470 = vmatprep.subr.mxu0 0.0
  %2471 = vmatpush1.msra.mxu0 %v1118
  %2472 = vmatprep.subr.mxu0 0.0
  %2473 = vmatpush1.msra.mxu0 %v1117
  %2474 = vmatprep.subr.mxu0 0.0
  %2475 = vmatpush1.msra.mxu0 %v1116
  %2476 = vmatprep.subr.mxu0 0.0
  %2477 = vmatpush1.msra.mxu0 %v1115
  %2478 = vmatprep.subr.mxu0 0.0
  %2479 = vmatpush1.msra.mxu0 %v1114
  %2480 = vmatprep.subr.mxu0 0.0
  %2481 = vmatpush1.msra.mxu0 %v1113
  %2482 = vmatprep.subr.mxu0 0.0
  %2483 = vmatpush2.msra.mxu0 %v1144
  %2484 = vmatprep.subr.mxu0 0.0
  %2485 = vmatpush2.msra.mxu0 %v1143
  %2486 = vmatprep.subr.mxu0 0.0
  %2487 = vmatpush2.msra.mxu0 %v1142
  %2488 = vmatprep.subr.mxu0 0.0
  %2489 = vmatpush2.msra.mxu0 %v1141
  %2490 = vmatprep.subr.mxu0 0.0
  %2491 = vmatpush2.msra.mxu0 %v1140
  %2492 = vmatprep.subr.mxu0 0.0
  %2493 = vmatpush2.msra.mxu0 %v1139
  %2494 = vmatprep.subr.mxu0 0.0
  %2495 = vmatpush2.msra.mxu0 %v1138
  %2496 = vmatprep.subr.mxu0 0.0
  %2497 = vmatpush2.msra.mxu0 %v1137
  %2498 = vmatprep.subr.mxu0 0.0
  %2499 = vmatpush2.msra.mxu0 %v1136
  %2500 = vmatprep.subr.mxu0 0.0
  %2501 = vmatpush2.msra.mxu0 %v1135
  %2502 = vmatprep.subr.mxu0 0.0
  %2503 = vmatpush2.msra.mxu0 %v1134
  %2504 = vmatprep.subr.mxu0 0.0
  %2505 = vmatpush2.msra.mxu0 %v1133
  %2506 = vmatprep.subr.mxu0 0.0
  %2507 = vmatpush2.msra.mxu0 %v1132
  %2508 = vmatprep.subr.mxu0 0.0
  %2509 = vmatpush2.msra.mxu0 %v1131
  %2510 = vmatprep.subr.mxu0 0.0
  %2511 = vmatpush2.msra.mxu0 %v1130
  %2512 = vmatprep.subr.mxu0 0.0
  %2513 = vmatpush2.msra.mxu0 %v1129
  %2514 = vmatprep.mubr.f32.mxu0 %v2444
  %2515 = vmatmul.mubr.f32.gmra.mxu0 %v2443
  %v2516 = vpop.f32.mrf.mxu0
  %v2517 = vadd.f32 0.0, %v2516
  %v2518 = vpop.f32.mrf.mxu0
  %2519 = vdwg.mxu0
  %2520 = vmatprep.subr.mxu0 0.0
  %2521 = vmatpush1.msra.mxu0 %v1160
  %2522 = vmatprep.subr.mxu0 0.0
  %2523 = vmatpush1.msra.mxu0 %v1159
  %2524 = vmatprep.subr.mxu0 0.0
  %2525 = vmatpush1.msra.mxu0 %v1158
  %2526 = vmatprep.subr.mxu0 0.0
  %2527 = vmatpush1.msra.mxu0 %v1157
  %2528 = vmatprep.subr.mxu0 0.0
  %2529 = vmatpush1.msra.mxu0 %v1156
  %2530 = vmatprep.subr.mxu0 0.0
  %2531 = vmatpush1.msra.mxu0 %v1155
  %2532 = vmatprep.subr.mxu0 0.0
  %2533 = vmatpush1.msra.mxu0 %v1154
  %2534 = vmatprep.subr.mxu0 0.0
  %2535 = vmatpush1.msra.mxu0 %v1153
  %2536 = vmatprep.subr.mxu0 0.0
  %2537 = vmatpush1.msra.mxu0 %v1152
  %2538 = vmatprep.subr.mxu0 0.0
  %2539 = vmatpush1.msra.mxu0 %v1151
  %2540 = vmatprep.subr.mxu0 0.0
  %2541 = vmatpush1.msra.mxu0 %v1150
  %2542 = vmatprep.subr.mxu0 0.0
  %2543 = vmatpush1.msra.mxu0 %v1149
  %2544 = vmatprep.subr.mxu0 0.0
  %2545 = vmatpush1.msra.mxu0 %v1148
  %2546 = vmatprep.subr.mxu0 0.0
  %2547 = vmatpush1.msra.mxu0 %v1147
  %2548 = vmatprep.subr.mxu0 0.0
  %2549 = vmatpush1.msra.mxu0 %v1146
  %2550 = vmatprep.subr.mxu0 0.0
  %2551 = vmatpush1.msra.mxu0 %v1145
  %2552 = vmatprep.subr.mxu0 0.0
  %2553 = vmatpush2.msra.mxu0 0.0
  %2554 = vmatprep.subr.mxu0 0.0
  %2555 = vmatpush2.msra.mxu0 0.0
  %2556 = vmatprep.subr.mxu0 0.0
  %2557 = vmatpush2.msra.mxu0 0.0
  %2558 = vmatprep.subr.mxu0 0.0
  %2559 = vmatpush2.msra.mxu0 0.0
  %2560 = vmatprep.subr.mxu0 0.0
  %2561 = vmatpush2.msra.mxu0 0.0
  %2562 = vmatprep.subr.mxu0 0.0
  %2563 = vmatpush2.msra.mxu0 0.0
  %2564 = vmatprep.subr.mxu0 0.0
  %2565 = vmatpush2.msra.mxu0 0.0
  %2566 = vmatprep.subr.mxu0 0.0
  %2567 = vmatpush2.msra.mxu0 0.0
  %2568 = vmatprep.subr.mxu0 0.0
  %2569 = vmatpush2.msra.mxu0 0.0
  %2570 = vmatprep.subr.mxu0 0.0
  %2571 = vmatpush2.msra.mxu0 0.0
  %2572 = vmatprep.subr.mxu0 0.0
  %2573 = vmatpush2.msra.mxu0 0.0
  %2574 = vmatprep.subr.mxu0 0.0
  %2575 = vmatpush2.msra.mxu0 0.0
  %2576 = vmatprep.subr.mxu0 0.0
  %2577 = vmatpush2.msra.mxu0 0.0
  %2578 = vmatprep.subr.mxu0 0.0
  %2579 = vmatpush2.msra.mxu0 0.0
  %2580 = vmatprep.subr.mxu0 0.0
  %2581 = vmatpush2.msra.mxu0 0.0
  %2582 = vmatprep.subr.mxu0 0.0
  %2583 = vmatpush2.msra.mxu0 %v1161
  %2584 = vmatprep.mubr.f32.mxu0 %v2448
  %2585 = vmatmul.mubr.f32.gmra.mxu0 %v2445
  %v2586 = vpop.f32.mrf.mxu0
  %v2587 = vadd.f32 %v2517, %v2586
  %v2588 = vpop.f32.mrf.mxu0
  %2589 = vdwg.mxu0
  %2590 = vmatprep.subr.mxu0 0.0
  %2591 = vmatpush1.msra.mxu0 0.0
  %2592 = vmatprep.subr.mxu0 0.0
  %2593 = vmatpush1.msra.mxu0 0.0
  %2594 = vmatprep.subr.mxu0 0.0
  %2595 = vmatpush1.msra.mxu0 0.0
  %2596 = vmatprep.subr.mxu0 0.0
  %2597 = vmatpush1.msra.mxu0 0.0
  %2598 = vmatprep.subr.mxu0 0.0
  %2599 = vmatpush1.msra.mxu0 0.0
  %2600 = vmatprep.subr.mxu0 0.0
  %2601 = vmatpush1.msra.mxu0 0.0
  %2602 = vmatprep.subr.mxu0 0.0
  %2603 = vmatpush1.msra.mxu0 0.0
  %2604 = vmatprep.subr.mxu0 0.0
  %2605 = vmatpush1.msra.mxu0 0.0
  %2606 = vmatprep.subr.mxu0 0.0
  %2607 = vmatpush1.msra.mxu0 0.0
  %2608 = vmatprep.subr.mxu0 0.0
  %2609 = vmatpush1.msra.mxu0 0.0
  %2610 = vmatprep.subr.mxu0 0.0
  %2611 = vmatpush1.msra.mxu0 0.0
  %2612 = vmatprep.subr.mxu0 0.0
  %2613 = vmatpush1.msra.mxu0 0.0
  %2614 = vmatprep.subr.mxu0 0.0
  %2615 = vmatpush1.msra.mxu0 0.0
  %2616 = vmatprep.subr.mxu0 0.0
  %2617 = vmatpush1.msra.mxu0 0.0
  %2618 = vmatprep.subr.mxu0 0.0
  %2619 = vmatpush1.msra.mxu0 0.0
  %2620 = vmatprep.subr.mxu0 0.0
  %2621 = vmatpush1.msra.mxu0 %v2587
  %2622 = vmatprep.subr.mxu0 0.0
  %2623 = vmatpush2.msra.mxu0 0.0
  %2624 = vmatprep.subr.mxu0 0.0
  %2625 = vmatpush2.msra.mxu0 0.0
  %2626 = vmatprep.subr.mxu0 0.0
  %2627 = vmatpush2.msra.mxu0 0.0
  %2628 = vmatprep.subr.mxu0 0.0
  %2629 = vmatpush2.msra.mxu0 0.0
  %2630 = vmatprep.subr.mxu0 0.0
  %2631 = vmatpush2.msra.mxu0 0.0
  %2632 = vmatprep.subr.mxu0 0.0
  %2633 = vmatpush2.msra.mxu0 0.0
  %2634 = vmatprep.subr.mxu0 0.0
  %2635 = vmatpush2.msra.mxu0 0.0
  %2636 = vmatprep.subr.mxu0 0.0
  %2637 = vmatpush2.msra.mxu0 0.0
  %2638 = vmatprep.subr.mxu0 0.0
  %2639 = vmatpush2.msra.mxu0 0.0
  %2640 = vmatprep.subr.mxu0 0.0
  %2641 = vmatpush2.msra.mxu0 0.0
  %2642 = vmatprep.subr.mxu0 0.0
  %2643 = vmatpush2.msra.mxu0 0.0
  %2644 = vmatprep.subr.mxu0 0.0
  %2645 = vmatpush2.msra.mxu0 0.0
  %2646 = vmatprep.subr.mxu0 0.0
  %2647 = vmatpush2.msra.mxu0 0.0
  %2648 = vmatprep.subr.mxu0 0.0
  %2649 = vmatpush2.msra.mxu0 0.0
  %2650 = vmatprep.subr.mxu0 0.0
  %2651 = vmatpush2.msra.mxu0 0.0
  %2652 = vmatprep.subr.mxu0 0.0
  %2653 = vmatpush2.msra.mxu0 0.0
  %2654 = vmatprep.mubr.f32.mxu0 0.0
  %2655 = vmatmul.mubr.f32.gmra.mxu0 %v1168
  %v2656 = vpop.f32.mrf.mxu0
  %v2657 = vadd.f32 0.0, %v2656
  %v2658 = vpop.f32.mrf.mxu0
  %2659 = vdwg.mxu0
  %vm2660 = vcmask 65536
  %v2661 = vsel %vm2660, %v2657, 0.0
  %2662 = vadd.xlane.f32.xlu0 %v2661
  %v2663 = vpop.xlane.xlu0 %2662
  %v2664 = vmul.f32 %v2663, 0.055555556
  %v2665 = vlaneseq
  %v2666 = vshrl.u32 %v2665, 7
  %v2667 = vsub.s32 0, %v2666
  %v2668 = vrot.slane %v2664, %v2667
  %v2669 = vsub.f32 %v2587, %v2668
  %v2670 = vmul.f32 %v2669, %v2669
  %2671 = vmatprep.subr.mxu0 0.0
  %2672 = vmatpush1.msra.mxu0 0.0
  %2673 = vmatprep.subr.mxu0 0.0
  %2674 = vmatpush1.msra.mxu0 0.0
  %2675 = vmatprep.subr.mxu0 0.0
  %2676 = vmatpush1.msra.mxu0 0.0
  %2677 = vmatprep.subr.mxu0 0.0
  %2678 = vmatpush1.msra.mxu0 0.0
  %2679 = vmatprep.subr.mxu0 0.0
  %2680 = vmatpush1.msra.mxu0 0.0
  %2681 = vmatprep.subr.mxu0 0.0
  %2682 = vmatpush1.msra.mxu0 0.0
  %2683 = vmatprep.subr.mxu0 0.0
  %2684 = vmatpush1.msra.mxu0 0.0
  %2685 = vmatprep.subr.mxu0 0.0
  %2686 = vmatpush1.msra.mxu0 0.0
  %2687 = vmatprep.subr.mxu0 0.0
  %2688 = vmatpush1.msra.mxu0 0.0
  %2689 = vmatprep.subr.mxu0 0.0
  %2690 = vmatpush1.msra.mxu0 0.0
  %2691 = vmatprep.subr.mxu0 0.0
  %2692 = vmatpush1.msra.mxu0 0.0
  %2693 = vmatprep.subr.mxu0 0.0
  %2694 = vmatpush1.msra.mxu0 0.0
  %2695 = vmatprep.subr.mxu0 0.0
  %2696 = vmatpush1.msra.mxu0 0.0
  %2697 = vmatprep.subr.mxu0 0.0
  %2698 = vmatpush1.msra.mxu0 0.0
  %2699 = vmatprep.subr.mxu0 0.0
  %2700 = vmatpush1.msra.mxu0 0.0
  %2701 = vmatprep.subr.mxu0 0.0
  %2702 = vmatpush1.msra.mxu0 %v2670
  %2703 = vmatprep.subr.mxu0 0.0
  %2704 = vmatpush2.msra.mxu0 0.0
  %2705 = vmatprep.subr.mxu0 0.0
  %2706 = vmatpush2.msra.mxu0 0.0
  %2707 = vmatprep.subr.mxu0 0.0
  %2708 = vmatpush2.msra.mxu0 0.0
  %2709 = vmatprep.subr.mxu0 0.0
  %2710 = vmatpush2.msra.mxu0 0.0
  %2711 = vmatprep.subr.mxu0 0.0
  %2712 = vmatpush2.msra.mxu0 0.0
  %2713 = vmatprep.subr.mxu0 0.0
  %2714 = vmatpush2.msra.mxu0 0.0
  %2715 = vmatprep.subr.mxu0 0.0
  %2716 = vmatpush2.msra.mxu0 0.0
  %2717 = vmatprep.subr.mxu0 0.0
  %2718 = vmatpush2.msra.mxu0 0.0
  %2719 = vmatprep.subr.mxu0 0.0
  %2720 = vmatpush2.msra.mxu0 0.0
  %2721 = vmatprep.subr.mxu0 0.0
  %2722 = vmatpush2.msra.mxu0 0.0
  %2723 = vmatprep.subr.mxu0 0.0
  %2724 = vmatpush2.msra.mxu0 0.0
  %2725 = vmatprep.subr.mxu0 0.0
  %2726 = vmatpush2.msra.mxu0 0.0
  %2727 = vmatprep.subr.mxu0 0.0
  %2728 = vmatpush2.msra.mxu0 0.0
  %2729 = vmatprep.subr.mxu0 0.0
  %2730 = vmatpush2.msra.mxu0 0.0
  %2731 = vmatprep.subr.mxu0 0.0
  %2732 = vmatpush2.msra.mxu0 0.0
  %2733 = vmatprep.subr.mxu0 0.0
  %2734 = vmatpush2.msra.mxu0 0.0
  %2735 = vmatprep.mubr.f32.mxu0 0.0
  %2736 = vmatmul.mubr.f32.gmra.mxu0 %v1168
  %v2737 = vpop.f32.mrf.mxu0
  %v2738 = vadd.f32 0.0, %v2737
  %v2739 = vpop.f32.mrf.mxu0
  %2740 = vdwg.mxu0
  %v2741 = vsel %vm2660, %v2738, 0.0
  %2742 = vadd.xlane.f32.xlu0 %v2741
  %v2743 = vpop.xlane.xlu0 %2742
  %v2744 = vmul.f32 %v2743, 0.055555556
  %v2745 = vadd.f32 %v2744, 1e-05
  %v2746 = vrsqrt.pop %v2745
  %v2747 = vmul.f32 %v2107, %v2746
  %2749 = vrot.lane.b32.xlu0 %v2747, 112
  %v2750 = vpop.permute.xlu0 %2749
  %s2751 = vtos %v2750
  %v2752 = vstv %s2751
  %v2754 = vmul.f32 %v2669, %v2752
  %2755 = vrot.lane.b32.xlu0 %v2107, 111
  %v2756 = vpop.permute.xlu0 %2755
  %s2757 = vtos %v2756
  %v2758 = vstv %s2757
  %v2760 = vadd.f32 %v2754, %v2758
  %v2761 = vmax.f32 %v2760, 0.0
  %v2762 = vld [vmem:[%s4 + $0x8] sm:$0xff]
  %v2763 = vld [vmem:[%s4 + $0x10] sm:$0x1]
  %v2764 = vld [vmem:[%s4 + $0x1] sm:$0x1]
  %v2765 = vlaneseq
  %v2766 = vshrl.u32 %v2765, 7
  %v2767 = vsub.s32 0, %v2766
  %v2768 = vrot.slane %v2764, %v2767
  %vm2769 = vcmask 72704
  %v2771 = vsel %vm2769, %v2761, 0
  %vm2773 = vcmask 1040384
  %v2775 = vsel %vm2773, %v2763, 0
  %2777 = vmatprep.subr.mxu0 0.0
  %2778 = vmatpush1.msra.mxu0 0.0
  %2779 = vmatprep.subr.mxu0 0.0
  %2780 = vmatpush1.msra.mxu0 0.0
  %2781 = vmatprep.subr.mxu0 0.0
  %2782 = vmatpush1.msra.mxu0 0.0
  %2783 = vmatprep.subr.mxu0 0.0
  %2784 = vmatpush1.msra.mxu0 0.0
  %2785 = vmatprep.subr.mxu0 0.0
  %2786 = vmatpush1.msra.mxu0 0.0
  %2787 = vmatprep.subr.mxu0 0.0
  %2788 = vmatpush1.msra.mxu0 0.0
  %2789 = vmatprep.subr.mxu0 0.0
  %2790 = vmatpush1.msra.mxu0 0.0
  %2791 = vmatprep.subr.mxu0 0.0
  %2792 = vmatpush1.msra.mxu0 0.0
  %2793 = vmatprep.subr.mxu0 0.0
  %2794 = vmatpush1.msra.mxu0 0.0
  %2795 = vmatprep.subr.mxu0 0.0
  %2796 = vmatpush1.msra.mxu0 0.0
  %2797 = vmatprep.subr.mxu0 0.0
  %2798 = vmatpush1.msra.mxu0 0.0
  %2799 = vmatprep.subr.mxu0 0.0
  %2800 = vmatpush1.msra.mxu0 0.0
  %2801 = vmatprep.subr.mxu0 0.0
  %2802 = vmatpush1.msra.mxu0 0.0
  %2803 = vmatprep.subr.mxu0 0.0
  %2804 = vmatpush1.msra.mxu0 0.0
  %2805 = vmatprep.subr.mxu0 0.0
  %2806 = vmatpush1.msra.mxu0 %v2775
  %2807 = vmatprep.subr.mxu0 0.0
  %2808 = vmatpush1.msra.mxu0 %v2762
  %2809 = vmatprep.subr.mxu0 0.0
  %2810 = vmatpush2.msra.mxu0 0.0
  %2811 = vmatprep.subr.mxu0 0.0
  %2812 = vmatpush2.msra.mxu0 0.0
  %2813 = vmatprep.subr.mxu0 0.0
  %2814 = vmatpush2.msra.mxu0 0.0
  %2815 = vmatprep.subr.mxu0 0.0
  %2816 = vmatpush2.msra.mxu0 0.0
  %2817 = vmatprep.subr.mxu0 0.0
  %2818 = vmatpush2.msra.mxu0 0.0
  %2819 = vmatprep.subr.mxu0 0.0
  %2820 = vmatpush2.msra.mxu0 0.0
  %2821 = vmatprep.subr.mxu0 0.0
  %2822 = vmatpush2.msra.mxu0 0.0
  %2823 = vmatprep.subr.mxu0 0.0
  %2824 = vmatpush2.msra.mxu0 0.0
  %2825 = vmatprep.subr.mxu0 0.0
  %2826 = vmatpush2.msra.mxu0 0.0
  %2827 = vmatprep.subr.mxu0 0.0
  %2828 = vmatpush2.msra.mxu0 0.0
  %2829 = vmatprep.subr.mxu0 0.0
  %2830 = vmatpush2.msra.mxu0 0.0
  %2831 = vmatprep.subr.mxu0 0.0
  %2832 = vmatpush2.msra.mxu0 0.0
  %2833 = vmatprep.subr.mxu0 0.0
  %2834 = vmatpush2.msra.mxu0 0.0
  %2835 = vmatprep.subr.mxu0 0.0
  %2836 = vmatpush2.msra.mxu0 0.0
  %2837 = vmatprep.subr.mxu0 0.0
  %2838 = vmatpush2.msra.mxu0 0.0
  %2839 = vmatprep.subr.mxu0 0.0
  %2840 = vmatpush2.msra.mxu0 0.0
  %2841 = vmatprep.mubr.f32.mxu0 0.0
  %2842 = vmatmul.mubr.f32.gmra.mxu0 %v2771
  %v2843 = vpop.f32.mrf.mxu0
  %v2844 = vadd.f32 %v2768, %v2843
  %v2845 = vpop.f32.mrf.mxu0
  %2846 = vdwg.mxu0
  %v2847 = vmax.f32 %v2844, 0.0
  %v2848 = vld [vmem:[%s4 + $0x18] sm:$0xff]
  %v2849 = vld [vmem:[%s4 + $0x20] sm:$0xff]
  %v2850 = vld [vmem:[%s4 + $0x28] sm:$0xff]
  %v2851 = vld [vmem:[%s4 + $0x30] sm:$0xff]
  %v2852 = vld [vmem:[%s4 + $0x2] sm:$0x1]
  %v2853 = vlaneseq
  %v2854 = vshrl.u32 %v2853, 7
  %v2855 = vsub.s32 0, %v2854
  %v2856 = vrot.slane %v2852, %v2855
  %vm2857 = vcmask 261120
  %v2859 = vsel %vm2857, %v2847, 0
  %2861 = vmatprep.subr.mxu0 0.0
  %2862 = vmatpush1.msra.mxu0 0.0
  %2863 = vmatprep.subr.mxu0 0.0
  %2864 = vmatpush1.msra.mxu0 0.0
  %2865 = vmatprep.subr.mxu0 0.0
  %2866 = vmatpush1.msra.mxu0 0.0
  %2867 = vmatprep.subr.mxu0 0.0
  %2868 = vmatpush1.msra.mxu0 0.0
  %2869 = vmatprep.subr.mxu0 0.0
  %2870 = vmatpush1.msra.mxu0 0.0
  %2871 = vmatprep.subr.mxu0 0.0
  %2872 = vmatpush1.msra.mxu0 0.0
  %2873 = vmatprep.subr.mxu0 0.0
  %2874 = vmatpush1.msra.mxu0 0.0
  %2875 = vmatprep.subr.mxu0 0.0
  %2876 = vmatpush1.msra.mxu0 0.0
  %2877 = vmatprep.subr.mxu0 0.0
  %2878 = vmatpush1.msra.mxu0 0.0
  %2879 = vmatprep.subr.mxu0 0.0
  %2880 = vmatpush1.msra.mxu0 0.0
  %2881 = vmatprep.subr.mxu0 0.0
  %2882 = vmatpush1.msra.mxu0 0.0
  %2883 = vmatprep.subr.mxu0 0.0
  %2884 = vmatpush1.msra.mxu0 0.0
  %2885 = vmatprep.subr.mxu0 0.0
  %2886 = vmatpush1.msra.mxu0 %v2851
  %2887 = vmatprep.subr.mxu0 0.0
  %2888 = vmatpush1.msra.mxu0 %v2850
  %2889 = vmatprep.subr.mxu0 0.0
  %2890 = vmatpush1.msra.mxu0 %v2849
  %2891 = vmatprep.subr.mxu0 0.0
  %2892 = vmatpush1.msra.mxu0 %v2848
  %2893 = vmatprep.subr.mxu0 0.0
  %2894 = vmatpush2.msra.mxu0 0.0
  %2895 = vmatprep.subr.mxu0 0.0
  %2896 = vmatpush2.msra.mxu0 0.0
  %2897 = vmatprep.subr.mxu0 0.0
  %2898 = vmatpush2.msra.mxu0 0.0
  %2899 = vmatprep.subr.mxu0 0.0
  %2900 = vmatpush2.msra.mxu0 0.0
  %2901 = vmatprep.subr.mxu0 0.0
  %2902 = vmatpush2.msra.mxu0 0.0
  %2903 = vmatprep.subr.mxu0 0.0
  %2904 = vmatpush2.msra.mxu0 0.0
  %2905 = vmatprep.subr.mxu0 0.0
  %2906 = vmatpush2.msra.mxu0 0.0
  %2907 = vmatprep.subr.mxu0 0.0
  %2908 = vmatpush2.msra.mxu0 0.0
  %2909 = vmatprep.subr.mxu0 0.0
  %2910 = vmatpush2.msra.mxu0 0.0
  %2911 = vmatprep.subr.mxu0 0.0
  %2912 = vmatpush2.msra.mxu0 0.0
  %2913 = vmatprep.subr.mxu0 0.0
  %2914 = vmatpush2.msra.mxu0 0.0
  %2915 = vmatprep.subr.mxu0 0.0
  %2916 = vmatpush2.msra.mxu0 0.0
  %2917 = vmatprep.subr.mxu0 0.0
  %2918 = vmatpush2.msra.mxu0 0.0
  %2919 = vmatprep.subr.mxu0 0.0
  %2920 = vmatpush2.msra.mxu0 0.0
  %2921 = vmatprep.subr.mxu0 0.0
  %2922 = vmatpush2.msra.mxu0 0.0
  %2923 = vmatprep.subr.mxu0 0.0
  %2924 = vmatpush2.msra.mxu0 0.0
  %2925 = vmatprep.mubr.f32.mxu0 0.0
  %2926 = vmatmul.mubr.f32.gmra.mxu0 %v2859
  %v2927 = vpop.f32.mrf.mxu0
  %v2928 = vadd.f32 %v2856, %v2927
  %v2929 = vpop.f32.mrf.mxu0
  %2930 = vdwg.mxu0
  %v2931 = vmax.f32 %v2928, 0.0
  %v2932 = vld [vmem:[%s4 + $0x38] sm:$0xff]
  %v2933 = vld [vmem:[%s4 + $0x40] sm:$0xff]
  %v2934 = vld [vmem:[%s4 + $0x48] sm:$0xff]
  %v2935 = vld [vmem:[%s4 + $0x50] sm:$0xff]
  %v2936 = vld [vmem:[%s4 + $0x3] sm:$0x1]
  %v2937 = vlaneseq
  %v2938 = vshrl.u32 %v2937, 7
  %v2939 = vsub.s32 0, %v2938
  %v2940 = vrot.slane %v2936, %v2939
  %v2942 = vsel %vm2857, %v2931, 0
  %2944 = vmatprep.subr.mxu0 0.0
  %2945 = vmatpush1.msra.mxu0 0.0
  %2946 = vmatprep.subr.mxu0 0.0
  %2947 = vmatpush1.msra.mxu0 0.0
  %2948 = vmatprep.subr.mxu0 0.0
  %2949 = vmatpush1.msra.mxu0 0.0
  %2950 = vmatprep.subr.mxu0 0.0
  %2951 = vmatpush1.msra.mxu0 0.0
  %2952 = vmatprep.subr.mxu0 0.0
  %2953 = vmatpush1.msra.mxu0 0.0
  %2954 = vmatprep.subr.mxu0 0.0
  %2955 = vmatpush1.msra.mxu0 0.0
  %2956 = vmatprep.subr.mxu0 0.0
  %2957 = vmatpush1.msra.mxu0 0.0
  %2958 = vmatprep.subr.mxu0 0.0
  %2959 = vmatpush1.msra.mxu0 0.0
  %2960 = vmatprep.subr.mxu0 0.0
  %2961 = vmatpush1.msra.mxu0 0.0
  %2962 = vmatprep.subr.mxu0 0.0
  %2963 = vmatpush1.msra.mxu0 0.0
  %2964 = vmatprep.subr.mxu0 0.0
  %2965 = vmatpush1.msra.mxu0 0.0
  %2966 = vmatprep.subr.mxu0 0.0
  %2967 = vmatpush1.msra.mxu0 0.0
  %2968 = vmatprep.subr.mxu0 0.0
  %2969 = vmatpush1.msra.mxu0 %v2935
  %2970 = vmatprep.subr.mxu0 0.0
  %2971 = vmatpush1.msra.mxu0 %v2934
  %2972 = vmatprep.subr.mxu0 0.0
  %2973 = vmatpush1.msra.mxu0 %v2933
  %2974 = vmatprep.subr.mxu0 0.0
  %2975 = vmatpush1.msra.mxu0 %v2932
  %2976 = vmatprep.subr.mxu0 0.0
  %2977 = vmatpush2.msra.mxu0 0.0
  %2978 = vmatprep.subr.mxu0 0.0
  %2979 = vmatpush2.msra.mxu0 0.0
  %2980 = vmatprep.subr.mxu0 0.0
  %2981 = vmatpush2.msra.mxu0 0.0
  %2982 = vmatprep.subr.mxu0 0.0
  %2983 = vmatpush2.msra.mxu0 0.0
  %2984 = vmatprep.subr.mxu0 0.0
  %2985 = vmatpush2.msra.mxu0 0.0
  %2986 = vmatprep.subr.mxu0 0.0
  %2987 = vmatpush2.msra.mxu0 0.0
  %2988 = vmatprep.subr.mxu0 0.0
  %2989 = vmatpush2.msra.mxu0 0.0
  %2990 = vmatprep.subr.mxu0 0.0
  %2991 = vmatpush2.msra.mxu0 0.0
  %2992 = vmatprep.subr.mxu0 0.0
  %2993 = vmatpush2.msra.mxu0 0.0
  %2994 = vmatprep.subr.mxu0 0.0
  %2995 = vmatpush2.msra.mxu0 0.0
  %2996 = vmatprep.subr.mxu0 0.0
  %2997 = vmatpush2.msra.mxu0 0.0
  %2998 = vmatprep.subr.mxu0 0.0
  %2999 = vmatpush2.msra.mxu0 0.0
  %3000 = vmatprep.subr.mxu0 0.0
  %3001 = vmatpush2.msra.mxu0 0.0
  %3002 = vmatprep.subr.mxu0 0.0
  %3003 = vmatpush2.msra.mxu0 0.0
  %3004 = vmatprep.subr.mxu0 0.0
  %3005 = vmatpush2.msra.mxu0 0.0
  %3006 = vmatprep.subr.mxu0 0.0
  %3007 = vmatpush2.msra.mxu0 0.0
  %3008 = vmatprep.mubr.f32.mxu0 0.0
  %3009 = vmatmul.mubr.f32.gmra.mxu0 %v2942
  %v3010 = vpop.f32.mrf.mxu0
  %v3011 = vadd.f32 %v2940, %v3010
  %v3012 = vpop.f32.mrf.mxu0
  %3013 = vdwg.mxu0
  %vm3014 = vcmask 48128
  %3015 = vst.msk [vmem:[%s5] sm:$0xff] %vm3014, %v3011
  // Predicated region
  $region22: #{deep_q_network_forward.1} parent=0 // pred_check
    _
  $region23: #{deep_q_network_forward.1} parent=0 // pred_check_branch
    %3017 = sbr.rel (0) target = $region25
  $region24: #{deep_q_network_forward.1} parent=0 // pred_region
    _
  $region25: #{deep_q_network_forward.1} parent=0 // pred_fallthru
    _
  // Predicated region
  $region26: #{deep_q_network_forward.1} parent=0 // pred_check
    _
  $region27: #{deep_q_network_forward.1} parent=0 // pred_check_branch
    %3019 = sbr.rel (0) target = $region29
  $region28: #{deep_q_network_forward.1} parent=0 // pred_region
    _
  $region29: #{deep_q_network_forward.1} parent=0 // pred_fallthru
    _

</llo_original>
